<compile_context>
chip_gen: v7x
topology: tpu7x:2x2x1
jax: 0.10.0
libtpu: 0.0.40
codegen_flags: <defaults>
</compile_context>

<pallas_src>
import numpy as np
import jax
import jax.numpy as jnp
from jax import lax
from jax.experimental import pallas as pl
from jax.experimental.pallas import tpu as pltpu


# ------------------------------- kernel --------------------------------------


def _conv3x3_bn_relu(pad_ref, w_ref, b_ref, out_rows):
    """3x3 'same' conv over a W-padded tile + folded-BN bias + ReLU.

    pad_ref : (out_rows+2, Wp+2, Cin)  zero-padded activation tile (VMEM)
    w_ref   : (9, Cin, Cout)           weights, BN scale folded in
    b_ref   : (1, Cout)                folded BN bias (f32)
    returns : (out_rows, Wp, Cout)     f32
    """
    wp = pad_ref.shape[1] - 2
    cin = pad_ref.shape[2]
    cout = w_ref.shape[2]
    # 9 accumulating MXU matmuls; accumulate in an f32 value (vregs), no
    # materialized im2col scratch.
    acc = jnp.zeros((out_rows * wp, cout), jnp.float32)
    for dy in range(3):
        for dx in range(3):
            # Shifted window; the (rows, Wp) -> rows*Wp flatten is layout-free
            # when Wp % 8 == 0 and channels are lane-padded (the default).
            patch = pad_ref[dy:dy + out_rows, dx:dx + wp, :]
            acc = acc + jnp.dot(patch.reshape(out_rows * wp, cin),
                                w_ref[3 * dy + dx],
                                preferred_element_type=jnp.float32)
    acc = acc + b_ref[0].astype(jnp.float32)        # BN scale already in w
    return jnp.maximum(acc, 0.0).reshape(out_rows, wp, cout)


def _down_fused_kernel(x_hbm, w1_ref, b1_ref, w2_ref, b2_ref, o_ref,
                       raw_ref, pad1_ref, pad2_ref, dma_sem):
    """MaxPool2d(2) -> (3x3 conv + BN + ReLU) x 2 on one (batch, row-tile).

    x_hbm   : (N, H+8, W, C1) HBM/ANY  raw input, 4 zero rows top & bottom
    w1_ref  : (9, C1, C2)   w2_ref : (9, C2, C3)   (BN scale folded in)
    b1_ref  : (1, C2)       b2_ref : (1, C3)
    o_ref   : (1, TR, Wp, C3)          output row tile
    raw_ref : (2*TR+8, W, C1)   VMEM   haloed raw rows (manual DMA dst)
    pad1_ref: (TR+4, Wp+2, C1)  VMEM   W-padded pooled tile (+2 pooled halo)
    pad2_ref: (TR+2, Wp+2, C2)  VMEM   W-padded mid tile   (+1 mid halo)
    """
    tr = o_ref.shape[1]
    wp = o_ref.shape[2]
    full_w = raw_ref.shape[1]
    c1 = raw_ref.shape[2]
    c2 = pad2_ref.shape[2]
    rows_raw = raw_ref.shape[0]                    # 2*TR + 8

    n = pl.program_id(0)
    t = pl.program_id(1)
    last_t = pl.num_programs(1) - 1

    # Haloed raw rows for this tile: padded raw rows [2*TR*t, 2*TR*t + 2*TR+8).
    row0 = pl.multiple_of(t * (2 * tr), 2 * tr)
    cp = pltpu.make_async_copy(x_hbm.at[n, pl.ds(row0, rows_raw)], raw_ref,
                               dma_sem)
    cp.start()

    # Zero only the 1-px W-border columns (interiors are fully overwritten
    # below; H borders come for free from the haloed / pre-padded rows).
    pad1_ref[:, 0:1, :] = jnp.zeros((tr + 4, 1, c1), pad1_ref.dtype)
    pad1_ref[:, wp + 1:wp + 2, :] = jnp.zeros((tr + 4, 1, c1), pad1_ref.dtype)
    pad2_ref[:, 0:1, :] = jnp.zeros((tr + 2, 1, c2), pad2_ref.dtype)
    pad2_ref[:, wp + 1:wp + 2, :] = jnp.zeros((tr + 2, 1, c2), pad2_ref.dtype)

    cp.wait()

    # ---- 2x2 max pool, stride 2 (f32 VPU math; single cast on store) --------
    x = raw_ref[...]                               # (2*(TR+4), W, C1)
    xr = x.reshape(tr + 4, 2, full_w, c1)          # outer-dim split only
    rowmax = jnp.maximum(xr[:, 0], xr[:, 1])       # (TR+4, W, C1)
    cw = rowmax.reshape(tr + 4, wp, 2, c1)
    pooled = jnp.maximum(cw[:, :, 0, :], cw[:, :, 1, :])    # (TR+4, Wp, C1)
    pad1_ref[:, 1:wp + 1, :] = pooled.astype(pad1_ref.dtype)

    # ---- conv1 + BN1 + ReLU: mid rows [t*TR-1, t*TR+TR] ----------------------
    mid = _conv3x3_bn_relu(pad1_ref, w1_ref, b1_ref, tr + 2)  # (TR+2, Wp, C2)
    pad2_ref[:, 1:wp + 1, :] = mid.astype(pad2_ref.dtype)

    # conv2's "same" H zero-padding: the halo mid rows that fall outside the
    # image were computed from partial data and must be exactly zero.  This is
    # per-tile semantics (not an init optimization), so it is safe under
    # "parallel" grid scheduling on either TensorCore.
    @pl.when(t == 0)
    def _():
        pad2_ref[0:1, :, :] = jnp.zeros((1, wp + 2, c2), pad2_ref.dtype)

    @pl.when(t == last_t)
    def _():
        pad2_ref[tr + 1:tr + 2, :, :] = jnp.zeros((1, wp + 2, c2),
                                                  pad2_ref.dtype)

    # ---- conv2 + BN2 + ReLU: output rows [t*TR, t*TR+TR) ---------------------
    y = _conv3x3_bn_relu(pad2_ref, w2_ref, b2_ref, tr)        # (TR, Wp, C3)
    o_ref[0] = y.astype(o_ref.dtype)


# ------------------------------- wrapper --------------------------------------


def down_fused_nhwc(x_nhwc, params, *, row_tile=None):
    """Fused MaxPool2d(2) + DoubleConv on NHWC input; returns NHWC."""
    w1, b1, w2, b2 = params["w1"], params["b1"], params["w2"], params["b2"]
    batch, h, w, cin = x_nhwc.shape
    assert cin == params["in_channels"]
    assert h % 2 == 0 and w % 2 == 0, "MaxPool2d(2): H and W must be even"
    hp, wp = h // 2, w // 2
    c1p, c2p = w1.shape[1], w1.shape[2]
    c3p = w2.shape[2]
    cout = params["out_channels"]
    compute_dtype = w1.dtype

    if row_tile is None:
        # NOTE: at production sizes pick TR so (TR+2)*Wp is a multiple of 256
        # (v6e/v7x MXU granule) and the per-tile footprint fits v7x VMEM.
        row_tile = 8 if hp % 8 == 0 else hp
    tr = int(row_tile)
    assert hp % tr == 0, "TODO(synk): ragged last row-tile"
    n_tiles = hp // tr

    # One wrapper-side pad: 4 zero raw rows top/bottom (= 2 pooled halo rows;
    # doubles as the convs' H zero padding) + channel pad to the lane multiple.
    x_p = jnp.pad(x_nhwc, ((0, 0), (4, 4), (0, 0), (0, c1p - cin)))

    # Explicit VMEM ceiling: scratch + double-buffered resident blocks, with
    # 2x headroom (keeps well under v7x's 64 MiB at sane tile choices).
    isz_x = x_p.dtype.itemsize
    isz_c = jnp.dtype(compute_dtype).itemsize
    scratch_bytes = ((2 * tr + 8) * w * c1p * isz_x
                     + (tr + 4) * (wp + 2) * c1p * isz_c
                     + (tr + 2) * (wp + 2) * c2p * isz_c)
    block_bytes = ((9 * c1p * c2p + 9 * c2p * c3p) * isz_c
                   + (c2p + c3p) * 4 + tr * wp * c3p * isz_x)
    vmem_limit = int(min(112 * 2**20,
                         max(16 * 2**20, 2 * (scratch_bytes + 2 * block_bytes))))

    out_p = pl.pallas_call(
        _down_fused_kernel,
        out_shape=jax.ShapeDtypeStruct((batch, hp, wp, c3p), x_nhwc.dtype),
        grid=(batch, n_tiles),
        in_specs=[
            pl.BlockSpec(memory_space=pl.ANY),                    # raw input (manual halo DMA)
            pl.BlockSpec((9, c1p, c2p), lambda i, j: (0, 0, 0)),  # resident weights
            pl.BlockSpec((1, c2p), lambda i, j: (0, 0)),
            pl.BlockSpec((9, c2p, c3p), lambda i, j: (0, 0, 0)),
            pl.BlockSpec((1, c3p), lambda i, j: (0, 0)),
        ],
        out_specs=pl.BlockSpec((1, tr, wp, c3p), lambda i, j: (i, j, 0, 0)),
        scratch_shapes=[
            pltpu.VMEM((2 * tr + 8, w, c1p), x_p.dtype),          # haloed raw rows
            pltpu.VMEM((tr + 4, wp + 2, c1p), compute_dtype),     # padded pooled tile
            pltpu.VMEM((tr + 2, wp + 2, c2p), compute_dtype),     # padded mid tile
            pltpu.SemaphoreType.DMA,
        ],
        compiler_params=pltpu.CompilerParams(
            dimension_semantics=("parallel", "parallel"),
            vmem_limit_bytes=vmem_limit),
    )(x_p, w1, b1, w2, b2)

    return out_p[..., :cout]                       # drop lane-padding channels


def down_forward(x_nchw, params, *, row_tile=None):
    """Forward of Down: NCHW in, NCHW out (matches the PyTorch module)."""
    # TODO(synk): keep the surrounding model NHWC + lane-padded to drop these
    # two HBM relayouts (and the channel pad/slice) from the hot path.
    x = jnp.transpose(x_nchw, (0, 2, 3, 1))        # NCHW -> NHWC
    y = down_fused_nhwc(x, params, row_tile=row_tile)
    return jnp.transpose(y, (0, 3, 1, 2))          # NHWC -> NCHW


# --------------------------- parameter setup ----------------------------------


def _round_up(x, m):
    return (x + m - 1) // m * m


def init_down_params(key, in_channels, out_channels, mid_channels=None,
                     compute_dtype=jnp.float32, channel_multiple=128,
                     eps=1e-5):
    if mid_channels is None:
        mid_channels = out_channels                # DoubleConv default
    c1p = _round_up(in_channels, channel_multiple)
    c2p = _round_up(mid_channels, channel_multiple)
    c3p = _round_up(out_channels, channel_multiple)

    k1, k2 = jax.random.split(key)
    # PyTorch conv weights are OIHW, bias=False.
    w1_oihw = 0.1 * jax.random.normal(k1, (mid_channels, in_channels, 3, 3),
                                      jnp.float32)
    w2_oihw = 0.1 * jax.random.normal(k2, (out_channels, mid_channels, 3, 3),
                                      jnp.float32)

    def bn_fold(c):
        # BatchNorm2d inference with PyTorch init-time running stats.
        gamma, beta = jnp.ones(c), jnp.zeros(c)
        mean, var = jnp.zeros(c), jnp.ones(c)
        scale = gamma / jnp.sqrt(var + eps)
        bias = beta - mean * scale
        return scale, bias

    s1, bias1 = bn_fold(mid_channels)
    s2, bias2 = bn_fold(out_channels)

    def fold_pad_weight(w_oihw, scale, ip, op):
        o, i = w_oihw.shape[0], w_oihw.shape[1]
        # OIHW -> (3,3,I,O) -> (9,I,O); tap index t=3*dy+dx matches the kernel.
        wt = jnp.transpose(w_oihw, (2, 3, 1, 0)).reshape(9, i, o)
        wt = wt * scale[None, None, :]             # fold BN scale along O
        wt = jnp.pad(wt, ((0, 0), (0, ip - i), (0, op - o)))
        return wt.astype(compute_dtype)

    def pad_bias(b, cp):
        return jnp.pad(b, (0, cp - b.shape[0]))[None, :].astype(jnp.float32)

    return dict(
        # kernel parameters (BN scale folded in, channels lane-padded)
        w1=fold_pad_weight(w1_oihw, s1, c1p, c2p), b1=pad_bias(bias1, c2p),
        w2=fold_pad_weight(w2_oihw, s2, c2p, c3p), b2=pad_bias(bias2, c3p),
        in_channels=in_channels, mid_channels=mid_channels,
        out_channels=out_channels,
        # originals kept for the pure-JAX reference check
        w1_oihw=w1_oihw, w2_oihw=w2_oihw,
        s1=s1, bias1=bias1, s2=s2, bias2=bias2)


# ------------------------------ reference -------------------------------------


def down_reference(x_nchw, params):
    x = jnp.transpose(x_nchw, (0, 2, 3, 1))
    x = lax.reduce_window(x, -jnp.inf, lax.max,
                          (1, 2, 2, 1), (1, 2, 2, 1), "VALID")

    def cbr(x, w_oihw, s, b):
        w_hwio = jnp.transpose(w_oihw, (2, 3, 1, 0))
        y = lax.conv_general_dilated(
            x, w_hwio, (1, 1), "SAME",
            dimension_numbers=("NHWC", "HWIO", "NHWC"))
        return jnp.maximum(y * s + b, 0.0)

    x = cbr(x, params["w1_oihw"], params["s1"], params["bias1"])
    x = cbr(x, params["w2_oihw"], params["s2"], params["bias2"])
    return jnp.transpose(x, (0, 3, 1, 2))


# --------------------------------- main ---------------------------------------


if __name__ == "__main__":
    key = jax.random.PRNGKey(0)
    kx, kp = jax.random.split(key)

    N, C_in, H, W = 2, 4, 16, 16
    C_out = 8

    x = jax.random.normal(kx, (N, C_in, H, W), jnp.float32)

    # f32 MXU-operand path: exact check against the XLA reference.
    params = init_down_params(kp, C_in, C_out, compute_dtype=jnp.float32)
    out = jax.block_until_ready(down_forward(x, params, row_tile=4))
    ref = jax.block_until_ready(down_reference(x, params))
    assert out.shape == (N, C_out, H // 2, W // 2), out.shape
    np.testing.assert_allclose(np.asarray(out), np.asarray(ref),
                               rtol=1e-4, atol=1e-4)

    # bf16 MXU-operand path (f32 accumulation): looser tolerance.
    params_bf16 = init_down_params(kp, C_in, C_out,
                                   compute_dtype=jnp.bfloat16)
    out_bf16 = jax.block_until_ready(down_forward(x, params_bf16, row_tile=4))
    np.testing.assert_allclose(np.asarray(out_bf16), np.asarray(ref),
                               rtol=2e-2, atol=2e-2)

    print("KERNEL_OK")
</pallas_src>

<mosaic_0001>
module attributes {stable_mosaic.version = 11 : i64} {
  func.func @_down_fused_kernel(%arg0: i32, %arg1: i32, %arg2: memref<2x24x16x128xf32, #tpu.memory_space<any>>, %arg3: memref<9x128x128xf32, #tpu.memory_space<vmem>>, %arg4: memref<1x128xf32, #tpu.memory_space<vmem>>, %arg5: memref<9x128x128xf32, #tpu.memory_space<vmem>>, %arg6: memref<1x128xf32, #tpu.memory_space<vmem>>, %arg7: memref<1x4x8x128xf32, #tpu.memory_space<vmem>>, %arg8: memref<16x16x128xf32, #tpu.memory_space<vmem>>, %arg9: memref<8x10x128xf32, #tpu.memory_space<vmem>>, %arg10: memref<6x10x128xf32, #tpu.memory_space<vmem>>, %arg11: memref<!tpu.dma_semaphore, #tpu.memory_space<semaphore_mem>>) attributes {dimension_semantics = [#tpu.dimension_semantics<parallel>, #tpu.dimension_semantics<parallel>], iteration_bounds = array<i64: 2, 2>, scalar_prefetch = 0 : i64, scratch_operands = 4 : i64, tpu.core_type = #tpu.core_type<tc>, window_params = [{}, {pipeline_mode = #tpu.pipeline_mode<synchronous>, transform_indices = @transform_1, window_bounds = array<i64: 9, 128, 128>}, {pipeline_mode = #tpu.pipeline_mode<synchronous>, transform_indices = @transform_2, window_bounds = array<i64: 1, 128>}, {pipeline_mode = #tpu.pipeline_mode<synchronous>, transform_indices = @transform_3, window_bounds = array<i64: 9, 128, 128>}, {pipeline_mode = #tpu.pipeline_mode<synchronous>, transform_indices = @transform_4, window_bounds = array<i64: 1, 128>}, {transform_indices = @transform_5, window_bounds = array<i64: 1, 4, 8, 128>}]} {
    %c8_i32 = arith.constant 8 : i32
    %0 = arith.muli %arg1, %c8_i32 : i32
    %1 = tpu.assume_multiple %0, 8 : i32
    %c0_i32 = arith.constant 0 : i32
    %c0_i32_0 = arith.constant 0 : i32
    %2 = tpu.memref_slice %arg2[%arg0, %1, %c0_i32, %c0_i32_0] : memref<2x24x16x128xf32, #tpu.memory_space<any>> -> memref<1x16x16x128xf32, #tpu.memory_space<any>>
    %3 = tpu.memref_squeeze %2 : memref<1x16x16x128xf32, #tpu.memory_space<any>> -> memref<16x16x128xf32, #tpu.memory_space<any>>
    tpu.enqueue_dma source(%3 : memref<16x16x128xf32, #tpu.memory_space<any>>) target(%arg8 : memref<16x16x128xf32, #tpu.memory_space<vmem>>) target_semaphore(%arg11 : memref<!tpu.dma_semaphore, #tpu.memory_space<semaphore_mem>>)
    %cst = arith.constant 0.000000e+00 : f32
    %4 = vector.broadcast %cst : f32 to vector<8x1x128xf32>
    %c0 = arith.constant 0 : index
    %c0_1 = arith.constant 0 : index
    %c0_2 = arith.constant 0 : index
    %5 = vector.load %arg9[%c0, %c0_1, %c0_2] : memref<8x10x128xf32, #tpu.memory_space<vmem>>, vector<8x1x128xf32>
    tpu.vector_store %arg9[%c0, %c0_1, %c0_2], %4 {strides = array<i32>} : memref<8x10x128xf32, #tpu.memory_space<vmem>>, vector<8x1x128xf32>,
    %cst_3 = arith.constant 0.000000e+00 : f32
    %6 = vector.broadcast %cst_3 : f32 to vector<8x1x128xf32>
    %c0_4 = arith.constant 0 : index
    %c9 = arith.constant 9 : index
    %c0_5 = arith.constant 0 : index
    %7 = vector.load %arg9[%c0_4, %c9, %c0_5] : memref<8x10x128xf32, #tpu.memory_space<vmem>>, vector<8x1x128xf32>
    tpu.vector_store %arg9[%c0_4, %c9, %c0_5], %6 {strides = array<i32>} : memref<8x10x128xf32, #tpu.memory_space<vmem>>, vector<8x1x128xf32>,
    %cst_6 = arith.constant 0.000000e+00 : f32
    %8 = vector.broadcast %cst_6 : f32 to vector<6x1x128xf32>
    %c0_7 = arith.constant 0 : index
    %c0_8 = arith.constant 0 : index
    %c0_9 = arith.constant 0 : index
    %9 = vector.load %arg10[%c0_7, %c0_8, %c0_9] : memref<6x10x128xf32, #tpu.memory_space<vmem>>, vector<6x1x128xf32>
    tpu.vector_store %arg10[%c0_7, %c0_8, %c0_9], %8 {strides = array<i32>} : memref<6x10x128xf32, #tpu.memory_space<vmem>>, vector<6x1x128xf32>,
    %cst_10 = arith.constant 0.000000e+00 : f32
    %10 = vector.broadcast %cst_10 : f32 to vector<6x1x128xf32>
    %c0_11 = arith.constant 0 : index
    %c9_12 = arith.constant 9 : index
    %c0_13 = arith.constant 0 : index
    %11 = vector.load %arg10[%c0_11, %c9_12, %c0_13] : memref<6x10x128xf32, #tpu.memory_space<vmem>>, vector<6x1x128xf32>
    tpu.vector_store %arg10[%c0_11, %c9_12, %c0_13], %10 {strides = array<i32>} : memref<6x10x128xf32, #tpu.memory_space<vmem>>, vector<6x1x128xf32>,
    %c0_i32_14 = arith.constant 0 : i32
    %c0_i32_15 = arith.constant 0 : i32
    %12 = tpu.memref_slice %arg2[%arg0, %1, %c0_i32_14, %c0_i32_15] : memref<2x24x16x128xf32, #tpu.memory_space<any>> -> memref<1x16x16x128xf32, #tpu.memory_space<any>>
    %13 = tpu.memref_squeeze %12 : memref<1x16x16x128xf32, #tpu.memory_space<any>> -> memref<16x16x128xf32, #tpu.memory_space<any>>
    tpu.wait_dma2 semaphore(%arg11 : memref<!tpu.dma_semaphore, #tpu.memory_space<semaphore_mem>>) src(%13 : memref<16x16x128xf32, #tpu.memory_space<any>>) dst(%arg8 : memref<16x16x128xf32, #tpu.memory_space<vmem>>)
    %c0_16 = arith.constant 0 : index
    %c0_17 = arith.constant 0 : index
    %c0_18 = arith.constant 0 : index
    %14 = vector.load %arg8[%c0_16, %c0_17, %c0_18] : memref<16x16x128xf32, #tpu.memory_space<vmem>>, vector<16x16x128xf32>
    %15 = vector.shape_cast %14 : vector<16x16x128xf32> to vector<8x2x16x128xf32>
    %16 = vector.extract_strided_slice %15 {offsets = [0, 0, 0, 0], sizes = [8, 1, 16, 128], strides = [1, 1, 1, 1]} : vector<8x2x16x128xf32> to vector<8x1x16x128xf32>
    %17 = vector.shape_cast %16 : vector<8x1x16x128xf32> to vector<8x16x128xf32>
    %18 = vector.extract_strided_slice %15 {offsets = [0, 1, 0, 0], sizes = [8, 1, 16, 128], strides = [1, 1, 1, 1]} : vector<8x2x16x128xf32> to vector<8x1x16x128xf32>
    %19 = vector.shape_cast %18 : vector<8x1x16x128xf32> to vector<8x16x128xf32>
    %20 = arith.maximumf %17, %19 : vector<8x16x128xf32>
    %21 = vector.shape_cast %20 : vector<8x16x128xf32> to vector<8x8x2x128xf32>
    %22 = vector.extract_strided_slice %21 {offsets = [0, 0, 0, 0], sizes = [8, 8, 1, 128], strides = [1, 1, 1, 1]} : vector<8x8x2x128xf32> to vector<8x8x1x128xf32>
    %23 = vector.shape_cast %22 : vector<8x8x1x128xf32> to vector<8x8x128xf32>
    %24 = vector.extract_strided_slice %21 {offsets = [0, 0, 1, 0], sizes = [8, 8, 1, 128], strides = [1, 1, 1, 1]} : vector<8x8x2x128xf32> to vector<8x8x1x128xf32>
    %25 = vector.shape_cast %24 : vector<8x8x1x128xf32> to vector<8x8x128xf32>
    %26 = arith.maximumf %23, %25 : vector<8x8x128xf32>
    %c0_19 = arith.constant 0 : index
    %c1 = arith.constant 1 : index
    %c0_20 = arith.constant 0 : index
    %27 = vector.load %arg9[%c0_19, %c1, %c0_20] : memref<8x10x128xf32, #tpu.memory_space<vmem>>, vector<8x8x128xf32>
    tpu.vector_store %arg9[%c0_19, %c1, %c0_20], %26 {strides = array<i32>} : memref<8x10x128xf32, #tpu.memory_space<vmem>>, vector<8x8x128xf32>,
    %cst_21 = arith.constant 0.000000e+00 : f32
    %28 = vector.broadcast %cst_21 : f32 to vector<48x128xf32>
    %c0_22 = arith.constant 0 : index
    %c0_23 = arith.constant 0 : index
    %c0_24 = arith.constant 0 : index
    %29 = vector.load %arg9[%c0_22, %c0_23, %c0_24] : memref<8x10x128xf32, #tpu.memory_space<vmem>>, vector<6x8x128xf32>
    %30 = vector.shape_cast %29 : vector<6x8x128xf32> to vector<48x128xf32>
    %c0_25 = arith.constant 0 : index
    %c0_26 = arith.constant 0 : index
    %c0_27 = arith.constant 0 : index
    %31 = vector.load %arg3[%c0_25, %c0_26, %c0_27] : memref<9x128x128xf32, #tpu.memory_space<vmem>>, vector<1x128x128xf32>
    %32 = vector.shape_cast %31 : vector<1x128x128xf32> to vector<128x128xf32>
    %cst_28 = arith.constant dense<0.000000e+00> : vector<48x128xf32>
    %33 = tpu.matmul %30, %32, %cst_28 {dimension_numbers = #tpu.dot_dimension_numbers<[1], [0], [0], [1], [0, 0, 1, 1], [], []>} : vector<48x128xf32>, vector<128x128xf32>, vector<48x128xf32> -> vector<48x128xf32>
    %34 = arith.addf %28, %33 : vector<48x128xf32>
    %c0_29 = arith.constant 0 : index
    %c1_30 = arith.constant 1 : index
    %c0_31 = arith.constant 0 : index
    %35 = vector.load %arg9[%c0_29, %c1_30, %c0_31] : memref<8x10x128xf32, #tpu.memory_space<vmem>>, vector<6x8x128xf32>
    %36 = vector.shape_cast %35 : vector<6x8x128xf32> to vector<48x128xf32>
    %c1_32 = arith.constant 1 : index
    %c0_33 = arith.constant 0 : index
    %c0_34 = arith.constant 0 : index
    %37 = vector.load %arg3[%c1_32, %c0_33, %c0_34] : memref<9x128x128xf32, #tpu.memory_space<vmem>>, vector<1x128x128xf32>
    %38 = vector.shape_cast %37 : vector<1x128x128xf32> to vector<128x128xf32>
    %cst_35 = arith.constant dense<0.000000e+00> : vector<48x128xf32>
    %39 = tpu.matmul %36, %38, %cst_35 {dimension_numbers = #tpu.dot_dimension_numbers<[1], [0], [0], [1], [0, 0, 1, 1], [], []>} : vector<48x128xf32>, vector<128x128xf32>, vector<48x128xf32> -> vector<48x128xf32>
    %40 = arith.addf %34, %39 : vector<48x128xf32>
    %c0_36 = arith.constant 0 : index
    %c2 = arith.constant 2 : index
    %c0_37 = arith.constant 0 : index
    %41 = vector.load %arg9[%c0_36, %c2, %c0_37] : memref<8x10x128xf32, #tpu.memory_space<vmem>>, vector<6x8x128xf32>
    %42 = vector.shape_cast %41 : vector<6x8x128xf32> to vector<48x128xf32>
    %c2_38 = arith.constant 2 : index
    %c0_39 = arith.constant 0 : index
    %c0_40 = arith.constant 0 : index
    %43 = vector.load %arg3[%c2_38, %c0_39, %c0_40] : memref<9x128x128xf32, #tpu.memory_space<vmem>>, vector<1x128x128xf32>
    %44 = vector.shape_cast %43 : vector<1x128x128xf32> to vector<128x128xf32>
    %cst_41 = arith.constant dense<0.000000e+00> : vector<48x128xf32>
    %45 = tpu.matmul %42, %44, %cst_41 {dimension_numbers = #tpu.dot_dimension_numbers<[1], [0], [0], [1], [0, 0, 1, 1], [], []>} : vector<48x128xf32>, vector<128x128xf32>, vector<48x128xf32> -> vector<48x128xf32>
    %46 = arith.addf %40, %45 : vector<48x128xf32>
    %c1_42 = arith.constant 1 : index
    %c0_43 = arith.constant 0 : index
    %c0_44 = arith.constant 0 : index
    %47 = vector.load %arg9[%c1_42, %c0_43, %c0_44] : memref<8x10x128xf32, #tpu.memory_space<vmem>>, vector<6x8x128xf32>
    %48 = vector.shape_cast %47 : vector<6x8x128xf32> to vector<48x128xf32>
    %c3 = arith.constant 3 : index
    %c0_45 = arith.constant 0 : index
    %c0_46 = arith.constant 0 : index
    %49 = vector.load %arg3[%c3, %c0_45, %c0_46] : memref<9x128x128xf32, #tpu.memory_space<vmem>>, vector<1x128x128xf32>
    %50 = vector.shape_cast %49 : vector<1x128x128xf32> to vector<128x128xf32>
    %cst_47 = arith.constant dense<0.000000e+00> : vector<48x128xf32>
    %51 = tpu.matmul %48, %50, %cst_47 {dimension_numbers = #tpu.dot_dimension_numbers<[1], [0], [0], [1], [0, 0, 1, 1], [], []>} : vector<48x128xf32>, vector<128x128xf32>, vector<48x128xf32> -> vector<48x128xf32>
    %52 = arith.addf %46, %51 : vector<48x128xf32>
    %c1_48 = arith.constant 1 : index
    %c1_49 = arith.constant 1 : index
    %c0_50 = arith.constant 0 : index
    %53 = vector.load %arg9[%c1_48, %c1_49, %c0_50] : memref<8x10x128xf32, #tpu.memory_space<vmem>>, vector<6x8x128xf32>
    %54 = vector.shape_cast %53 : vector<6x8x128xf32> to vector<48x128xf32>
    %c4 = arith.constant 4 : index
    %c0_51 = arith.constant 0 : index
    %c0_52 = arith.constant 0 : index
    %55 = vector.load %arg3[%c4, %c0_51, %c0_52] : memref<9x128x128xf32, #tpu.memory_space<vmem>>, vector<1x128x128xf32>
    %56 = vector.shape_cast %55 : vector<1x128x128xf32> to vector<128x128xf32>
    %cst_53 = arith.constant dense<0.000000e+00> : vector<48x128xf32>
    %57 = tpu.matmul %54, %56, %cst_53 {dimension_numbers = #tpu.dot_dimension_numbers<[1], [0], [0], [1], [0, 0, 1, 1], [], []>} : vector<48x128xf32>, vector<128x128xf32>, vector<48x128xf32> -> vector<48x128xf32>
    %58 = arith.addf %52, %57 : vector<48x128xf32>
    %c1_54 = arith.constant 1 : index
    %c2_55 = arith.constant 2 : index
    %c0_56 = arith.constant 0 : index
    %59 = vector.load %arg9[%c1_54, %c2_55, %c0_56] : memref<8x10x128xf32, #tpu.memory_space<vmem>>, vector<6x8x128xf32>
    %60 = vector.shape_cast %59 : vector<6x8x128xf32> to vector<48x128xf32>
    %c5 = arith.constant 5 : index
    %c0_57 = arith.constant 0 : index
    %c0_58 = arith.constant 0 : index
    %61 = vector.load %arg3[%c5, %c0_57, %c0_58] : memref<9x128x128xf32, #tpu.memory_space<vmem>>, vector<1x128x128xf32>
    %62 = vector.shape_cast %61 : vector<1x128x128xf32> to vector<128x128xf32>
    %cst_59 = arith.constant dense<0.000000e+00> : vector<48x128xf32>
    %63 = tpu.matmul %60, %62, %cst_59 {dimension_numbers = #tpu.dot_dimension_numbers<[1], [0], [0], [1], [0, 0, 1, 1], [], []>} : vector<48x128xf32>, vector<128x128xf32>, vector<48x128xf32> -> vector<48x128xf32>
    %64 = arith.addf %58, %63 : vector<48x128xf32>
    %c2_60 = arith.constant 2 : index
    %c0_61 = arith.constant 0 : index
    %c0_62 = arith.constant 0 : index
    %65 = vector.load %arg9[%c2_60, %c0_61, %c0_62] : memref<8x10x128xf32, #tpu.memory_space<vmem>>, vector<6x8x128xf32>
    %66 = vector.shape_cast %65 : vector<6x8x128xf32> to vector<48x128xf32>
    %c6 = arith.constant 6 : index
    %c0_63 = arith.constant 0 : index
    %c0_64 = arith.constant 0 : index
    %67 = vector.load %arg3[%c6, %c0_63, %c0_64] : memref<9x128x128xf32, #tpu.memory_space<vmem>>, vector<1x128x128xf32>
    %68 = vector.shape_cast %67 : vector<1x128x128xf32> to vector<128x128xf32>
    %cst_65 = arith.constant dense<0.000000e+00> : vector<48x128xf32>
    %69 = tpu.matmul %66, %68, %cst_65 {dimension_numbers = #tpu.dot_dimension_numbers<[1], [0], [0], [1], [0, 0, 1, 1], [], []>} : vector<48x128xf32>, vector<128x128xf32>, vector<48x128xf32> -> vector<48x128xf32>
    %70 = arith.addf %64, %69 : vector<48x128xf32>
    %c2_66 = arith.constant 2 : index
    %c1_67 = arith.constant 1 : index
    %c0_68 = arith.constant 0 : index
    %71 = vector.load %arg9[%c2_66, %c1_67, %c0_68] : memref<8x10x128xf32, #tpu.memory_space<vmem>>, vector<6x8x128xf32>
    %72 = vector.shape_cast %71 : vector<6x8x128xf32> to vector<48x128xf32>
    %c7 = arith.constant 7 : index
    %c0_69 = arith.constant 0 : index
    %c0_70 = arith.constant 0 : index
    %73 = vector.load %arg3[%c7, %c0_69, %c0_70] : memref<9x128x128xf32, #tpu.memory_space<vmem>>, vector<1x128x128xf32>
    %74 = vector.shape_cast %73 : vector<1x128x128xf32> to vector<128x128xf32>
    %cst_71 = arith.constant dense<0.000000e+00> : vector<48x128xf32>
    %75 = tpu.matmul %72, %74, %cst_71 {dimension_numbers = #tpu.dot_dimension_numbers<[1], [0], [0], [1], [0, 0, 1, 1], [], []>} : vector<48x128xf32>, vector<128x128xf32>, vector<48x128xf32> -> vector<48x128xf32>
    %76 = arith.addf %70, %75 : vector<48x128xf32>
    %c2_72 = arith.constant 2 : index
    %c2_73 = arith.constant 2 : index
    %c0_74 = arith.constant 0 : index
    %77 = vector.load %arg9[%c2_72, %c2_73, %c0_74] : memref<8x10x128xf32, #tpu.memory_space<vmem>>, vector<6x8x128xf32>
    %78 = vector.shape_cast %77 : vector<6x8x128xf32> to vector<48x128xf32>
    %c8 = arith.constant 8 : index
    %c0_75 = arith.constant 0 : index
    %c0_76 = arith.constant 0 : index
    %79 = vector.load %arg3[%c8, %c0_75, %c0_76] : memref<9x128x128xf32, #tpu.memory_space<vmem>>, vector<1x128x128xf32>
    %80 = vector.shape_cast %79 : vector<1x128x128xf32> to vector<128x128xf32>
    %cst_77 = arith.constant dense<0.000000e+00> : vector<48x128xf32>
    %81 = tpu.matmul %78, %80, %cst_77 {dimension_numbers = #tpu.dot_dimension_numbers<[1], [0], [0], [1], [0, 0, 1, 1], [], []>} : vector<48x128xf32>, vector<128x128xf32>, vector<48x128xf32> -> vector<48x128xf32>
    %82 = arith.addf %76, %81 : vector<48x128xf32>
    %c0_78 = arith.constant 0 : index
    %c0_79 = arith.constant 0 : index
    %83 = vector.load %arg4[%c0_78, %c0_79] : memref<1x128xf32, #tpu.memory_space<vmem>>, vector<1x128xf32>
    %84 = vector.shape_cast %83 : vector<1x128xf32> to vector<128xf32>
    %85 = vector.shape_cast %84 : vector<128xf32> to vector<1x128xf32>
    %86 = vector.broadcast %85 : vector<1x128xf32> to vector<48x128xf32>
    %87 = arith.addf %82, %86 : vector<48x128xf32>
    %cst_80 = arith.constant 0.000000e+00 : f32
    %88 = vector.broadcast %cst_80 : f32 to vector<48x128xf32>
    %89 = arith.maximumf %87, %88 : vector<48x128xf32>
    %90 = vector.shape_cast %89 : vector<48x128xf32> to vector<6x8x128xf32>
    %c0_81 = arith.constant 0 : index
    %c1_82 = arith.constant 1 : index
    %c0_83 = arith.constant 0 : index
    %91 = vector.load %arg10[%c0_81, %c1_82, %c0_83] : memref<6x10x128xf32, #tpu.memory_space<vmem>>, vector<6x8x128xf32>
    tpu.vector_store %arg10[%c0_81, %c1_82, %c0_83], %90 {strides = array<i32>} : memref<6x10x128xf32, #tpu.memory_space<vmem>>, vector<6x8x128xf32>,
    %c0_i32_84 = arith.constant 0 : i32
    %92 = arith.cmpi eq, %arg1, %c0_i32_84 : i32
    %93 = arith.extui %92 : i1 to i32
    %c0_i32_85 = arith.constant 0 : i32
    %94 = arith.cmpi ne, %93, %c0_i32_85 : i32
    scf.if %94 {
      %cst_158 = arith.constant 0.000000e+00 : f32
      %164 = vector.broadcast %cst_158 : f32 to vector<1x10x128xf32>
      %c0_159 = arith.constant 0 : index
      %c0_160 = arith.constant 0 : index
      %c0_161 = arith.constant 0 : index
      %165 = vector.load %arg10[%c0_159, %c0_160, %c0_161] : memref<6x10x128xf32, #tpu.memory_space<vmem>>, vector<1x10x128xf32>
      tpu.vector_store %arg10[%c0_159, %c0_160, %c0_161], %164 {strides = array<i32>} : memref<6x10x128xf32, #tpu.memory_space<vmem>>, vector<1x10x128xf32>,
    } else {
    }
    %c1_i32 = arith.constant 1 : i32
    %95 = arith.cmpi eq, %arg1, %c1_i32 : i32
    %96 = arith.extui %95 : i1 to i32
    %c0_i32_86 = arith.constant 0 : i32
    %97 = arith.cmpi ne, %96, %c0_i32_86 : i32
    scf.if %97 {
      %cst_158 = arith.constant 0.000000e+00 : f32
      %164 = vector.broadcast %cst_158 : f32 to vector<1x10x128xf32>
      %c5_159 = arith.constant 5 : index
      %c0_160 = arith.constant 0 : index
      %c0_161 = arith.constant 0 : index
      %165 = vector.load %arg10[%c5_159, %c0_160, %c0_161] : memref<6x10x128xf32, #tpu.memory_space<vmem>>, vector<1x10x128xf32>
      tpu.vector_store %arg10[%c5_159, %c0_160, %c0_161], %164 {strides = array<i32>} : memref<6x10x128xf32, #tpu.memory_space<vmem>>, vector<1x10x128xf32>,
    } else {
    }
    %cst_87 = arith.constant 0.000000e+00 : f32
    %98 = vector.broadcast %cst_87 : f32 to vector<32x128xf32>
    %c0_88 = arith.constant 0 : index
    %c0_89 = arith.constant 0 : index
    %c0_90 = arith.constant 0 : index
    %99 = vector.load %arg10[%c0_88, %c0_89, %c0_90] : memref<6x10x128xf32, #tpu.memory_space<vmem>>, vector<4x8x128xf32>
    %100 = vector.shape_cast %99 : vector<4x8x128xf32> to vector<32x128xf32>
    %c0_91 = arith.constant 0 : index
    %c0_92 = arith.constant 0 : index
    %c0_93 = arith.constant 0 : index
    %101 = vector.load %arg5[%c0_91, %c0_92, %c0_93] : memref<9x128x128xf32, #tpu.memory_space<vmem>>, vector<1x128x128xf32>
    %102 = vector.shape_cast %101 : vector<1x128x128xf32> to vector<128x128xf32>
    %cst_94 = arith.constant dense<0.000000e+00> : vector<32x128xf32>
    %103 = tpu.matmul %100, %102, %cst_94 {dimension_numbers = #tpu.dot_dimension_numbers<[1], [0], [0], [1], [0, 0, 1, 1], [], []>} : vector<32x128xf32>, vector<128x128xf32>, vector<32x128xf32> -> vector<32x128xf32>
    %104 = arith.addf %98, %103 : vector<32x128xf32>
    %c0_95 = arith.constant 0 : index
    %c1_96 = arith.constant 1 : index
    %c0_97 = arith.constant 0 : index
    %105 = vector.load %arg10[%c0_95, %c1_96, %c0_97] : memref<6x10x128xf32, #tpu.memory_space<vmem>>, vector<4x8x128xf32>
    %106 = vector.shape_cast %105 : vector<4x8x128xf32> to vector<32x128xf32>
    %c1_98 = arith.constant 1 : index
    %c0_99 = arith.constant 0 : index
    %c0_100 = arith.constant 0 : index
    %107 = vector.load %arg5[%c1_98, %c0_99, %c0_100] : memref<9x128x128xf32, #tpu.memory_space<vmem>>, vector<1x128x128xf32>
    %108 = vector.shape_cast %107 : vector<1x128x128xf32> to vector<128x128xf32>
    %cst_101 = arith.constant dense<0.000000e+00> : vector<32x128xf32>
    %109 = tpu.matmul %106, %108, %cst_101 {dimension_numbers = #tpu.dot_dimension_numbers<[1], [0], [0], [1], [0, 0, 1, 1], [], []>} : vector<32x128xf32>, vector<128x128xf32>, vector<32x128xf32> -> vector<32x128xf32>
    %110 = arith.addf %104, %109 : vector<32x128xf32>
    %c0_102 = arith.constant 0 : index
    %c2_103 = arith.constant 2 : index
    %c0_104 = arith.constant 0 : index
    %111 = vector.load %arg10[%c0_102, %c2_103, %c0_104] : memref<6x10x128xf32, #tpu.memory_space<vmem>>, vector<4x8x128xf32>
    %112 = vector.shape_cast %111 : vector<4x8x128xf32> to vector<32x128xf32>
    %c2_105 = arith.constant 2 : index
    %c0_106 = arith.constant 0 : index
    %c0_107 = arith.constant 0 : index
    %113 = vector.load %arg5[%c2_105, %c0_106, %c0_107] : memref<9x128x128xf32, #tpu.memory_space<vmem>>, vector<1x128x128xf32>
    %114 = vector.shape_cast %113 : vector<1x128x128xf32> to vector<128x128xf32>
    %cst_108 = arith.constant dense<0.000000e+00> : vector<32x128xf32>
    %115 = tpu.matmul %112, %114, %cst_108 {dimension_numbers = #tpu.dot_dimension_numbers<[1], [0], [0], [1], [0, 0, 1, 1], [], []>} : vector<32x128xf32>, vector<128x128xf32>, vector<32x128xf32> -> vector<32x128xf32>
    %116 = arith.addf %110, %115 : vector<32x128xf32>
    %c1_109 = arith.constant 1 : index
    %c0_110 = arith.constant 0 : index
    %c0_111 = arith.constant 0 : index
    %117 = vector.load %arg10[%c1_109, %c0_110, %c0_111] : memref<6x10x128xf32, #tpu.memory_space<vmem>>, vector<4x8x128xf32>
    %118 = vector.shape_cast %117 : vector<4x8x128xf32> to vector<32x128xf32>
    %c3_112 = arith.constant 3 : index
    %c0_113 = arith.constant 0 : index
    %c0_114 = arith.constant 0 : index
    %119 = vector.load %arg5[%c3_112, %c0_113, %c0_114] : memref<9x128x128xf32, #tpu.memory_space<vmem>>, vector<1x128x128xf32>
    %120 = vector.shape_cast %119 : vector<1x128x128xf32> to vector<128x128xf32>
    %cst_115 = arith.constant dense<0.000000e+00> : vector<32x128xf32>
    %121 = tpu.matmul %118, %120, %cst_115 {dimension_numbers = #tpu.dot_dimension_numbers<[1], [0], [0], [1], [0, 0, 1, 1], [], []>} : vector<32x128xf32>, vector<128x128xf32>, vector<32x128xf32> -> vector<32x128xf32>
    %122 = arith.addf %116, %121 : vector<32x128xf32>
    %c1_116 = arith.constant 1 : index
    %c1_117 = arith.constant 1 : index
    %c0_118 = arith.constant 0 : index
    %123 = vector.load %arg10[%c1_116, %c1_117, %c0_118] : memref<6x10x128xf32, #tpu.memory_space<vmem>>, vector<4x8x128xf32>
    %124 = vector.shape_cast %123 : vector<4x8x128xf32> to vector<32x128xf32>
    %c4_119 = arith.constant 4 : index
    %c0_120 = arith.constant 0 : index
    %c0_121 = arith.constant 0 : index
    %125 = vector.load %arg5[%c4_119, %c0_120, %c0_121] : memref<9x128x128xf32, #tpu.memory_space<vmem>>, vector<1x128x128xf32>
    %126 = vector.shape_cast %125 : vector<1x128x128xf32> to vector<128x128xf32>
    %cst_122 = arith.constant dense<0.000000e+00> : vector<32x128xf32>
    %127 = tpu.matmul %124, %126, %cst_122 {dimension_numbers = #tpu.dot_dimension_numbers<[1], [0], [0], [1], [0, 0, 1, 1], [], []>} : vector<32x128xf32>, vector<128x128xf32>, vector<32x128xf32> -> vector<32x128xf32>
    %128 = arith.addf %122, %127 : vector<32x128xf32>
    %c1_123 = arith.constant 1 : index
    %c2_124 = arith.constant 2 : index
    %c0_125 = arith.constant 0 : index
    %129 = vector.load %arg10[%c1_123, %c2_124, %c0_125] : memref<6x10x128xf32, #tpu.memory_space<vmem>>, vector<4x8x128xf32>
    %130 = vector.shape_cast %129 : vector<4x8x128xf32> to vector<32x128xf32>
    %c5_126 = arith.constant 5 : index
    %c0_127 = arith.constant 0 : index
    %c0_128 = arith.constant 0 : index
    %131 = vector.load %arg5[%c5_126, %c0_127, %c0_128] : memref<9x128x128xf32, #tpu.memory_space<vmem>>, vector<1x128x128xf32>
    %132 = vector.shape_cast %131 : vector<1x128x128xf32> to vector<128x128xf32>
    %cst_129 = arith.constant dense<0.000000e+00> : vector<32x128xf32>
    %133 = tpu.matmul %130, %132, %cst_129 {dimension_numbers = #tpu.dot_dimension_numbers<[1], [0], [0], [1], [0, 0, 1, 1], [], []>} : vector<32x128xf32>, vector<128x128xf32>, vector<32x128xf32> -> vector<32x128xf32>
    %134 = arith.addf %128, %133 : vector<32x128xf32>
    %c2_130 = arith.constant 2 : index
    %c0_131 = arith.constant 0 : index
    %c0_132 = arith.constant 0 : index
    %135 = vector.load %arg10[%c2_130, %c0_131, %c0_132] : memref<6x10x128xf32, #tpu.memory_space<vmem>>, vector<4x8x128xf32>
    %136 = vector.shape_cast %135 : vector<4x8x128xf32> to vector<32x128xf32>
    %c6_133 = arith.constant 6 : index
    %c0_134 = arith.constant 0 : index
    %c0_135 = arith.constant 0 : index
    %137 = vector.load %arg5[%c6_133, %c0_134, %c0_135] : memref<9x128x128xf32, #tpu.memory_space<vmem>>, vector<1x128x128xf32>
    %138 = vector.shape_cast %137 : vector<1x128x128xf32> to vector<128x128xf32>
    %cst_136 = arith.constant dense<0.000000e+00> : vector<32x128xf32>
    %139 = tpu.matmul %136, %138, %cst_136 {dimension_numbers = #tpu.dot_dimension_numbers<[1], [0], [0], [1], [0, 0, 1, 1], [], []>} : vector<32x128xf32>, vector<128x128xf32>, vector<32x128xf32> -> vector<32x128xf32>
    %140 = arith.addf %134, %139 : vector<32x128xf32>
    %c2_137 = arith.constant 2 : index
    %c1_138 = arith.constant 1 : index
    %c0_139 = arith.constant 0 : index
    %141 = vector.load %arg10[%c2_137, %c1_138, %c0_139] : memref<6x10x128xf32, #tpu.memory_space<vmem>>, vector<4x8x128xf32>
    %142 = vector.shape_cast %141 : vector<4x8x128xf32> to vector<32x128xf32>
    %c7_140 = arith.constant 7 : index
    %c0_141 = arith.constant 0 : index
    %c0_142 = arith.constant 0 : index
    %143 = vector.load %arg5[%c7_140, %c0_141, %c0_142] : memref<9x128x128xf32, #tpu.memory_space<vmem>>, vector<1x128x128xf32>
    %144 = vector.shape_cast %143 : vector<1x128x128xf32> to vector<128x128xf32>
    %cst_143 = arith.constant dense<0.000000e+00> : vector<32x128xf32>
    %145 = tpu.matmul %142, %144, %cst_143 {dimension_numbers = #tpu.dot_dimension_numbers<[1], [0], [0], [1], [0, 0, 1, 1], [], []>} : vector<32x128xf32>, vector<128x128xf32>, vector<32x128xf32> -> vector<32x128xf32>
    %146 = arith.addf %140, %145 : vector<32x128xf32>
    %c2_144 = arith.constant 2 : index
    %c2_145 = arith.constant 2 : index
    %c0_146 = arith.constant 0 : index
    %147 = vector.load %arg10[%c2_144, %c2_145, %c0_146] : memref<6x10x128xf32, #tpu.memory_space<vmem>>, vector<4x8x128xf32>
    %148 = vector.shape_cast %147 : vector<4x8x128xf32> to vector<32x128xf32>
    %c8_147 = arith.constant 8 : index
    %c0_148 = arith.constant 0 : index
    %c0_149 = arith.constant 0 : index
    %149 = vector.load %arg5[%c8_147, %c0_148, %c0_149] : memref<9x128x128xf32, #tpu.memory_space<vmem>>, vector<1x128x128xf32>
    %150 = vector.shape_cast %149 : vector<1x128x128xf32> to vector<128x128xf32>
    %cst_150 = arith.constant dense<0.000000e+00> : vector<32x128xf32>
    %151 = tpu.matmul %148, %150, %cst_150 {dimension_numbers = #tpu.dot_dimension_numbers<[1], [0], [0], [1], [0, 0, 1, 1], [], []>} : vector<32x128xf32>, vector<128x128xf32>, vector<32x128xf32> -> vector<32x128xf32>
    %152 = arith.addf %146, %151 : vector<32x128xf32>
    %c0_151 = arith.constant 0 : index
    %c0_152 = arith.constant 0 : index
    %153 = vector.load %arg6[%c0_151, %c0_152] : memref<1x128xf32, #tpu.memory_space<vmem>>, vector<1x128xf32>
    %154 = vector.shape_cast %153 : vector<1x128xf32> to vector<128xf32>
    %155 = vector.shape_cast %154 : vector<128xf32> to vector<1x128xf32>
    %156 = vector.broadcast %155 : vector<1x128xf32> to vector<32x128xf32>
    %157 = arith.addf %152, %156 : vector<32x128xf32>
    %cst_153 = arith.constant 0.000000e+00 : f32
    %158 = vector.broadcast %cst_153 : f32 to vector<32x128xf32>
    %159 = arith.maximumf %157, %158 : vector<32x128xf32>
    %160 = vector.shape_cast %159 : vector<32x128xf32> to vector<4x8x128xf32>
    %c0_154 = arith.constant 0 : index
    %c0_155 = arith.constant 0 : index
    %c0_156 = arith.constant 0 : index
    %c0_157 = arith.constant 0 : index
    %161 = vector.load %arg7[%c0_154, %c0_155, %c0_156, %c0_157] : memref<1x4x8x128xf32, #tpu.memory_space<vmem>>, vector<1x4x8x128xf32>
    %162 = vector.shape_cast %161 : vector<1x4x8x128xf32> to vector<4x8x128xf32>
    %163 = vector.shape_cast %160 : vector<4x8x128xf32> to vector<1x4x8x128xf32>
    tpu.vector_store %arg7[%c0_154, %c0_155, %c0_156, %c0_157], %163 {strides = array<i32>} : memref<1x4x8x128xf32, #tpu.memory_space<vmem>>, vector<1x4x8x128xf32>,
    return
  }
  func.func @transform_1(%arg0: i32, %arg1: i32) -> (i32, i32, i32) {
    %c0_i32 = arith.constant 0 : i32
    %c0_i32_0 = arith.constant 0 : i32
    %c0_i32_1 = arith.constant 0 : i32
    %c0_i32_2 = arith.constant 0 : i32
    return %c0_i32, %c0_i32_0, %c0_i32_1 : i32, i32, i32
  }
  func.func @transform_2(%arg0: i32, %arg1: i32) -> (i32, i32) {
    %c0_i32 = arith.constant 0 : i32
    %c0_i32_0 = arith.constant 0 : i32
    %c0_i32_1 = arith.constant 0 : i32
    return %c0_i32, %c0_i32_0 : i32, i32
  }
  func.func @transform_3(%arg0: i32, %arg1: i32) -> (i32, i32, i32) {
    %c0_i32 = arith.constant 0 : i32
    %c0_i32_0 = arith.constant 0 : i32
    %c0_i32_1 = arith.constant 0 : i32
    %c0_i32_2 = arith.constant 0 : i32
    return %c0_i32, %c0_i32_0, %c0_i32_1 : i32, i32, i32
  }
  func.func @transform_4(%arg0: i32, %arg1: i32) -> (i32, i32) {
    %c0_i32 = arith.constant 0 : i32
    %c0_i32_0 = arith.constant 0 : i32
    %c0_i32_1 = arith.constant 0 : i32
    return %c0_i32, %c0_i32_0 : i32, i32
  }
  func.func @transform_5(%arg0: i32, %arg1: i32) -> (i32, i32, i32, i32) {
    %c0_i32 = arith.constant 0 : i32
    %c0_i32_0 = arith.constant 0 : i32
    %c0_i32_1 = arith.constant 0 : i32
    return %arg0, %arg1, %c0_i32, %c0_i32_0 : i32, i32, i32, i32
  }
}

</mosaic_0001>

<llo_original>
// kernel: tpu_custom_call.1
$region0: #{tpu_custom_call.1}
  #allocation0 [shape = 'u32[]', space=smem, size = 0x4, offset = 0x4, fixed_abs, tag = 'smem constant byte address 0x4 - core index']
  #allocation1 [shape = 'u32[144,128]{1,0:T(1,128)}', space=vmem, size = 0x12000, scoped, tag = 'internal scratch']
  #allocation2 [shape = 'f32[16,16,128]{2,1,0:T(8,128)}', space=vmem, size = 0x20000, scoped, tag = 'scratch operand']
  #allocation3 [shape = 'f32[8,10,128]{2,1,0:T(8,128)}', space=vmem, size = 0x10000, scoped, tag = 'scratch operand']
  #allocation4 [shape = 'f32[6,10,128]{2,1,0:T(8,128)}', space=vmem, size = 0xc000, scoped, tag = 'scratch operand']
  #allocation5 [shape = 's32[1]{0}', space=sflag, size = 0x4, scoped, tag = 'scratch operand']
  #allocation12 [shape = 's32[]', space=sflag, size = 0x4, offset = 0, fixed_abs, tag = 'sflag constant byte address 0x0 - dummy sync flag']
  #allocation13 [shape = 's32[]', space=sflag, size = 0x4, offset = 0, fixed_abs, tag = 'sflag constant byte address 0x0 - dummy sync flag']
  #allocation14 [shape = 'u32[]', space=smem, size = 0x4, offset = 0x44, fixed_abs, tag = 'smem constant byte address 0x44 - assertion arg 0']
  #allocation15 [shape = 'u32[]', space=smem, size = 0x4, offset = 0x48, fixed_abs, tag = 'smem constant byte address 0x48 - assertion arg 1']
  %s0 = inlined_call_operand.hbm [shape: f32[2,24,16,128], index: 0, kind: input, shape index: {}]
  %s1 = inlined_call_operand.hbm [shape: f32[9,128,128], index: 1, kind: input, shape index: {}]
  %s2 = inlined_call_operand.vmem [shape: f32[1,128], index: 2, kind: input, shape index: {}]
  %s3 = inlined_call_operand.hbm [shape: f32[9,128,128], index: 3, kind: input, shape index: {}]
  %s4 = inlined_call_operand.vmem [shape: f32[1,128], index: 4, kind: input, shape index: {}]
  %s5 = inlined_call_operand.hbm [shape: f32[2,8,8,128], index: 5, kind: output, shape index: {}]
  %s6 = sld [smem:[#allocation0]]
  $region69: #{tpu_custom_call.1} parent=0
    _
  %s8 = ssub.s32 1, %s6
  %s9 = scalar_select 0, %s8, %s6
  $region1: #{tpu_custom_call.1} parent=0
    #allocation6 [shape = 'u8[589824]{0}', space=vmem, size = 0x90000, scoped, tag = 'input window, operand 1, single buffered']
    #allocation7 [shape = 's32[2]{0}', space=sflag, size = 0x8, scoped, tag = 'scoped memory for tpu_custom_call.1']
    #allocation8 [shape = 's32[2]{0}', space=sflag, size = 0x8, scoped, tag = 'scoped memory for tpu_custom_call.1']
    #allocation9 [shape = 'u8[589824]{0}', space=vmem, size = 0x90000, scoped, tag = 'input window, operand 3, single buffered']
    #allocation10 [shape = 's32[1]{0}', space=sflag, size = 0x4, scoped, tag = 'scoped memory for tpu_custom_call.1']
    #allocation11 [shape = 'u8[32768]{0}', space=vmem, size = 0x8000, scoped, tag = 'output window, operand 0']
    %10 = vsyncpa [#allocation7], 0
    %11 = vsyncpa [#allocation10], 0
    %12 = vsyncpa [#allocation8], 0
    %s13 = scalar_lea.sflag [#allocation8], 1
    %14 = vsyncpa %s13, 0
    loop: start=0, step=1, limit=6
    $region2: #{tpu_custom_call.1} parent=1 // loop_pre_header
      _
    $region3: #{tpu_custom_call.1} parent=1 // loop_header
      %s16 = sphi 0, %s20
      %p17 = scmp.ge.s32.totalorder %s16, 6
      %s23 = sphi 0, %s35
      %s24 = sphi 0, %s31
      %s25 = sphi 0, %s23
      %s26 = sphi 0, %s24
      %s27 = sphi 0, %s25
      %s28 = sphi 0, %s26
      %s36 = sphi 0, %s36
      %s38 = sphi 0, %s36
      %s39 = sphi 0, %s38
      %s53 = sphi 0, %s39
      %s57 = sphi 0, %s57
      %s59 = sphi 0, %s57
      %s60 = sphi 0, %s59
      %s74 = sphi 0, %s60
      %s78 = sphi 0, %s78
      %s80 = sphi 0, %s78
      %s81 = sphi 0, %s80
      %s95 = sphi 0, %s81
      %s99 = sphi 0, %s99
      %s101 = sphi 0, %s99
      %s102 = sphi 0, %s101
      %s116 = sphi 0, %s102
      %s124 = sphi 0, %s126
      %s127 = sphi 0, %s124
      %s128 = sphi 0, %s127
      %s144 = sphi 0, %s128
    $region4: #{tpu_custom_call.1} parent=1 // loop_header_branch
      %19 = sbr.rel (%p17) target = $region8
    $region5: #{tpu_custom_call.1} parent=1 // loop_body
      %s21 = ssub.s32 %s16, 1
      %s22 = ssub.s32 %s16, 2
      %s29 = sadd.s32 1, %s24
      %p30 = scmp.ge.s32.totalorder %s29, 2
      %s31 = scalar_select %p30, 0, %s29
      %s32 = sadd.s32 1, %s23
      %s33 = scalar_select %p30, %s32, %s23
      %p34 = scmp.ge.s32.totalorder %s33, 2
      %s35 = scalar_select %p34, 0, %s33
      %s37 = sadd.s32 %s36, 1
      %p40 = scmp.eq.s32.totalorder %s16, 3
      %p41 = scmp.ne.s32.totalorder %s36, %s38
      %p42 = scmp.eq.s32.totalorder %s16, 0
      %p43 = por %p41, %p42
      %p44 = scmp.ne.s32.totalorder %s36, %s38
      %p45 = scmp.eq.s32.totalorder %s21, 3
      %p46 = por %p44, %p45
      %p47 = scmp.ne.s32.totalorder %s38, %s39
      %p48 = scmp.eq.s32.totalorder %s21, 0
      %p49 = por %p47, %p48
      %p50 = scmp.ne.s32.totalorder %s38, %s39
      %p51 = scmp.eq.s32.totalorder %s22, 3
      %p52 = por %p50, %p51
      %p54 = scmp.ne.s32.totalorder %s39, %s53
      %p55 = scmp.eq.s32.totalorder %s22, 0
      %p56 = por %p54, %p55
      %s58 = sadd.s32 %s57, 1
      %p61 = scmp.eq.s32.totalorder %s16, 3
      %p62 = scmp.ne.s32.totalorder %s57, %s59
      %p63 = scmp.eq.s32.totalorder %s16, 0
      %p64 = por %p62, %p63
      %p65 = scmp.ne.s32.totalorder %s57, %s59
      %p66 = scmp.eq.s32.totalorder %s21, 3
      %p67 = por %p65, %p66
      %p68 = scmp.ne.s32.totalorder %s59, %s60
      %p69 = scmp.eq.s32.totalorder %s21, 0
      %p70 = por %p68, %p69
      %p71 = scmp.ne.s32.totalorder %s59, %s60
      %p72 = scmp.eq.s32.totalorder %s22, 3
      %p73 = por %p71, %p72
      %p75 = scmp.ne.s32.totalorder %s60, %s74
      %p76 = scmp.eq.s32.totalorder %s22, 0
      %p77 = por %p75, %p76
      %s79 = sadd.s32 %s78, 1
      %p82 = scmp.eq.s32.totalorder %s16, 3
      %p83 = scmp.ne.s32.totalorder %s78, %s80
      %p84 = scmp.eq.s32.totalorder %s16, 0
      %p85 = por %p83, %p84
      %p86 = scmp.ne.s32.totalorder %s78, %s80
      %p87 = scmp.eq.s32.totalorder %s21, 3
      %p88 = por %p86, %p87
      %p89 = scmp.ne.s32.totalorder %s80, %s81
      %p90 = scmp.eq.s32.totalorder %s21, 0
      %p91 = por %p89, %p90
      %p92 = scmp.ne.s32.totalorder %s80, %s81
      %p93 = scmp.eq.s32.totalorder %s22, 3
      %p94 = por %p92, %p93
      %p96 = scmp.ne.s32.totalorder %s81, %s95
      %p97 = scmp.eq.s32.totalorder %s22, 0
      %p98 = por %p96, %p97
      %s100 = sadd.s32 %s99, 1
      %p103 = scmp.eq.s32.totalorder %s16, 3
      %p104 = scmp.ne.s32.totalorder %s99, %s101
      %p105 = scmp.eq.s32.totalorder %s16, 0
      %p106 = por %p104, %p105
      %p107 = scmp.ne.s32.totalorder %s99, %s101
      %p108 = scmp.eq.s32.totalorder %s21, 3
      %p109 = por %p107, %p108
      %p110 = scmp.ne.s32.totalorder %s101, %s102
      %p111 = scmp.eq.s32.totalorder %s21, 0
      %p112 = por %p110, %p111
      %p113 = scmp.ne.s32.totalorder %s101, %s102
      %p114 = scmp.eq.s32.totalorder %s22, 3
      %p115 = por %p113, %p114
      %p117 = scmp.ne.s32.totalorder %s102, %s116
      %p118 = scmp.eq.s32.totalorder %s22, 0
      %p119 = por %p117, %p118
      %s120 = ssub.s32 %s23, %s35
      %s121 = ssub.s32 %s24, %s31
      %s122 = sor.u32 %s120, %s121
      %p123 = scmp.eq.s32.totalorder %s122, 0
      %s125 = sadd.s32 %s124, 1
      %s126 = scalar_select %p123, %s124, %s125
      %p129 = pneg %p123
      %p130 = scmp.eq.s32.totalorder %s16, 3
      %p131 = por %p129, %p130
      %p132 = scmp.ne.s32.totalorder %s124, %s127
      %p133 = scmp.eq.s32.totalorder %s16, 0
      %p134 = por %p132, %p133
      %p135 = scmp.ne.s32.totalorder %s124, %s127
      %p136 = scmp.eq.s32.totalorder %s21, 3
      %p137 = por %p135, %p136
      %p138 = scmp.ne.s32.totalorder %s127, %s128
      %p139 = scmp.eq.s32.totalorder %s21, 0
      %p140 = por %p138, %p139
      %p141 = scmp.ne.s32.totalorder %s127, %s128
      %p142 = scmp.eq.s32.totalorder %s22, 3
      %p143 = por %p141, %p142
      %p145 = scmp.ne.s32.totalorder %s128, %s144
      %p146 = scmp.eq.s32.totalorder %s22, 0
      %p147 = por %p145, %p146
      %p148 = scmp.le.s32.totalorder 1, %s16
      %p149 = scmp.lt.s32.totalorder %s16, 5
      %p150 = pnand %p148, %p149
      %p151 = pneg %p150
      // Predicated region
      $region9: #{tpu_custom_call.1} parent=5 // pred_check
        _
      $region10: #{tpu_custom_call.1} parent=5 // pred_check_branch
        %153 = sbr.rel (%p150) target = $region12
      $region11: #{tpu_custom_call.1} parent=5 // pred_region
        %s154 = ssub.s32 %s16, 1
        // Predicated region
        $region13: #{tpu_custom_call.1} parent=11 // pred_check
          %p155 = pneg %p49
        $region14: #{tpu_custom_call.1} parent=11 // pred_check_branch
          %157 = sbr.rel (%p155) target = $region16
        $region15: #{tpu_custom_call.1} parent=11 // pred_region
          %s159 = ssub.s32 18432, 18432
          %160 = vsyncadd [#allocation7], %s159
          %s161 = sshll.u32 [#allocation6], 4
          %s162 = int_to_ptr.vmem [resolvable:$true] %s161
          %167 = dma.hbm_to_vmem [thread:$0]  %s1, 18432, %s162, [#allocation7], 128, 128, 8
        $region16: #{tpu_custom_call.1} parent=11 // pred_fallthru
          _
        // Predicated region
        $region17: #{tpu_custom_call.1} parent=11 // pred_check
          %p168 = pneg %p70
        $region18: #{tpu_custom_call.1} parent=11 // pred_check_branch
          %170 = sbr.rel (%p168) target = $region20
        $region19: #{tpu_custom_call.1} parent=11 // pred_region
          _
        $region20: #{tpu_custom_call.1} parent=11 // pred_fallthru
          _
        // Predicated region
        $region21: #{tpu_custom_call.1} parent=11 // pred_check
          %p171 = pneg %p91
        $region22: #{tpu_custom_call.1} parent=11 // pred_check_branch
          %173 = sbr.rel (%p171) target = $region24
        $region23: #{tpu_custom_call.1} parent=11 // pred_region
          %s175 = ssub.s32 18432, 18432
          %176 = vsyncadd [#allocation10], %s175
          %s177 = sshll.u32 [#allocation9], 4
          %s178 = int_to_ptr.vmem [resolvable:$true] %s177
          %183 = dma.hbm_to_vmem [thread:$0]  %s3, 18432, %s178, [#allocation10], 128, 128, 8
        $region24: #{tpu_custom_call.1} parent=11 // pred_fallthru
          _
        // Predicated region
        $region25: #{tpu_custom_call.1} parent=11 // pred_check
          %p184 = pneg %p112
        $region26: #{tpu_custom_call.1} parent=11 // pred_check_branch
          %186 = sbr.rel (%p184) target = $region28
        $region27: #{tpu_custom_call.1} parent=11 // pred_region
          _
        $region28: #{tpu_custom_call.1} parent=11 // pred_fallthru
          _
      $region12: #{tpu_custom_call.1} parent=5 // pred_fallthru
        _
      %p187 = scmp.lt.s32.totalorder %s16, 4
      // Predicated region
      $region29: #{tpu_custom_call.1} parent=5 // pred_check
        %p188 = pneg %p187
      $region30: #{tpu_custom_call.1} parent=5 // pred_check_branch
        %190 = sbr.rel (%p188) target = $region32
      $region31: #{tpu_custom_call.1} parent=5 // pred_region
        _
      $region32: #{tpu_custom_call.1} parent=5 // pred_fallthru
        _
      %p191 = scmp.le.s32.totalorder 1, %s16
      %p192 = scmp.lt.s32.totalorder %s16, 5
      %p193 = pnand %p191, %p192
      %p194 = pneg %p193
      // Predicated region
      $region33: #{tpu_custom_call.1} parent=5 // pred_check
        _
      $region34: #{tpu_custom_call.1} parent=5 // pred_check_branch
        %196 = sbr.rel (%p193) target = $region36
      $region35: #{tpu_custom_call.1} parent=5 // pred_region
        %s197 = ssub.s32 %s16, 1
        // Predicated region
        $region37: #{tpu_custom_call.1} parent=35 // pred_check
          %p198 = pneg %p49
        $region38: #{tpu_custom_call.1} parent=35 // pred_check_branch
          %200 = sbr.rel (%p198) target = $region40
        $region39: #{tpu_custom_call.1} parent=35 // pred_region
          %201 = dma.done [#allocation7], 18432
        $region40: #{tpu_custom_call.1} parent=35 // pred_fallthru
          _
        // Predicated region
        $region41: #{tpu_custom_call.1} parent=35 // pred_check
          %p202 = pneg %p91
        $region42: #{tpu_custom_call.1} parent=35 // pred_check_branch
          %204 = sbr.rel (%p202) target = $region44
        $region43: #{tpu_custom_call.1} parent=35 // pred_region
          %205 = dma.done [#allocation10], 18432
        $region44: #{tpu_custom_call.1} parent=35 // pred_fallthru
          _
        %p206 = pneg %p49
        %p207 = pneg %p46
        %p208 = pneg %p70
        %p209 = pneg %p67
        %p210 = pneg %p91
        %p211 = pneg %p88
        %p212 = pneg %p112
        %p213 = pneg %p109
        %p214 = pneg %p140
        %p215 = pneg %p137
        %s216 = sand.u32 %s127, 1
        %s217 = scalar_lea.sflag [#allocation8], %s216
        %s218 = sand.u32 %s127, 1
        %s219 = smul.addr %s218, 32
        %s220 = scalar_lea.vmem [#allocation11], %s219
        %s221 = smul.u32 4, %s26
        %s222 = smul.u32 %s26, 8
        %s223 = smul.u32 %s222, 16
        %s224 = smul.u32 %s25, 384
        %s225 = sadd.s32 %s223, %s224
        %s226 = smul.addr %s225, 16
        %s227 = scalar_lea.hbm %s0, %s226
        // Predicated region
        $region45: #{tpu_custom_call.1} parent=35 // pred_check
          _
        $region46: #{tpu_custom_call.1} parent=35 // pred_check_branch
          %229 = sbr.rel target = $region48
        $region47: #{tpu_custom_call.1} parent=35 // pred_region
          %230 = sst [smem:[#allocation14]] [#allocation13]
          %231 = sst [smem:[#allocation15]] [#allocation12]
        $region48: #{tpu_custom_call.1} parent=35 // pred_fallthru
          _
        %233 = shalt.err (0)
        %s235 = sshll.u32 [#allocation2], 4
        %s236 = int_to_ptr.vmem [resolvable:$true] %s235
        %238 = dma.hbm_to_vmem [thread:$0]  %s227, 4096, %s236, [#allocation5]
        %239 = vst [vmem:[#allocation3] sm:$0x1] 0.0
        %240 = vst [vmem:[#allocation3 + $0x10] sm:$0x1] 0.0
        %241 = vst [vmem:[#allocation3 + $0x20] sm:$0x1] 0.0
        %242 = vst [vmem:[#allocation3 + $0x30] sm:$0x1] 0.0
        %243 = vst [vmem:[#allocation3 + $0x40] sm:$0x1] 0.0
        %244 = vst [vmem:[#allocation3 + $0x50] sm:$0x1] 0.0
        %245 = vst [vmem:[#allocation3 + $0x60] sm:$0x1] 0.0
        %246 = vst [vmem:[#allocation3 + $0x70] sm:$0x1] 0.0
        %247 = vst [vmem:[#allocation3 + $0x9] sm:$0x1] 0.0
        %248 = vst [vmem:[#allocation3 + $0x19] sm:$0x1] 0.0
        %249 = vst [vmem:[#allocation3 + $0x29] sm:$0x1] 0.0
        %250 = vst [vmem:[#allocation3 + $0x39] sm:$0x1] 0.0
        %251 = vst [vmem:[#allocation3 + $0x49] sm:$0x1] 0.0
        %252 = vst [vmem:[#allocation3 + $0x59] sm:$0x1] 0.0
        %253 = vst [vmem:[#allocation3 + $0x69] sm:$0x1] 0.0
        %254 = vst [vmem:[#allocation3 + $0x79] sm:$0x1] 0.0
        %255 = vst [vmem:[#allocation4] sm:$0x1] 0.0
        %256 = vst [vmem:[#allocation4 + $0x10] sm:$0x1] 0.0
        %257 = vst [vmem:[#allocation4 + $0x20] sm:$0x1] 0.0
        %258 = vst [vmem:[#allocation4 + $0x30] sm:$0x1] 0.0
        %259 = vst [vmem:[#allocation4 + $0x40] sm:$0x1] 0.0
        %260 = vst [vmem:[#allocation4 + $0x50] sm:$0x1] 0.0
        %261 = vst [vmem:[#allocation4 + $0x9] sm:$0x1] 0.0
        %262 = vst [vmem:[#allocation4 + $0x19] sm:$0x1] 0.0
        %263 = vst [vmem:[#allocation4 + $0x29] sm:$0x1] 0.0
        %264 = vst [vmem:[#allocation4 + $0x39] sm:$0x1] 0.0
        %265 = vst [vmem:[#allocation4 + $0x49] sm:$0x1] 0.0
        %266 = vst [vmem:[#allocation4 + $0x59] sm:$0x1] 0.0
        %s267 = smul.u32 16, 16
        %s268 = smul.u32 %s267, 1
        %s269 = sshll.u32 %s268, 4
        %270 = dma.done [#allocation5], %s269
        %v271 = vld [vmem:[#allocation2] sm:$0xff]
        %v272 = vld [vmem:[#allocation2 + $0x8] sm:$0xff]
        %v273 = vld [vmem:[#allocation2 + $0x10] sm:$0xff]
        %v274 = vld [vmem:[#allocation2 + $0x18] sm:$0xff]
        %v275 = vld [vmem:[#allocation2 + $0x20] sm:$0xff]
        %v276 = vld [vmem:[#allocation2 + $0x28] sm:$0xff]
        %v277 = vld [vmem:[#allocation2 + $0x30] sm:$0xff]
        %v278 = vld [vmem:[#allocation2 + $0x38] sm:$0xff]
        %v279 = vld [vmem:[#allocation2 + $0x40] sm:$0xff]
        %v280 = vld [vmem:[#allocation2 + $0x48] sm:$0xff]
        %v281 = vld [vmem:[#allocation2 + $0x50] sm:$0xff]
        %v282 = vld [vmem:[#allocation2 + $0x58] sm:$0xff]
        %v283 = vld [vmem:[#allocation2 + $0x60] sm:$0xff]
        %v284 = vld [vmem:[#allocation2 + $0x68] sm:$0xff]
        %v285 = vld [vmem:[#allocation2 + $0x70] sm:$0xff]
        %v286 = vld [vmem:[#allocation2 + $0x78] sm:$0xff]
        %v287 = vld [vmem:[#allocation2 + $0x80] sm:$0xff]
        %v288 = vld [vmem:[#allocation2 + $0x88] sm:$0xff]
        %v289 = vld [vmem:[#allocation2 + $0x90] sm:$0xff]
        %v290 = vld [vmem:[#allocation2 + $0x98] sm:$0xff]
        %v291 = vld [vmem:[#allocation2 + $0xa0] sm:$0xff]
        %v292 = vld [vmem:[#allocation2 + $0xa8] sm:$0xff]
        %v293 = vld [vmem:[#allocation2 + $0xb0] sm:$0xff]
        %v294 = vld [vmem:[#allocation2 + $0xb8] sm:$0xff]
        %v295 = vld [vmem:[#allocation2 + $0xc0] sm:$0xff]
        %v296 = vld [vmem:[#allocation2 + $0xc8] sm:$0xff]
        %v297 = vld [vmem:[#allocation2 + $0xd0] sm:$0xff]
        %v298 = vld [vmem:[#allocation2 + $0xd8] sm:$0xff]
        %v299 = vld [vmem:[#allocation2 + $0xe0] sm:$0xff]
        %v300 = vld [vmem:[#allocation2 + $0xe8] sm:$0xff]
        %v301 = vld [vmem:[#allocation2 + $0xf0] sm:$0xff]
        %v302 = vld [vmem:[#allocation2 + $0xf8] sm:$0xff]
        %v303 = vmax.f32 %v271, %v273
        %v304 = vmax.f32 %v272, %v274
        %v305 = vmax.f32 %v275, %v277
        %v306 = vmax.f32 %v276, %v278
        %v307 = vmax.f32 %v279, %v281
        %v308 = vmax.f32 %v280, %v282
        %v309 = vmax.f32 %v283, %v285
        %v310 = vmax.f32 %v284, %v286
        %v311 = vmax.f32 %v287, %v289
        %v312 = vmax.f32 %v288, %v290
        %v313 = vmax.f32 %v291, %v293
        %v314 = vmax.f32 %v292, %v294
        %v315 = vmax.f32 %v295, %v297
        %v316 = vmax.f32 %v296, %v298
        %v317 = vmax.f32 %v299, %v301
        %v318 = vmax.f32 %v300, %v302
        %v335 = vcombine.high %v303, %v303
        %v337 = vunpack.c.l.s4 1983009808
        %v338 = vunpack.c.0.s8 %v337
        %v339 = vlaneseq
        %v340 = vshrl.u32 %v339, 7
        %v341 = vsub.s32 %v338, %v340
        %v342 = vrot.slane %v303, %v341
        %v344 = vunpack.c.l.s4 1983009808
        %v345 = vunpack.c.0.s8 %v344
        %v346 = vlaneseq
        %v347 = vshrl.u32 %v346, 7
        %v348 = vsub.s32 %v345, %v347
        %v349 = vrot.slane %v335, %v348
        %v350 = vcombine.high %v342, %v342
        %v351 = vcombine.high %v349, %v349
        %v352 = vcombine.high %v304, %v304
        %v354 = vunpack.c.l.s4 1983009808
        %v355 = vunpack.c.0.s8 %v354
        %v356 = vlaneseq
        %v357 = vshrl.u32 %v356, 7
        %v358 = vsub.s32 %v355, %v357
        %v359 = vrot.slane %v304, %v358
        %v361 = vunpack.c.l.s4 1983009808
        %v362 = vunpack.c.0.s8 %v361
        %v363 = vlaneseq
        %v364 = vshrl.u32 %v363, 7
        %v365 = vsub.s32 %v362, %v364
        %v366 = vrot.slane %v352, %v365
        %v367 = vcombine.high %v359, %v359
        %v368 = vcombine.high %v366, %v366
        %v369 = vcombine.high %v305, %v305
        %v371 = vunpack.c.l.s4 1983009808
        %v372 = vunpack.c.0.s8 %v371
        %v373 = vlaneseq
        %v374 = vshrl.u32 %v373, 7
        %v375 = vsub.s32 %v372, %v374
        %v376 = vrot.slane %v305, %v375
        %v378 = vunpack.c.l.s4 1983009808
        %v379 = vunpack.c.0.s8 %v378
        %v380 = vlaneseq
        %v381 = vshrl.u32 %v380, 7
        %v382 = vsub.s32 %v379, %v381
        %v383 = vrot.slane %v369, %v382
        %v384 = vcombine.high %v376, %v376
        %v385 = vcombine.high %v383, %v383
        %v386 = vcombine.high %v306, %v306
        %v388 = vunpack.c.l.s4 1983009808
        %v389 = vunpack.c.0.s8 %v388
        %v390 = vlaneseq
        %v391 = vshrl.u32 %v390, 7
        %v392 = vsub.s32 %v389, %v391
        %v393 = vrot.slane %v306, %v392
        %v395 = vunpack.c.l.s4 1983009808
        %v396 = vunpack.c.0.s8 %v395
        %v397 = vlaneseq
        %v398 = vshrl.u32 %v397, 7
        %v399 = vsub.s32 %v396, %v398
        %v400 = vrot.slane %v386, %v399
        %v401 = vcombine.high %v393, %v393
        %v402 = vcombine.high %v400, %v400
        %v403 = vcombine.high %v307, %v307
        %v405 = vunpack.c.l.s4 1983009808
        %v406 = vunpack.c.0.s8 %v405
        %v407 = vlaneseq
        %v408 = vshrl.u32 %v407, 7
        %v409 = vsub.s32 %v406, %v408
        %v410 = vrot.slane %v307, %v409
        %v412 = vunpack.c.l.s4 1983009808
        %v413 = vunpack.c.0.s8 %v412
        %v414 = vlaneseq
        %v415 = vshrl.u32 %v414, 7
        %v416 = vsub.s32 %v413, %v415
        %v417 = vrot.slane %v403, %v416
        %v418 = vcombine.high %v410, %v410
        %v419 = vcombine.high %v417, %v417
        %v420 = vcombine.high %v308, %v308
        %v422 = vunpack.c.l.s4 1983009808
        %v423 = vunpack.c.0.s8 %v422
        %v424 = vlaneseq
        %v425 = vshrl.u32 %v424, 7
        %v426 = vsub.s32 %v423, %v425
        %v427 = vrot.slane %v308, %v426
        %v429 = vunpack.c.l.s4 1983009808
        %v430 = vunpack.c.0.s8 %v429
        %v431 = vlaneseq
        %v432 = vshrl.u32 %v431, 7
        %v433 = vsub.s32 %v430, %v432
        %v434 = vrot.slane %v420, %v433
        %v435 = vcombine.high %v427, %v427
        %v436 = vcombine.high %v434, %v434
        %v437 = vcombine.high %v309, %v309
        %v439 = vunpack.c.l.s4 1983009808
        %v440 = vunpack.c.0.s8 %v439
        %v441 = vlaneseq
        %v442 = vshrl.u32 %v441, 7
        %v443 = vsub.s32 %v440, %v442
        %v444 = vrot.slane %v309, %v443
        %v446 = vunpack.c.l.s4 1983009808
        %v447 = vunpack.c.0.s8 %v446
        %v448 = vlaneseq
        %v449 = vshrl.u32 %v448, 7
        %v450 = vsub.s32 %v447, %v449
        %v451 = vrot.slane %v437, %v450
        %v452 = vcombine.high %v444, %v444
        %v453 = vcombine.high %v451, %v451
        %v454 = vcombine.high %v310, %v310
        %v456 = vunpack.c.l.s4 1983009808
        %v457 = vunpack.c.0.s8 %v456
        %v458 = vlaneseq
        %v459 = vshrl.u32 %v458, 7
        %v460 = vsub.s32 %v457, %v459
        %v461 = vrot.slane %v310, %v460
        %v463 = vunpack.c.l.s4 1983009808
        %v464 = vunpack.c.0.s8 %v463
        %v465 = vlaneseq
        %v466 = vshrl.u32 %v465, 7
        %v467 = vsub.s32 %v464, %v466
        %v468 = vrot.slane %v454, %v467
        %v469 = vcombine.high %v461, %v461
        %v470 = vcombine.high %v468, %v468
        %v471 = vcombine.high %v311, %v311
        %v473 = vunpack.c.l.s4 1983009808
        %v474 = vunpack.c.0.s8 %v473
        %v475 = vlaneseq
        %v476 = vshrl.u32 %v475, 7
        %v477 = vsub.s32 %v474, %v476
        %v478 = vrot.slane %v311, %v477
        %v480 = vunpack.c.l.s4 1983009808
        %v481 = vunpack.c.0.s8 %v480
        %v482 = vlaneseq
        %v483 = vshrl.u32 %v482, 7
        %v484 = vsub.s32 %v481, %v483
        %v485 = vrot.slane %v471, %v484
        %v486 = vcombine.high %v478, %v478
        %v487 = vcombine.high %v485, %v485
        %v488 = vcombine.high %v312, %v312
        %v490 = vunpack.c.l.s4 1983009808
        %v491 = vunpack.c.0.s8 %v490
        %v492 = vlaneseq
        %v493 = vshrl.u32 %v492, 7
        %v494 = vsub.s32 %v491, %v493
        %v495 = vrot.slane %v312, %v494
        %v497 = vunpack.c.l.s4 1983009808
        %v498 = vunpack.c.0.s8 %v497
        %v499 = vlaneseq
        %v500 = vshrl.u32 %v499, 7
        %v501 = vsub.s32 %v498, %v500
        %v502 = vrot.slane %v488, %v501
        %v503 = vcombine.high %v495, %v495
        %v504 = vcombine.high %v502, %v502
        %v505 = vcombine.high %v313, %v313
        %v507 = vunpack.c.l.s4 1983009808
        %v508 = vunpack.c.0.s8 %v507
        %v509 = vlaneseq
        %v510 = vshrl.u32 %v509, 7
        %v511 = vsub.s32 %v508, %v510
        %v512 = vrot.slane %v313, %v511
        %v514 = vunpack.c.l.s4 1983009808
        %v515 = vunpack.c.0.s8 %v514
        %v516 = vlaneseq
        %v517 = vshrl.u32 %v516, 7
        %v518 = vsub.s32 %v515, %v517
        %v519 = vrot.slane %v505, %v518
        %v520 = vcombine.high %v512, %v512
        %v521 = vcombine.high %v519, %v519
        %v522 = vcombine.high %v314, %v314
        %v524 = vunpack.c.l.s4 1983009808
        %v525 = vunpack.c.0.s8 %v524
        %v526 = vlaneseq
        %v527 = vshrl.u32 %v526, 7
        %v528 = vsub.s32 %v525, %v527
        %v529 = vrot.slane %v314, %v528
        %v531 = vunpack.c.l.s4 1983009808
        %v532 = vunpack.c.0.s8 %v531
        %v533 = vlaneseq
        %v534 = vshrl.u32 %v533, 7
        %v535 = vsub.s32 %v532, %v534
        %v536 = vrot.slane %v522, %v535
        %v537 = vcombine.high %v529, %v529
        %v538 = vcombine.high %v536, %v536
        %v539 = vcombine.high %v315, %v315
        %v541 = vunpack.c.l.s4 1983009808
        %v542 = vunpack.c.0.s8 %v541
        %v543 = vlaneseq
        %v544 = vshrl.u32 %v543, 7
        %v545 = vsub.s32 %v542, %v544
        %v546 = vrot.slane %v315, %v545
        %v548 = vunpack.c.l.s4 1983009808
        %v549 = vunpack.c.0.s8 %v548
        %v550 = vlaneseq
        %v551 = vshrl.u32 %v550, 7
        %v552 = vsub.s32 %v549, %v551
        %v553 = vrot.slane %v539, %v552
        %v554 = vcombine.high %v546, %v546
        %v555 = vcombine.high %v553, %v553
        %v556 = vcombine.high %v316, %v316
        %v558 = vunpack.c.l.s4 1983009808
        %v559 = vunpack.c.0.s8 %v558
        %v560 = vlaneseq
        %v561 = vshrl.u32 %v560, 7
        %v562 = vsub.s32 %v559, %v561
        %v563 = vrot.slane %v316, %v562
        %v565 = vunpack.c.l.s4 1983009808
        %v566 = vunpack.c.0.s8 %v565
        %v567 = vlaneseq
        %v568 = vshrl.u32 %v567, 7
        %v569 = vsub.s32 %v566, %v568
        %v570 = vrot.slane %v556, %v569
        %v571 = vcombine.high %v563, %v563
        %v572 = vcombine.high %v570, %v570
        %v573 = vcombine.high %v317, %v317
        %v575 = vunpack.c.l.s4 1983009808
        %v576 = vunpack.c.0.s8 %v575
        %v577 = vlaneseq
        %v578 = vshrl.u32 %v577, 7
        %v579 = vsub.s32 %v576, %v578
        %v580 = vrot.slane %v317, %v579
        %v582 = vunpack.c.l.s4 1983009808
        %v583 = vunpack.c.0.s8 %v582
        %v584 = vlaneseq
        %v585 = vshrl.u32 %v584, 7
        %v586 = vsub.s32 %v583, %v585
        %v587 = vrot.slane %v573, %v586
        %v588 = vcombine.high %v580, %v580
        %v589 = vcombine.high %v587, %v587
        %v590 = vcombine.high %v318, %v318
        %v592 = vunpack.c.l.s4 1983009808
        %v593 = vunpack.c.0.s8 %v592
        %v594 = vlaneseq
        %v595 = vshrl.u32 %v594, 7
        %v596 = vsub.s32 %v593, %v595
        %v597 = vrot.slane %v318, %v596
        %v599 = vunpack.c.l.s4 1983009808
        %v600 = vunpack.c.0.s8 %v599
        %v601 = vlaneseq
        %v602 = vshrl.u32 %v601, 7
        %v603 = vsub.s32 %v600, %v602
        %v604 = vrot.slane %v590, %v603
        %v605 = vcombine.high %v597, %v597
        %v606 = vcombine.high %v604, %v604
        %v671 = vrot.slane %v342, 7
        %v672 = vrot.slane %v671, 2
        %v673 = vrot.slane %v350, 7
        %v674 = vrot.slane %v673, 2
        %v675 = vrot.slane %v349, 7
        %v676 = vrot.slane %v675, 2
        %v677 = vrot.slane %v351, 7
        %v678 = vrot.slane %v677, 2
        %v679 = vrot.slane %v359, 7
        %v680 = vrot.slane %v679, 2
        %v681 = vrot.slane %v367, 7
        %v682 = vrot.slane %v681, 2
        %v683 = vrot.slane %v366, 7
        %v684 = vrot.slane %v683, 2
        %v685 = vrot.slane %v368, 7
        %v686 = vrot.slane %v685, 2
        %v687 = vrot.slane %v376, 7
        %v688 = vrot.slane %v687, 2
        %v689 = vrot.slane %v384, 7
        %v690 = vrot.slane %v689, 2
        %v691 = vrot.slane %v383, 7
        %v692 = vrot.slane %v691, 2
        %v693 = vrot.slane %v385, 7
        %v694 = vrot.slane %v693, 2
        %v695 = vrot.slane %v393, 7
        %v696 = vrot.slane %v695, 2
        %v697 = vrot.slane %v401, 7
        %v698 = vrot.slane %v697, 2
        %v699 = vrot.slane %v400, 7
        %v700 = vrot.slane %v699, 2
        %v701 = vrot.slane %v402, 7
        %v702 = vrot.slane %v701, 2
        %v703 = vrot.slane %v410, 7
        %v704 = vrot.slane %v703, 2
        %v705 = vrot.slane %v418, 7
        %v706 = vrot.slane %v705, 2
        %v707 = vrot.slane %v417, 7
        %v708 = vrot.slane %v707, 2
        %v709 = vrot.slane %v419, 7
        %v710 = vrot.slane %v709, 2
        %v711 = vrot.slane %v427, 7
        %v712 = vrot.slane %v711, 2
        %v713 = vrot.slane %v435, 7
        %v714 = vrot.slane %v713, 2
        %v715 = vrot.slane %v434, 7
        %v716 = vrot.slane %v715, 2
        %v717 = vrot.slane %v436, 7
        %v718 = vrot.slane %v717, 2
        %v719 = vrot.slane %v444, 7
        %v720 = vrot.slane %v719, 2
        %v721 = vrot.slane %v452, 7
        %v722 = vrot.slane %v721, 2
        %v723 = vrot.slane %v451, 7
        %v724 = vrot.slane %v723, 2
        %v725 = vrot.slane %v453, 7
        %v726 = vrot.slane %v725, 2
        %v727 = vrot.slane %v461, 7
        %v728 = vrot.slane %v727, 2
        %v729 = vrot.slane %v469, 7
        %v730 = vrot.slane %v729, 2
        %v731 = vrot.slane %v468, 7
        %v732 = vrot.slane %v731, 2
        %v733 = vrot.slane %v470, 7
        %v734 = vrot.slane %v733, 2
        %v735 = vrot.slane %v478, 7
        %v736 = vrot.slane %v735, 2
        %v737 = vrot.slane %v486, 7
        %v738 = vrot.slane %v737, 2
        %v739 = vrot.slane %v485, 7
        %v740 = vrot.slane %v739, 2
        %v741 = vrot.slane %v487, 7
        %v742 = vrot.slane %v741, 2
        %v743 = vrot.slane %v495, 7
        %v744 = vrot.slane %v743, 2
        %v745 = vrot.slane %v503, 7
        %v746 = vrot.slane %v745, 2
        %v747 = vrot.slane %v502, 7
        %v748 = vrot.slane %v747, 2
        %v749 = vrot.slane %v504, 7
        %v750 = vrot.slane %v749, 2
        %v751 = vrot.slane %v512, 7
        %v752 = vrot.slane %v751, 2
        %v753 = vrot.slane %v520, 7
        %v754 = vrot.slane %v753, 2
        %v755 = vrot.slane %v519, 7
        %v756 = vrot.slane %v755, 2
        %v757 = vrot.slane %v521, 7
        %v758 = vrot.slane %v757, 2
        %v759 = vrot.slane %v529, 7
        %v760 = vrot.slane %v759, 2
        %v761 = vrot.slane %v537, 7
        %v762 = vrot.slane %v761, 2
        %v763 = vrot.slane %v536, 7
        %v764 = vrot.slane %v763, 2
        %v765 = vrot.slane %v538, 7
        %v766 = vrot.slane %v765, 2
        %v767 = vrot.slane %v546, 7
        %v768 = vrot.slane %v767, 2
        %v769 = vrot.slane %v554, 7
        %v770 = vrot.slane %v769, 2
        %v771 = vrot.slane %v553, 7
        %v772 = vrot.slane %v771, 2
        %v773 = vrot.slane %v555, 7
        %v774 = vrot.slane %v773, 2
        %v775 = vrot.slane %v563, 7
        %v776 = vrot.slane %v775, 2
        %v777 = vrot.slane %v571, 7
        %v778 = vrot.slane %v777, 2
        %v779 = vrot.slane %v570, 7
        %v780 = vrot.slane %v779, 2
        %v781 = vrot.slane %v572, 7
        %v782 = vrot.slane %v781, 2
        %v783 = vrot.slane %v580, 7
        %v784 = vrot.slane %v783, 2
        %v785 = vrot.slane %v588, 7
        %v786 = vrot.slane %v785, 2
        %v787 = vrot.slane %v587, 7
        %v788 = vrot.slane %v787, 2
        %v789 = vrot.slane %v589, 7
        %v790 = vrot.slane %v789, 2
        %v791 = vrot.slane %v597, 7
        %v792 = vrot.slane %v791, 2
        %v793 = vrot.slane %v605, 7
        %v794 = vrot.slane %v793, 2
        %v795 = vrot.slane %v604, 7
        %v796 = vrot.slane %v795, 2
        %v797 = vrot.slane %v606, 7
        %v798 = vrot.slane %v797, 2
        %v863 = vmax.f32 %v342, %v672
        %v864 = vmax.f32 %v350, %v674
        %v865 = vmax.f32 %v349, %v676
        %v866 = vmax.f32 %v351, %v678
        %v867 = vmax.f32 %v359, %v680
        %v868 = vmax.f32 %v367, %v682
        %v869 = vmax.f32 %v366, %v684
        %v870 = vmax.f32 %v368, %v686
        %v871 = vmax.f32 %v376, %v688
        %v872 = vmax.f32 %v384, %v690
        %v873 = vmax.f32 %v383, %v692
        %v874 = vmax.f32 %v385, %v694
        %v875 = vmax.f32 %v393, %v696
        %v876 = vmax.f32 %v401, %v698
        %v877 = vmax.f32 %v400, %v700
        %v878 = vmax.f32 %v402, %v702
        %v879 = vmax.f32 %v410, %v704
        %v880 = vmax.f32 %v418, %v706
        %v881 = vmax.f32 %v417, %v708
        %v882 = vmax.f32 %v419, %v710
        %v883 = vmax.f32 %v427, %v712
        %v884 = vmax.f32 %v435, %v714
        %v885 = vmax.f32 %v434, %v716
        %v886 = vmax.f32 %v436, %v718
        %v887 = vmax.f32 %v444, %v720
        %v888 = vmax.f32 %v452, %v722
        %v889 = vmax.f32 %v451, %v724
        %v890 = vmax.f32 %v453, %v726
        %v891 = vmax.f32 %v461, %v728
        %v892 = vmax.f32 %v469, %v730
        %v893 = vmax.f32 %v468, %v732
        %v894 = vmax.f32 %v470, %v734
        %v895 = vmax.f32 %v478, %v736
        %v896 = vmax.f32 %v486, %v738
        %v897 = vmax.f32 %v485, %v740
        %v898 = vmax.f32 %v487, %v742
        %v899 = vmax.f32 %v495, %v744
        %v900 = vmax.f32 %v503, %v746
        %v901 = vmax.f32 %v502, %v748
        %v902 = vmax.f32 %v504, %v750
        %v903 = vmax.f32 %v512, %v752
        %v904 = vmax.f32 %v520, %v754
        %v905 = vmax.f32 %v519, %v756
        %v906 = vmax.f32 %v521, %v758
        %v907 = vmax.f32 %v529, %v760
        %v908 = vmax.f32 %v537, %v762
        %v909 = vmax.f32 %v536, %v764
        %v910 = vmax.f32 %v538, %v766
        %v911 = vmax.f32 %v546, %v768
        %v912 = vmax.f32 %v554, %v770
        %v913 = vmax.f32 %v553, %v772
        %v914 = vmax.f32 %v555, %v774
        %v915 = vmax.f32 %v563, %v776
        %v916 = vmax.f32 %v571, %v778
        %v917 = vmax.f32 %v570, %v780
        %v918 = vmax.f32 %v572, %v782
        %v919 = vmax.f32 %v580, %v784
        %v920 = vmax.f32 %v588, %v786
        %v921 = vmax.f32 %v587, %v788
        %v922 = vmax.f32 %v589, %v790
        %v923 = vmax.f32 %v597, %v792
        %v924 = vmax.f32 %v605, %v794
        %v925 = vmax.f32 %v604, %v796
        %v926 = vmax.f32 %v606, %v798
        %v991 = vlaneseq
        %v992 = vshrl.u32 %v991, 7
        %v993 = vsub.s32 0, %v992
        %v994 = vrot.slane %v863, %v993
        %v995 = vlaneseq
        %v996 = vshrl.u32 %v995, 7
        %v997 = vsub.s32 0, %v996
        %v998 = vrot.slane %v864, %v997
        %v999 = vlaneseq
        %v1000 = vshrl.u32 %v999, 7
        %v1001 = vsub.s32 0, %v1000
        %v1002 = vrot.slane %v865, %v1001
        %v1003 = vlaneseq
        %v1004 = vshrl.u32 %v1003, 7
        %v1005 = vsub.s32 0, %v1004
        %v1006 = vrot.slane %v866, %v1005
        %v1007 = vlaneseq
        %v1008 = vshrl.u32 %v1007, 7
        %v1009 = vsub.s32 0, %v1008
        %v1010 = vrot.slane %v867, %v1009
        %v1011 = vlaneseq
        %v1012 = vshrl.u32 %v1011, 7
        %v1013 = vsub.s32 0, %v1012
        %v1014 = vrot.slane %v868, %v1013
        %v1015 = vlaneseq
        %v1016 = vshrl.u32 %v1015, 7
        %v1017 = vsub.s32 0, %v1016
        %v1018 = vrot.slane %v869, %v1017
        %v1019 = vlaneseq
        %v1020 = vshrl.u32 %v1019, 7
        %v1021 = vsub.s32 0, %v1020
        %v1022 = vrot.slane %v870, %v1021
        %v1023 = vlaneseq
        %v1024 = vshrl.u32 %v1023, 7
        %v1025 = vsub.s32 0, %v1024
        %v1026 = vrot.slane %v871, %v1025
        %v1027 = vlaneseq
        %v1028 = vshrl.u32 %v1027, 7
        %v1029 = vsub.s32 0, %v1028
        %v1030 = vrot.slane %v872, %v1029
        %v1031 = vlaneseq
        %v1032 = vshrl.u32 %v1031, 7
        %v1033 = vsub.s32 0, %v1032
        %v1034 = vrot.slane %v873, %v1033
        %v1035 = vlaneseq
        %v1036 = vshrl.u32 %v1035, 7
        %v1037 = vsub.s32 0, %v1036
        %v1038 = vrot.slane %v874, %v1037
        %v1039 = vlaneseq
        %v1040 = vshrl.u32 %v1039, 7
        %v1041 = vsub.s32 0, %v1040
        %v1042 = vrot.slane %v875, %v1041
        %v1043 = vlaneseq
        %v1044 = vshrl.u32 %v1043, 7
        %v1045 = vsub.s32 0, %v1044
        %v1046 = vrot.slane %v876, %v1045
        %v1047 = vlaneseq
        %v1048 = vshrl.u32 %v1047, 7
        %v1049 = vsub.s32 0, %v1048
        %v1050 = vrot.slane %v877, %v1049
        %v1051 = vlaneseq
        %v1052 = vshrl.u32 %v1051, 7
        %v1053 = vsub.s32 0, %v1052
        %v1054 = vrot.slane %v878, %v1053
        %v1055 = vlaneseq
        %v1056 = vshrl.u32 %v1055, 7
        %v1057 = vsub.s32 0, %v1056
        %v1058 = vrot.slane %v879, %v1057
        %v1059 = vlaneseq
        %v1060 = vshrl.u32 %v1059, 7
        %v1061 = vsub.s32 0, %v1060
        %v1062 = vrot.slane %v880, %v1061
        %v1063 = vlaneseq
        %v1064 = vshrl.u32 %v1063, 7
        %v1065 = vsub.s32 0, %v1064
        %v1066 = vrot.slane %v881, %v1065
        %v1067 = vlaneseq
        %v1068 = vshrl.u32 %v1067, 7
        %v1069 = vsub.s32 0, %v1068
        %v1070 = vrot.slane %v882, %v1069
        %v1071 = vlaneseq
        %v1072 = vshrl.u32 %v1071, 7
        %v1073 = vsub.s32 0, %v1072
        %v1074 = vrot.slane %v883, %v1073
        %v1075 = vlaneseq
        %v1076 = vshrl.u32 %v1075, 7
        %v1077 = vsub.s32 0, %v1076
        %v1078 = vrot.slane %v884, %v1077
        %v1079 = vlaneseq
        %v1080 = vshrl.u32 %v1079, 7
        %v1081 = vsub.s32 0, %v1080
        %v1082 = vrot.slane %v885, %v1081
        %v1083 = vlaneseq
        %v1084 = vshrl.u32 %v1083, 7
        %v1085 = vsub.s32 0, %v1084
        %v1086 = vrot.slane %v886, %v1085
        %v1087 = vlaneseq
        %v1088 = vshrl.u32 %v1087, 7
        %v1089 = vsub.s32 0, %v1088
        %v1090 = vrot.slane %v887, %v1089
        %v1091 = vlaneseq
        %v1092 = vshrl.u32 %v1091, 7
        %v1093 = vsub.s32 0, %v1092
        %v1094 = vrot.slane %v888, %v1093
        %v1095 = vlaneseq
        %v1096 = vshrl.u32 %v1095, 7
        %v1097 = vsub.s32 0, %v1096
        %v1098 = vrot.slane %v889, %v1097
        %v1099 = vlaneseq
        %v1100 = vshrl.u32 %v1099, 7
        %v1101 = vsub.s32 0, %v1100
        %v1102 = vrot.slane %v890, %v1101
        %v1103 = vlaneseq
        %v1104 = vshrl.u32 %v1103, 7
        %v1105 = vsub.s32 0, %v1104
        %v1106 = vrot.slane %v891, %v1105
        %v1107 = vlaneseq
        %v1108 = vshrl.u32 %v1107, 7
        %v1109 = vsub.s32 0, %v1108
        %v1110 = vrot.slane %v892, %v1109
        %v1111 = vlaneseq
        %v1112 = vshrl.u32 %v1111, 7
        %v1113 = vsub.s32 0, %v1112
        %v1114 = vrot.slane %v893, %v1113
        %v1115 = vlaneseq
        %v1116 = vshrl.u32 %v1115, 7
        %v1117 = vsub.s32 0, %v1116
        %v1118 = vrot.slane %v894, %v1117
        %v1119 = vlaneseq
        %v1120 = vshrl.u32 %v1119, 7
        %v1121 = vsub.s32 0, %v1120
        %v1122 = vrot.slane %v895, %v1121
        %v1123 = vlaneseq
        %v1124 = vshrl.u32 %v1123, 7
        %v1125 = vsub.s32 0, %v1124
        %v1126 = vrot.slane %v896, %v1125
        %v1127 = vlaneseq
        %v1128 = vshrl.u32 %v1127, 7
        %v1129 = vsub.s32 0, %v1128
        %v1130 = vrot.slane %v897, %v1129
        %v1131 = vlaneseq
        %v1132 = vshrl.u32 %v1131, 7
        %v1133 = vsub.s32 0, %v1132
        %v1134 = vrot.slane %v898, %v1133
        %v1135 = vlaneseq
        %v1136 = vshrl.u32 %v1135, 7
        %v1137 = vsub.s32 0, %v1136
        %v1138 = vrot.slane %v899, %v1137
        %v1139 = vlaneseq
        %v1140 = vshrl.u32 %v1139, 7
        %v1141 = vsub.s32 0, %v1140
        %v1142 = vrot.slane %v900, %v1141
        %v1143 = vlaneseq
        %v1144 = vshrl.u32 %v1143, 7
        %v1145 = vsub.s32 0, %v1144
        %v1146 = vrot.slane %v901, %v1145
        %v1147 = vlaneseq
        %v1148 = vshrl.u32 %v1147, 7
        %v1149 = vsub.s32 0, %v1148
        %v1150 = vrot.slane %v902, %v1149
        %v1151 = vlaneseq
        %v1152 = vshrl.u32 %v1151, 7
        %v1153 = vsub.s32 0, %v1152
        %v1154 = vrot.slane %v903, %v1153
        %v1155 = vlaneseq
        %v1156 = vshrl.u32 %v1155, 7
        %v1157 = vsub.s32 0, %v1156
        %v1158 = vrot.slane %v904, %v1157
        %v1159 = vlaneseq
        %v1160 = vshrl.u32 %v1159, 7
        %v1161 = vsub.s32 0, %v1160
        %v1162 = vrot.slane %v905, %v1161
        %v1163 = vlaneseq
        %v1164 = vshrl.u32 %v1163, 7
        %v1165 = vsub.s32 0, %v1164
        %v1166 = vrot.slane %v906, %v1165
        %v1167 = vlaneseq
        %v1168 = vshrl.u32 %v1167, 7
        %v1169 = vsub.s32 0, %v1168
        %v1170 = vrot.slane %v907, %v1169
        %v1171 = vlaneseq
        %v1172 = vshrl.u32 %v1171, 7
        %v1173 = vsub.s32 0, %v1172
        %v1174 = vrot.slane %v908, %v1173
        %v1175 = vlaneseq
        %v1176 = vshrl.u32 %v1175, 7
        %v1177 = vsub.s32 0, %v1176
        %v1178 = vrot.slane %v909, %v1177
        %v1179 = vlaneseq
        %v1180 = vshrl.u32 %v1179, 7
        %v1181 = vsub.s32 0, %v1180
        %v1182 = vrot.slane %v910, %v1181
        %v1183 = vlaneseq
        %v1184 = vshrl.u32 %v1183, 7
        %v1185 = vsub.s32 0, %v1184
        %v1186 = vrot.slane %v911, %v1185
        %v1187 = vlaneseq
        %v1188 = vshrl.u32 %v1187, 7
        %v1189 = vsub.s32 0, %v1188
        %v1190 = vrot.slane %v912, %v1189
        %v1191 = vlaneseq
        %v1192 = vshrl.u32 %v1191, 7
        %v1193 = vsub.s32 0, %v1192
        %v1194 = vrot.slane %v913, %v1193
        %v1195 = vlaneseq
        %v1196 = vshrl.u32 %v1195, 7
        %v1197 = vsub.s32 0, %v1196
        %v1198 = vrot.slane %v914, %v1197
        %v1199 = vlaneseq
        %v1200 = vshrl.u32 %v1199, 7
        %v1201 = vsub.s32 0, %v1200
        %v1202 = vrot.slane %v915, %v1201
        %v1203 = vlaneseq
        %v1204 = vshrl.u32 %v1203, 7
        %v1205 = vsub.s32 0, %v1204
        %v1206 = vrot.slane %v916, %v1205
        %v1207 = vlaneseq
        %v1208 = vshrl.u32 %v1207, 7
        %v1209 = vsub.s32 0, %v1208
        %v1210 = vrot.slane %v917, %v1209
        %v1211 = vlaneseq
        %v1212 = vshrl.u32 %v1211, 7
        %v1213 = vsub.s32 0, %v1212
        %v1214 = vrot.slane %v918, %v1213
        %v1215 = vlaneseq
        %v1216 = vshrl.u32 %v1215, 7
        %v1217 = vsub.s32 0, %v1216
        %v1218 = vrot.slane %v919, %v1217
        %v1219 = vlaneseq
        %v1220 = vshrl.u32 %v1219, 7
        %v1221 = vsub.s32 0, %v1220
        %v1222 = vrot.slane %v920, %v1221
        %v1223 = vlaneseq
        %v1224 = vshrl.u32 %v1223, 7
        %v1225 = vsub.s32 0, %v1224
        %v1226 = vrot.slane %v921, %v1225
        %v1227 = vlaneseq
        %v1228 = vshrl.u32 %v1227, 7
        %v1229 = vsub.s32 0, %v1228
        %v1230 = vrot.slane %v922, %v1229
        %v1231 = vlaneseq
        %v1232 = vshrl.u32 %v1231, 7
        %v1233 = vsub.s32 0, %v1232
        %v1234 = vrot.slane %v923, %v1233
        %v1235 = vlaneseq
        %v1236 = vshrl.u32 %v1235, 7
        %v1237 = vsub.s32 0, %v1236
        %v1238 = vrot.slane %v924, %v1237
        %v1239 = vlaneseq
        %v1240 = vshrl.u32 %v1239, 7
        %v1241 = vsub.s32 0, %v1240
        %v1242 = vrot.slane %v925, %v1241
        %v1243 = vlaneseq
        %v1244 = vshrl.u32 %v1243, 7
        %v1245 = vsub.s32 0, %v1244
        %v1246 = vrot.slane %v926, %v1245
        %vm1247 = vcmask 1041409
        %v1248 = vsel %vm1247, %v998, %v994
        %vm1249 = vcmask 1042434
        %v1250 = vsel %vm1249, %v1002, %v1248
        %vm1251 = vcmask 1043459
        %v1252 = vsel %vm1251, %v1006, %v1250
        %vm1253 = vcmask 1044484
        %v1254 = vsel %vm1253, %v1010, %v1252
        %vm1255 = vcmask 1045509
        %v1256 = vsel %vm1255, %v1014, %v1254
        %vm1257 = vcmask 1046534
        %v1258 = vsel %vm1257, %v1018, %v1256
        %vm1259 = vcmask 1047559
        %v1260 = vsel %vm1259, %v1022, %v1258
        %v1261 = vsel %vm1247, %v1030, %v1026
        %v1262 = vsel %vm1249, %v1034, %v1261
        %v1263 = vsel %vm1251, %v1038, %v1262
        %v1264 = vsel %vm1253, %v1042, %v1263
        %v1265 = vsel %vm1255, %v1046, %v1264
        %v1266 = vsel %vm1257, %v1050, %v1265
        %v1267 = vsel %vm1259, %v1054, %v1266
        %v1268 = vsel %vm1247, %v1062, %v1058
        %v1269 = vsel %vm1249, %v1066, %v1268
        %v1270 = vsel %vm1251, %v1070, %v1269
        %v1271 = vsel %vm1253, %v1074, %v1270
        %v1272 = vsel %vm1255, %v1078, %v1271
        %v1273 = vsel %vm1257, %v1082, %v1272
        %v1274 = vsel %vm1259, %v1086, %v1273
        %v1275 = vsel %vm1247, %v1094, %v1090
        %v1276 = vsel %vm1249, %v1098, %v1275
        %v1277 = vsel %vm1251, %v1102, %v1276
        %v1278 = vsel %vm1253, %v1106, %v1277
        %v1279 = vsel %vm1255, %v1110, %v1278
        %v1280 = vsel %vm1257, %v1114, %v1279
        %v1281 = vsel %vm1259, %v1118, %v1280
        %v1282 = vsel %vm1247, %v1126, %v1122
        %v1283 = vsel %vm1249, %v1130, %v1282
        %v1284 = vsel %vm1251, %v1134, %v1283
        %v1285 = vsel %vm1253, %v1138, %v1284
        %v1286 = vsel %vm1255, %v1142, %v1285
        %v1287 = vsel %vm1257, %v1146, %v1286
        %v1288 = vsel %vm1259, %v1150, %v1287
        %v1289 = vsel %vm1247, %v1158, %v1154
        %v1290 = vsel %vm1249, %v1162, %v1289
        %v1291 = vsel %vm1251, %v1166, %v1290
        %v1292 = vsel %vm1253, %v1170, %v1291
        %v1293 = vsel %vm1255, %v1174, %v1292
        %v1294 = vsel %vm1257, %v1178, %v1293
        %v1295 = vsel %vm1259, %v1182, %v1294
        %v1296 = vsel %vm1247, %v1190, %v1186
        %v1297 = vsel %vm1249, %v1194, %v1296
        %v1298 = vsel %vm1251, %v1198, %v1297
        %v1299 = vsel %vm1253, %v1202, %v1298
        %v1300 = vsel %vm1255, %v1206, %v1299
        %v1301 = vsel %vm1257, %v1210, %v1300
        %v1302 = vsel %vm1259, %v1214, %v1301
        %v1303 = vsel %vm1247, %v1222, %v1218
        %v1304 = vsel %vm1249, %v1226, %v1303
        %v1305 = vsel %vm1251, %v1230, %v1304
        %v1306 = vsel %vm1253, %v1234, %v1305
        %v1307 = vsel %vm1255, %v1238, %v1306
        %v1308 = vsel %vm1257, %v1242, %v1307
        %v1309 = vsel %vm1259, %v1246, %v1308
        %1318 = vst [vmem:[#allocation3 + $0x1] sm:$0xff] %v1260
        %1319 = vst [vmem:[#allocation3 + $0x11] sm:$0xff] %v1267
        %1320 = vst [vmem:[#allocation3 + $0x21] sm:$0xff] %v1274
        %1321 = vst [vmem:[#allocation3 + $0x31] sm:$0xff] %v1281
        %1322 = vst [vmem:[#allocation3 + $0x41] sm:$0xff] %v1288
        %1323 = vst [vmem:[#allocation3 + $0x51] sm:$0xff] %v1295
        %1324 = vst [vmem:[#allocation3 + $0x61] sm:$0xff] %v1302
        %1325 = vst [vmem:[#allocation3 + $0x71] sm:$0xff] %v1309
        %v1326 = vld [vmem:[#allocation3] sm:$0xff]
        %v1327 = vld [vmem:[#allocation3 + $0x10] sm:$0xff]
        %v1328 = vld [vmem:[#allocation3 + $0x20] sm:$0xff]
        %v1329 = vld [vmem:[#allocation3 + $0x30] sm:$0xff]
        %v1330 = vld [vmem:[#allocation3 + $0x40] sm:$0xff]
        %v1331 = vld [vmem:[#allocation3 + $0x50] sm:$0xff]
        %v1332 = vld [vmem:[#allocation6] sm:$0xff]
        %v1333 = vld [vmem:[#allocation6 + $0x8] sm:$0xff]
        %v1334 = vld [vmem:[#allocation6 + $0x10] sm:$0xff]
        %v1335 = vld [vmem:[#allocation6 + $0x18] sm:$0xff]
        %v1336 = vld [vmem:[#allocation6 + $0x20] sm:$0xff]
        %v1337 = vld [vmem:[#allocation6 + $0x28] sm:$0xff]
        %v1338 = vld [vmem:[#allocation6 + $0x30] sm:$0xff]
        %v1339 = vld [vmem:[#allocation6 + $0x38] sm:$0xff]
        %v1340 = vld [vmem:[#allocation6 + $0x40] sm:$0xff]
        %v1341 = vld [vmem:[#allocation6 + $0x48] sm:$0xff]
        %v1342 = vld [vmem:[#allocation6 + $0x50] sm:$0xff]
        %v1343 = vld [vmem:[#allocation6 + $0x58] sm:$0xff]
        %v1344 = vld [vmem:[#allocation6 + $0x60] sm:$0xff]
        %v1345 = vld [vmem:[#allocation6 + $0x68] sm:$0xff]
        %v1346 = vld [vmem:[#allocation6 + $0x70] sm:$0xff]
        %v1347 = vld [vmem:[#allocation6 + $0x78] sm:$0xff]
        %v1348 = vld [vmem:[#allocation3 + $0x1] sm:$0xff]
        %v1349 = vld [vmem:[#allocation3 + $0x11] sm:$0xff]
        %v1350 = vld [vmem:[#allocation3 + $0x21] sm:$0xff]
        %v1351 = vld [vmem:[#allocation3 + $0x31] sm:$0xff]
        %v1352 = vld [vmem:[#allocation3 + $0x41] sm:$0xff]
        %v1353 = vld [vmem:[#allocation3 + $0x51] sm:$0xff]
        %s1354 = scalar_lea.vmem [#allocation6], 128
        %v1355 = vld [vmem:[%s1354] sm:$0xff]
        %v1356 = vld [vmem:[%s1354 + $0x8] sm:$0xff]
        %v1357 = vld [vmem:[%s1354 + $0x10] sm:$0xff]
        %v1358 = vld [vmem:[%s1354 + $0x18] sm:$0xff]
        %v1359 = vld [vmem:[%s1354 + $0x20] sm:$0xff]
        %v1360 = vld [vmem:[%s1354 + $0x28] sm:$0xff]
        %v1361 = vld [vmem:[%s1354 + $0x30] sm:$0xff]
        %v1362 = vld [vmem:[%s1354 + $0x38] sm:$0xff]
        %v1363 = vld [vmem:[%s1354 + $0x40] sm:$0xff]
        %v1364 = vld [vmem:[%s1354 + $0x48] sm:$0xff]
        %v1365 = vld [vmem:[%s1354 + $0x50] sm:$0xff]
        %v1366 = vld [vmem:[%s1354 + $0x58] sm:$0xff]
        %v1367 = vld [vmem:[%s1354 + $0x60] sm:$0xff]
        %v1368 = vld [vmem:[%s1354 + $0x68] sm:$0xff]
        %v1369 = vld [vmem:[%s1354 + $0x70] sm:$0xff]
        %v1370 = vld [vmem:[%s1354 + $0x78] sm:$0xff]
        %1371 = vmatprep.subr.mxu0 0.0
        %1372 = vmatpush1.msra.mxu0 %v1355
        %1373 = vmatprep.subr.mxu0 0.0
        %1374 = vmatpush1.msra.mxu0 %v1356
        %1375 = vmatprep.subr.mxu0 0.0
        %1376 = vmatpush1.msra.mxu0 %v1357
        %1377 = vmatprep.subr.mxu0 0.0
        %1378 = vmatpush1.msra.mxu0 %v1358
        %1379 = vmatprep.subr.mxu0 0.0
        %1380 = vmatpush1.msra.mxu0 %v1359
        %1381 = vmatprep.subr.mxu0 0.0
        %1382 = vmatpush1.msra.mxu0 %v1360
        %1383 = vmatprep.subr.mxu0 0.0
        %1384 = vmatpush1.msra.mxu0 %v1361
        %1385 = vmatprep.subr.mxu0 0.0
        %1386 = vmatpush1.msra.mxu0 %v1362
        %1387 = vmatprep.subr.mxu0 0.0
        %1388 = vmatpush1.msra.mxu0 %v1363
        %1389 = vmatprep.subr.mxu0 0.0
        %1390 = vmatpush1.msra.mxu0 %v1364
        %1391 = vmatprep.subr.mxu0 0.0
        %1392 = vmatpush1.msra.mxu0 %v1365
        %1393 = vmatprep.subr.mxu0 0.0
        %1394 = vmatpush1.msra.mxu0 %v1366
        %1395 = vmatprep.subr.mxu0 0.0
        %1396 = vmatpush1.msra.mxu0 %v1367
        %1397 = vmatprep.subr.mxu0 0.0
        %1398 = vmatpush1.msra.mxu0 %v1368
        %1399 = vmatprep.subr.mxu0 0.0
        %1400 = vmatpush1.msra.mxu0 %v1369
        %1401 = vmatprep.subr.mxu0 0.0
        %1402 = vmatpush1.msra.mxu0 %v1370
        %1403 = vmatprep.subr.mxu0 0.0
        %1404 = vmatpush1.msra.mxu0 0.0
        %1405 = vmatprep.subr.mxu0 0.0
        %1406 = vmatpush1.msra.mxu0 0.0
        %1407 = vmatprep.subr.mxu0 0.0
        %1408 = vmatpush1.msra.mxu0 0.0
        %1409 = vmatprep.subr.mxu0 0.0
        %1410 = vmatpush1.msra.mxu0 0.0
        %1411 = vmatprep.subr.mxu0 0.0
        %1412 = vmatpush1.msra.mxu0 0.0
        %1413 = vmatprep.subr.mxu0 0.0
        %1414 = vmatpush1.msra.mxu0 0.0
        %1415 = vmatprep.subr.mxu0 0.0
        %1416 = vmatpush1.msra.mxu0 0.0
        %1417 = vmatprep.subr.mxu0 0.0
        %1418 = vmatpush1.msra.mxu0 0.0
        %1419 = vmatprep.subr.mxu0 0.0
        %1420 = vmatpush1.msra.mxu0 0.0
        %1421 = vmatprep.subr.mxu0 0.0
        %1422 = vmatpush1.msra.mxu0 0.0
        %1423 = vmatprep.subr.mxu0 0.0
        %1424 = vmatpush1.msra.mxu0 0.0
        %1425 = vmatprep.subr.mxu0 0.0
        %1426 = vmatpush1.msra.mxu0 0.0
        %1427 = vmatprep.subr.mxu0 0.0
        %1428 = vmatpush1.msra.mxu0 0.0
        %1429 = vmatprep.subr.mxu0 0.0
        %1430 = vmatpush1.msra.mxu0 0.0
        %1431 = vmatprep.subr.mxu0 0.0
        %1432 = vmatpush1.msra.mxu0 0.0
        %1433 = vmatprep.subr.mxu0 0.0
        %1434 = vmatpush1.msra.mxu0 0.0
        %1435 = vmatprep.mubr.f32.mxu0 0.0
        %1436 = vmatmul.mubr.f32.gmra.mrb[0].mxu0 %v1348
        %v1437 = vpop.f32.mrb[0].mxu0
        %v1438 = vadd.f32 0.0, %v1437
        %v1439 = vpop.f32.mrb[0].mxu0
        %1440 = vmatprep.mubr.f32.mxu0 0.0
        %1441 = vmatmul.mubr.f32.gmra.mrb[0].mxu0 %v1349
        %v1442 = vpop.f32.mrb[0].mxu0
        %v1443 = vadd.f32 0.0, %v1442
        %v1444 = vpop.f32.mrb[0].mxu0
        %1445 = vmatprep.mubr.f32.mxu0 0.0
        %1446 = vmatmul.mubr.f32.gmra.mrb[0].mxu0 %v1350
        %v1447 = vpop.f32.mrb[0].mxu0
        %v1448 = vadd.f32 0.0, %v1447
        %v1449 = vpop.f32.mrb[0].mxu0
        %1450 = vmatprep.mubr.f32.mxu0 0.0
        %1451 = vmatmul.mubr.f32.gmra.mrb[0].mxu0 %v1351
        %v1452 = vpop.f32.mrb[0].mxu0
        %v1453 = vadd.f32 0.0, %v1452
        %v1454 = vpop.f32.mrb[0].mxu0
        %1455 = vmatprep.mubr.f32.mxu0 0.0
        %1456 = vmatmul.mubr.f32.gmra.mrb[0].mxu0 %v1352
        %v1457 = vpop.f32.mrb[0].mxu0
        %v1458 = vadd.f32 0.0, %v1457
        %v1459 = vpop.f32.mrb[0].mxu0
        %1460 = vmatprep.mubr.f32.mxu0 0.0
        %1461 = vmatmul.mubr.f32.gmra.mrb[0].mxu0 %v1353
        %v1462 = vpop.f32.mrb[0].mxu0
        %v1463 = vadd.f32 0.0, %v1462
        %v1464 = vpop.f32.mrb[0].mxu0
        %1465 = vdwg.mxu0
        %1466 = vmatprep.subr.mxu0 0.0
        %1467 = vmatpush1.msra.mxu0 %v1332
        %1468 = vmatprep.subr.mxu0 0.0
        %1469 = vmatpush1.msra.mxu0 %v1333
        %1470 = vmatprep.subr.mxu0 0.0
        %1471 = vmatpush1.msra.mxu0 %v1334
        %1472 = vmatprep.subr.mxu0 0.0
        %1473 = vmatpush1.msra.mxu0 %v1335
        %1474 = vmatprep.subr.mxu0 0.0
        %1475 = vmatpush1.msra.mxu0 %v1336
        %1476 = vmatprep.subr.mxu0 0.0
        %1477 = vmatpush1.msra.mxu0 %v1337
        %1478 = vmatprep.subr.mxu0 0.0
        %1479 = vmatpush1.msra.mxu0 %v1338
        %1480 = vmatprep.subr.mxu0 0.0
        %1481 = vmatpush1.msra.mxu0 %v1339
        %1482 = vmatprep.subr.mxu0 0.0
        %1483 = vmatpush1.msra.mxu0 %v1340
        %1484 = vmatprep.subr.mxu0 0.0
        %1485 = vmatpush1.msra.mxu0 %v1341
        %1486 = vmatprep.subr.mxu0 0.0
        %1487 = vmatpush1.msra.mxu0 %v1342
        %1488 = vmatprep.subr.mxu0 0.0
        %1489 = vmatpush1.msra.mxu0 %v1343
        %1490 = vmatprep.subr.mxu0 0.0
        %1491 = vmatpush1.msra.mxu0 %v1344
        %1492 = vmatprep.subr.mxu0 0.0
        %1493 = vmatpush1.msra.mxu0 %v1345
        %1494 = vmatprep.subr.mxu0 0.0
        %1495 = vmatpush1.msra.mxu0 %v1346
        %1496 = vmatprep.subr.mxu0 0.0
        %1497 = vmatpush1.msra.mxu0 %v1347
        %1498 = vmatprep.subr.mxu0 0.0
        %1499 = vmatpush1.msra.mxu0 0.0
        %1500 = vmatprep.subr.mxu0 0.0
        %1501 = vmatpush1.msra.mxu0 0.0
        %1502 = vmatprep.subr.mxu0 0.0
        %1503 = vmatpush1.msra.mxu0 0.0
        %1504 = vmatprep.subr.mxu0 0.0
        %1505 = vmatpush1.msra.mxu0 0.0
        %1506 = vmatprep.subr.mxu0 0.0
        %1507 = vmatpush1.msra.mxu0 0.0
        %1508 = vmatprep.subr.mxu0 0.0
        %1509 = vmatpush1.msra.mxu0 0.0
        %1510 = vmatprep.subr.mxu0 0.0
        %1511 = vmatpush1.msra.mxu0 0.0
        %1512 = vmatprep.subr.mxu0 0.0
        %1513 = vmatpush1.msra.mxu0 0.0
        %1514 = vmatprep.subr.mxu0 0.0
        %1515 = vmatpush1.msra.mxu0 0.0
        %1516 = vmatprep.subr.mxu0 0.0
        %1517 = vmatpush1.msra.mxu0 0.0
        %1518 = vmatprep.subr.mxu0 0.0
        %1519 = vmatpush1.msra.mxu0 0.0
        %1520 = vmatprep.subr.mxu0 0.0
        %1521 = vmatpush1.msra.mxu0 0.0
        %1522 = vmatprep.subr.mxu0 0.0
        %1523 = vmatpush1.msra.mxu0 0.0
        %1524 = vmatprep.subr.mxu0 0.0
        %1525 = vmatpush1.msra.mxu0 0.0
        %1526 = vmatprep.subr.mxu0 0.0
        %1527 = vmatpush1.msra.mxu0 0.0
        %1528 = vmatprep.subr.mxu0 0.0
        %1529 = vmatpush1.msra.mxu0 0.0
        %1530 = vmatprep.mubr.f32.mxu0 0.0
        %1531 = vmatmul.mubr.f32.gmra.mrb[0].mxu0 %v1326
        %v1532 = vpop.f32.mrb[0].mxu0
        %v1533 = vadd.f32 %v1438, %v1532
        %v1534 = vpop.f32.mrb[0].mxu0
        %1535 = vmatprep.mubr.f32.mxu0 0.0
        %1536 = vmatmul.mubr.f32.gmra.mrb[0].mxu0 %v1327
        %v1537 = vpop.f32.mrb[0].mxu0
        %v1538 = vadd.f32 %v1443, %v1537
        %v1539 = vpop.f32.mrb[0].mxu0
        %1540 = vmatprep.mubr.f32.mxu0 0.0
        %1541 = vmatmul.mubr.f32.gmra.mrb[0].mxu0 %v1328
        %v1542 = vpop.f32.mrb[0].mxu0
        %v1543 = vadd.f32 %v1448, %v1542
        %v1544 = vpop.f32.mrb[0].mxu0
        %1545 = vmatprep.mubr.f32.mxu0 0.0
        %1546 = vmatmul.mubr.f32.gmra.mrb[0].mxu0 %v1329
        %v1547 = vpop.f32.mrb[0].mxu0
        %v1548 = vadd.f32 %v1453, %v1547
        %v1549 = vpop.f32.mrb[0].mxu0
        %1550 = vmatprep.mubr.f32.mxu0 0.0
        %1551 = vmatmul.mubr.f32.gmra.mrb[0].mxu0 %v1330
        %v1552 = vpop.f32.mrb[0].mxu0
        %v1553 = vadd.f32 %v1458, %v1552
        %v1554 = vpop.f32.mrb[0].mxu0
        %1555 = vmatprep.mubr.f32.mxu0 0.0
        %1556 = vmatmul.mubr.f32.gmra.mrb[0].mxu0 %v1331
        %v1557 = vpop.f32.mrb[0].mxu0
        %v1558 = vadd.f32 %v1463, %v1557
        %v1559 = vpop.f32.mrb[0].mxu0
        %1560 = vdwg.mxu0
        %v1561 = vld [vmem:[#allocation3 + $0x2] sm:$0xff]
        %v1562 = vld [vmem:[#allocation3 + $0x12] sm:$0xff]
        %v1563 = vld [vmem:[#allocation3 + $0x22] sm:$0xff]
        %v1564 = vld [vmem:[#allocation3 + $0x32] sm:$0xff]
        %v1565 = vld [vmem:[#allocation3 + $0x42] sm:$0xff]
        %v1566 = vld [vmem:[#allocation3 + $0x52] sm:$0xff]
        %s1567 = scalar_lea.vmem [#allocation6], 256
        %v1568 = vld [vmem:[%s1567] sm:$0xff]
        %v1569 = vld [vmem:[%s1567 + $0x8] sm:$0xff]
        %v1570 = vld [vmem:[%s1567 + $0x10] sm:$0xff]
        %v1571 = vld [vmem:[%s1567 + $0x18] sm:$0xff]
        %v1572 = vld [vmem:[%s1567 + $0x20] sm:$0xff]
        %v1573 = vld [vmem:[%s1567 + $0x28] sm:$0xff]
        %v1574 = vld [vmem:[%s1567 + $0x30] sm:$0xff]
        %v1575 = vld [vmem:[%s1567 + $0x38] sm:$0xff]
        %v1576 = vld [vmem:[%s1567 + $0x40] sm:$0xff]
        %v1577 = vld [vmem:[%s1567 + $0x48] sm:$0xff]
        %v1578 = vld [vmem:[%s1567 + $0x50] sm:$0xff]
        %v1579 = vld [vmem:[%s1567 + $0x58] sm:$0xff]
        %v1580 = vld [vmem:[%s1567 + $0x60] sm:$0xff]
        %v1581 = vld [vmem:[%s1567 + $0x68] sm:$0xff]
        %v1582 = vld [vmem:[%s1567 + $0x70] sm:$0xff]
        %v1583 = vld [vmem:[%s1567 + $0x78] sm:$0xff]
        %1584 = vmatprep.subr.mxu0 0.0
        %1585 = vmatpush1.msra.mxu0 %v1568
        %1586 = vmatprep.subr.mxu0 0.0
        %1587 = vmatpush1.msra.mxu0 %v1569
        %1588 = vmatprep.subr.mxu0 0.0
        %1589 = vmatpush1.msra.mxu0 %v1570
        %1590 = vmatprep.subr.mxu0 0.0
        %1591 = vmatpush1.msra.mxu0 %v1571
        %1592 = vmatprep.subr.mxu0 0.0
        %1593 = vmatpush1.msra.mxu0 %v1572
        %1594 = vmatprep.subr.mxu0 0.0
        %1595 = vmatpush1.msra.mxu0 %v1573
        %1596 = vmatprep.subr.mxu0 0.0
        %1597 = vmatpush1.msra.mxu0 %v1574
        %1598 = vmatprep.subr.mxu0 0.0
        %1599 = vmatpush1.msra.mxu0 %v1575
        %1600 = vmatprep.subr.mxu0 0.0
        %1601 = vmatpush1.msra.mxu0 %v1576
        %1602 = vmatprep.subr.mxu0 0.0
        %1603 = vmatpush1.msra.mxu0 %v1577
        %1604 = vmatprep.subr.mxu0 0.0
        %1605 = vmatpush1.msra.mxu0 %v1578
        %1606 = vmatprep.subr.mxu0 0.0
        %1607 = vmatpush1.msra.mxu0 %v1579
        %1608 = vmatprep.subr.mxu0 0.0
        %1609 = vmatpush1.msra.mxu0 %v1580
        %1610 = vmatprep.subr.mxu0 0.0
        %1611 = vmatpush1.msra.mxu0 %v1581
        %1612 = vmatprep.subr.mxu0 0.0
        %1613 = vmatpush1.msra.mxu0 %v1582
        %1614 = vmatprep.subr.mxu0 0.0
        %1615 = vmatpush1.msra.mxu0 %v1583
        %1616 = vmatprep.subr.mxu0 0.0
        %1617 = vmatpush1.msra.mxu0 0.0
        %1618 = vmatprep.subr.mxu0 0.0
        %1619 = vmatpush1.msra.mxu0 0.0
        %1620 = vmatprep.subr.mxu0 0.0
        %1621 = vmatpush1.msra.mxu0 0.0
        %1622 = vmatprep.subr.mxu0 0.0
        %1623 = vmatpush1.msra.mxu0 0.0
        %1624 = vmatprep.subr.mxu0 0.0
        %1625 = vmatpush1.msra.mxu0 0.0
        %1626 = vmatprep.subr.mxu0 0.0
        %1627 = vmatpush1.msra.mxu0 0.0
        %1628 = vmatprep.subr.mxu0 0.0
        %1629 = vmatpush1.msra.mxu0 0.0
        %1630 = vmatprep.subr.mxu0 0.0
        %1631 = vmatpush1.msra.mxu0 0.0
        %1632 = vmatprep.subr.mxu0 0.0
        %1633 = vmatpush1.msra.mxu0 0.0
        %1634 = vmatprep.subr.mxu0 0.0
        %1635 = vmatpush1.msra.mxu0 0.0
        %1636 = vmatprep.subr.mxu0 0.0
        %1637 = vmatpush1.msra.mxu0 0.0
        %1638 = vmatprep.subr.mxu0 0.0
        %1639 = vmatpush1.msra.mxu0 0.0
        %1640 = vmatprep.subr.mxu0 0.0
        %1641 = vmatpush1.msra.mxu0 0.0
        %1642 = vmatprep.subr.mxu0 0.0
        %1643 = vmatpush1.msra.mxu0 0.0
        %1644 = vmatprep.subr.mxu0 0.0
        %1645 = vmatpush1.msra.mxu0 0.0
        %1646 = vmatprep.subr.mxu0 0.0
        %1647 = vmatpush1.msra.mxu0 0.0
        %1648 = vmatprep.mubr.f32.mxu0 0.0
        %1649 = vmatmul.mubr.f32.gmra.mrb[0].mxu0 %v1561
        %v1650 = vpop.f32.mrb[0].mxu0
        %v1651 = vadd.f32 0.0, %v1650
        %v1652 = vpop.f32.mrb[0].mxu0
        %1653 = vmatprep.mubr.f32.mxu0 0.0
        %1654 = vmatmul.mubr.f32.gmra.mrb[0].mxu0 %v1562
        %v1655 = vpop.f32.mrb[0].mxu0
        %v1656 = vadd.f32 0.0, %v1655
        %v1657 = vpop.f32.mrb[0].mxu0
        %1658 = vmatprep.mubr.f32.mxu0 0.0
        %1659 = vmatmul.mubr.f32.gmra.mrb[0].mxu0 %v1563
        %v1660 = vpop.f32.mrb[0].mxu0
        %v1661 = vadd.f32 0.0, %v1660
        %v1662 = vpop.f32.mrb[0].mxu0
        %1663 = vmatprep.mubr.f32.mxu0 0.0
        %1664 = vmatmul.mubr.f32.gmra.mrb[0].mxu0 %v1564
        %v1665 = vpop.f32.mrb[0].mxu0
        %v1666 = vadd.f32 0.0, %v1665
        %v1667 = vpop.f32.mrb[0].mxu0
        %1668 = vmatprep.mubr.f32.mxu0 0.0
        %1669 = vmatmul.mubr.f32.gmra.mrb[0].mxu0 %v1565
        %v1670 = vpop.f32.mrb[0].mxu0
        %v1671 = vadd.f32 0.0, %v1670
        %v1672 = vpop.f32.mrb[0].mxu0
        %1673 = vmatprep.mubr.f32.mxu0 0.0
        %1674 = vmatmul.mubr.f32.gmra.mrb[0].mxu0 %v1566
        %v1675 = vpop.f32.mrb[0].mxu0
        %v1676 = vadd.f32 0.0, %v1675
        %v1677 = vpop.f32.mrb[0].mxu0
        %1678 = vdwg.mxu0
        %v1679 = vadd.f32 %v1533, %v1651
        %v1680 = vadd.f32 %v1538, %v1656
        %v1681 = vadd.f32 %v1543, %v1661
        %v1682 = vadd.f32 %v1548, %v1666
        %v1683 = vadd.f32 %v1553, %v1671
        %v1684 = vadd.f32 %v1558, %v1676
        %s1685 = scalar_lea.vmem [#allocation3], 16
        %v1686 = vld [vmem:[%s1685] sm:$0xff]
        %v1687 = vld [vmem:[%s1685 + $0x10] sm:$0xff]
        %v1688 = vld [vmem:[%s1685 + $0x20] sm:$0xff]
        %v1689 = vld [vmem:[%s1685 + $0x30] sm:$0xff]
        %v1690 = vld [vmem:[%s1685 + $0x40] sm:$0xff]
        %v1691 = vld [vmem:[%s1685 + $0x50] sm:$0xff]
        %s1692 = scalar_lea.vmem [#allocation6], 384
        %v1693 = vld [vmem:[%s1692] sm:$0xff]
        %v1694 = vld [vmem:[%s1692 + $0x8] sm:$0xff]
        %v1695 = vld [vmem:[%s1692 + $0x10] sm:$0xff]
        %v1696 = vld [vmem:[%s1692 + $0x18] sm:$0xff]
        %v1697 = vld [vmem:[%s1692 + $0x20] sm:$0xff]
        %v1698 = vld [vmem:[%s1692 + $0x28] sm:$0xff]
        %v1699 = vld [vmem:[%s1692 + $0x30] sm:$0xff]
        %v1700 = vld [vmem:[%s1692 + $0x38] sm:$0xff]
        %v1701 = vld [vmem:[%s1692 + $0x40] sm:$0xff]
        %v1702 = vld [vmem:[%s1692 + $0x48] sm:$0xff]
        %v1703 = vld [vmem:[%s1692 + $0x50] sm:$0xff]
        %v1704 = vld [vmem:[%s1692 + $0x58] sm:$0xff]
        %v1705 = vld [vmem:[%s1692 + $0x60] sm:$0xff]
        %v1706 = vld [vmem:[%s1692 + $0x68] sm:$0xff]
        %v1707 = vld [vmem:[%s1692 + $0x70] sm:$0xff]
        %v1708 = vld [vmem:[%s1692 + $0x78] sm:$0xff]
        %1709 = vmatprep.subr.mxu0 0.0
        %1710 = vmatpush1.msra.mxu0 %v1693
        %1711 = vmatprep.subr.mxu0 0.0
        %1712 = vmatpush1.msra.mxu0 %v1694
        %1713 = vmatprep.subr.mxu0 0.0
        %1714 = vmatpush1.msra.mxu0 %v1695
        %1715 = vmatprep.subr.mxu0 0.0
        %1716 = vmatpush1.msra.mxu0 %v1696
        %1717 = vmatprep.subr.mxu0 0.0
        %1718 = vmatpush1.msra.mxu0 %v1697
        %1719 = vmatprep.subr.mxu0 0.0
        %1720 = vmatpush1.msra.mxu0 %v1698
        %1721 = vmatprep.subr.mxu0 0.0
        %1722 = vmatpush1.msra.mxu0 %v1699
        %1723 = vmatprep.subr.mxu0 0.0
        %1724 = vmatpush1.msra.mxu0 %v1700
        %1725 = vmatprep.subr.mxu0 0.0
        %1726 = vmatpush1.msra.mxu0 %v1701
        %1727 = vmatprep.subr.mxu0 0.0
        %1728 = vmatpush1.msra.mxu0 %v1702
        %1729 = vmatprep.subr.mxu0 0.0
        %1730 = vmatpush1.msra.mxu0 %v1703
        %1731 = vmatprep.subr.mxu0 0.0
        %1732 = vmatpush1.msra.mxu0 %v1704
        %1733 = vmatprep.subr.mxu0 0.0
        %1734 = vmatpush1.msra.mxu0 %v1705
        %1735 = vmatprep.subr.mxu0 0.0
        %1736 = vmatpush1.msra.mxu0 %v1706
        %1737 = vmatprep.subr.mxu0 0.0
        %1738 = vmatpush1.msra.mxu0 %v1707
        %1739 = vmatprep.subr.mxu0 0.0
        %1740 = vmatpush1.msra.mxu0 %v1708
        %1741 = vmatprep.subr.mxu0 0.0
        %1742 = vmatpush1.msra.mxu0 0.0
        %1743 = vmatprep.subr.mxu0 0.0
        %1744 = vmatpush1.msra.mxu0 0.0
        %1745 = vmatprep.subr.mxu0 0.0
        %1746 = vmatpush1.msra.mxu0 0.0
        %1747 = vmatprep.subr.mxu0 0.0
        %1748 = vmatpush1.msra.mxu0 0.0
        %1749 = vmatprep.subr.mxu0 0.0
        %1750 = vmatpush1.msra.mxu0 0.0
        %1751 = vmatprep.subr.mxu0 0.0
        %1752 = vmatpush1.msra.mxu0 0.0
        %1753 = vmatprep.subr.mxu0 0.0
        %1754 = vmatpush1.msra.mxu0 0.0
        %1755 = vmatprep.subr.mxu0 0.0
        %1756 = vmatpush1.msra.mxu0 0.0
        %1757 = vmatprep.subr.mxu0 0.0
        %1758 = vmatpush1.msra.mxu0 0.0
        %1759 = vmatprep.subr.mxu0 0.0
        %1760 = vmatpush1.msra.mxu0 0.0
        %1761 = vmatprep.subr.mxu0 0.0
        %1762 = vmatpush1.msra.mxu0 0.0
        %1763 = vmatprep.subr.mxu0 0.0
        %1764 = vmatpush1.msra.mxu0 0.0
        %1765 = vmatprep.subr.mxu0 0.0
        %1766 = vmatpush1.msra.mxu0 0.0
        %1767 = vmatprep.subr.mxu0 0.0
        %1768 = vmatpush1.msra.mxu0 0.0
        %1769 = vmatprep.subr.mxu0 0.0
        %1770 = vmatpush1.msra.mxu0 0.0
        %1771 = vmatprep.subr.mxu0 0.0
        %1772 = vmatpush1.msra.mxu0 0.0
        %1773 = vmatprep.mubr.f32.mxu0 0.0
        %1774 = vmatmul.mubr.f32.gmra.mrb[0].mxu0 %v1686
        %v1775 = vpop.f32.mrb[0].mxu0
        %v1776 = vadd.f32 0.0, %v1775
        %v1777 = vpop.f32.mrb[0].mxu0
        %1778 = vmatprep.mubr.f32.mxu0 0.0
        %1779 = vmatmul.mubr.f32.gmra.mrb[0].mxu0 %v1687
        %v1780 = vpop.f32.mrb[0].mxu0
        %v1781 = vadd.f32 0.0, %v1780
        %v1782 = vpop.f32.mrb[0].mxu0
        %1783 = vmatprep.mubr.f32.mxu0 0.0
        %1784 = vmatmul.mubr.f32.gmra.mrb[0].mxu0 %v1688
        %v1785 = vpop.f32.mrb[0].mxu0
        %v1786 = vadd.f32 0.0, %v1785
        %v1787 = vpop.f32.mrb[0].mxu0
        %1788 = vmatprep.mubr.f32.mxu0 0.0
        %1789 = vmatmul.mubr.f32.gmra.mrb[0].mxu0 %v1689
        %v1790 = vpop.f32.mrb[0].mxu0
        %v1791 = vadd.f32 0.0, %v1790
        %v1792 = vpop.f32.mrb[0].mxu0
        %1793 = vmatprep.mubr.f32.mxu0 0.0
        %1794 = vmatmul.mubr.f32.gmra.mrb[0].mxu0 %v1690
        %v1795 = vpop.f32.mrb[0].mxu0
        %v1796 = vadd.f32 0.0, %v1795
        %v1797 = vpop.f32.mrb[0].mxu0
        %1798 = vmatprep.mubr.f32.mxu0 0.0
        %1799 = vmatmul.mubr.f32.gmra.mrb[0].mxu0 %v1691
        %v1800 = vpop.f32.mrb[0].mxu0
        %v1801 = vadd.f32 0.0, %v1800
        %v1802 = vpop.f32.mrb[0].mxu0
        %1803 = vdwg.mxu0
        %v1804 = vadd.f32 %v1679, %v1776
        %v1805 = vadd.f32 %v1680, %v1781
        %v1806 = vadd.f32 %v1681, %v1786
        %v1807 = vadd.f32 %v1682, %v1791
        %v1808 = vadd.f32 %v1683, %v1796
        %v1809 = vadd.f32 %v1684, %v1801
        %v1810 = vld [vmem:[%s1685 + $0x1] sm:$0xff]
        %v1811 = vld [vmem:[%s1685 + $0x11] sm:$0xff]
        %v1812 = vld [vmem:[%s1685 + $0x21] sm:$0xff]
        %v1813 = vld [vmem:[%s1685 + $0x31] sm:$0xff]
        %v1814 = vld [vmem:[%s1685 + $0x41] sm:$0xff]
        %v1815 = vld [vmem:[%s1685 + $0x51] sm:$0xff]
        %s1816 = scalar_lea.vmem [#allocation6], 512
        %v1817 = vld [vmem:[%s1816] sm:$0xff]
        %v1818 = vld [vmem:[%s1816 + $0x8] sm:$0xff]
        %v1819 = vld [vmem:[%s1816 + $0x10] sm:$0xff]
        %v1820 = vld [vmem:[%s1816 + $0x18] sm:$0xff]
        %v1821 = vld [vmem:[%s1816 + $0x20] sm:$0xff]
        %v1822 = vld [vmem:[%s1816 + $0x28] sm:$0xff]
        %v1823 = vld [vmem:[%s1816 + $0x30] sm:$0xff]
        %v1824 = vld [vmem:[%s1816 + $0x38] sm:$0xff]
        %v1825 = vld [vmem:[%s1816 + $0x40] sm:$0xff]
        %v1826 = vld [vmem:[%s1816 + $0x48] sm:$0xff]
        %v1827 = vld [vmem:[%s1816 + $0x50] sm:$0xff]
        %v1828 = vld [vmem:[%s1816 + $0x58] sm:$0xff]
        %v1829 = vld [vmem:[%s1816 + $0x60] sm:$0xff]
        %v1830 = vld [vmem:[%s1816 + $0x68] sm:$0xff]
        %v1831 = vld [vmem:[%s1816 + $0x70] sm:$0xff]
        %v1832 = vld [vmem:[%s1816 + $0x78] sm:$0xff]
        %1833 = vmatprep.subr.mxu0 0.0
        %1834 = vmatpush1.msra.mxu0 %v1817
        %1835 = vmatprep.subr.mxu0 0.0
        %1836 = vmatpush1.msra.mxu0 %v1818
        %1837 = vmatprep.subr.mxu0 0.0
        %1838 = vmatpush1.msra.mxu0 %v1819
        %1839 = vmatprep.subr.mxu0 0.0
        %1840 = vmatpush1.msra.mxu0 %v1820
        %1841 = vmatprep.subr.mxu0 0.0
        %1842 = vmatpush1.msra.mxu0 %v1821
        %1843 = vmatprep.subr.mxu0 0.0
        %1844 = vmatpush1.msra.mxu0 %v1822
        %1845 = vmatprep.subr.mxu0 0.0
        %1846 = vmatpush1.msra.mxu0 %v1823
        %1847 = vmatprep.subr.mxu0 0.0
        %1848 = vmatpush1.msra.mxu0 %v1824
        %1849 = vmatprep.subr.mxu0 0.0
        %1850 = vmatpush1.msra.mxu0 %v1825
        %1851 = vmatprep.subr.mxu0 0.0
        %1852 = vmatpush1.msra.mxu0 %v1826
        %1853 = vmatprep.subr.mxu0 0.0
        %1854 = vmatpush1.msra.mxu0 %v1827
        %1855 = vmatprep.subr.mxu0 0.0
        %1856 = vmatpush1.msra.mxu0 %v1828
        %1857 = vmatprep.subr.mxu0 0.0
        %1858 = vmatpush1.msra.mxu0 %v1829
        %1859 = vmatprep.subr.mxu0 0.0
        %1860 = vmatpush1.msra.mxu0 %v1830
        %1861 = vmatprep.subr.mxu0 0.0
        %1862 = vmatpush1.msra.mxu0 %v1831
        %1863 = vmatprep.subr.mxu0 0.0
        %1864 = vmatpush1.msra.mxu0 %v1832
        %1865 = vmatprep.subr.mxu0 0.0
        %1866 = vmatpush1.msra.mxu0 0.0
        %1867 = vmatprep.subr.mxu0 0.0
        %1868 = vmatpush1.msra.mxu0 0.0
        %1869 = vmatprep.subr.mxu0 0.0
        %1870 = vmatpush1.msra.mxu0 0.0
        %1871 = vmatprep.subr.mxu0 0.0
        %1872 = vmatpush1.msra.mxu0 0.0
        %1873 = vmatprep.subr.mxu0 0.0
        %1874 = vmatpush1.msra.mxu0 0.0
        %1875 = vmatprep.subr.mxu0 0.0
        %1876 = vmatpush1.msra.mxu0 0.0
        %1877 = vmatprep.subr.mxu0 0.0
        %1878 = vmatpush1.msra.mxu0 0.0
        %1879 = vmatprep.subr.mxu0 0.0
        %1880 = vmatpush1.msra.mxu0 0.0
        %1881 = vmatprep.subr.mxu0 0.0
        %1882 = vmatpush1.msra.mxu0 0.0
        %1883 = vmatprep.subr.mxu0 0.0
        %1884 = vmatpush1.msra.mxu0 0.0
        %1885 = vmatprep.subr.mxu0 0.0
        %1886 = vmatpush1.msra.mxu0 0.0
        %1887 = vmatprep.subr.mxu0 0.0
        %1888 = vmatpush1.msra.mxu0 0.0
        %1889 = vmatprep.subr.mxu0 0.0
        %1890 = vmatpush1.msra.mxu0 0.0
        %1891 = vmatprep.subr.mxu0 0.0
        %1892 = vmatpush1.msra.mxu0 0.0
        %1893 = vmatprep.subr.mxu0 0.0
        %1894 = vmatpush1.msra.mxu0 0.0
        %1895 = vmatprep.subr.mxu0 0.0
        %1896 = vmatpush1.msra.mxu0 0.0
        %1897 = vmatprep.mubr.f32.mxu0 0.0
        %1898 = vmatmul.mubr.f32.gmra.mrb[0].mxu0 %v1810
        %v1899 = vpop.f32.mrb[0].mxu0
        %v1900 = vadd.f32 0.0, %v1899
        %v1901 = vpop.f32.mrb[0].mxu0
        %1902 = vmatprep.mubr.f32.mxu0 0.0
        %1903 = vmatmul.mubr.f32.gmra.mrb[0].mxu0 %v1811
        %v1904 = vpop.f32.mrb[0].mxu0
        %v1905 = vadd.f32 0.0, %v1904
        %v1906 = vpop.f32.mrb[0].mxu0
        %1907 = vmatprep.mubr.f32.mxu0 0.0
        %1908 = vmatmul.mubr.f32.gmra.mrb[0].mxu0 %v1812
        %v1909 = vpop.f32.mrb[0].mxu0
        %v1910 = vadd.f32 0.0, %v1909
        %v1911 = vpop.f32.mrb[0].mxu0
        %1912 = vmatprep.mubr.f32.mxu0 0.0
        %1913 = vmatmul.mubr.f32.gmra.mrb[0].mxu0 %v1813
        %v1914 = vpop.f32.mrb[0].mxu0
        %v1915 = vadd.f32 0.0, %v1914
        %v1916 = vpop.f32.mrb[0].mxu0
        %1917 = vmatprep.mubr.f32.mxu0 0.0
        %1918 = vmatmul.mubr.f32.gmra.mrb[0].mxu0 %v1814
        %v1919 = vpop.f32.mrb[0].mxu0
        %v1920 = vadd.f32 0.0, %v1919
        %v1921 = vpop.f32.mrb[0].mxu0
        %1922 = vmatprep.mubr.f32.mxu0 0.0
        %1923 = vmatmul.mubr.f32.gmra.mrb[0].mxu0 %v1815
        %v1924 = vpop.f32.mrb[0].mxu0
        %v1925 = vadd.f32 0.0, %v1924
        %v1926 = vpop.f32.mrb[0].mxu0
        %1927 = vdwg.mxu0
        %v1928 = vadd.f32 %v1804, %v1900
        %v1929 = vadd.f32 %v1805, %v1905
        %v1930 = vadd.f32 %v1806, %v1910
        %v1931 = vadd.f32 %v1807, %v1915
        %v1932 = vadd.f32 %v1808, %v1920
        %v1933 = vadd.f32 %v1809, %v1925
        %v1934 = vld [vmem:[%s1685 + $0x2] sm:$0xff]
        %v1935 = vld [vmem:[%s1685 + $0x12] sm:$0xff]
        %v1936 = vld [vmem:[%s1685 + $0x22] sm:$0xff]
        %v1937 = vld [vmem:[%s1685 + $0x32] sm:$0xff]
        %v1938 = vld [vmem:[%s1685 + $0x42] sm:$0xff]
        %v1939 = vld [vmem:[%s1685 + $0x52] sm:$0xff]
        %s1940 = scalar_lea.vmem [#allocation6], 640
        %v1941 = vld [vmem:[%s1940] sm:$0xff]
        %v1942 = vld [vmem:[%s1940 + $0x8] sm:$0xff]
        %v1943 = vld [vmem:[%s1940 + $0x10] sm:$0xff]
        %v1944 = vld [vmem:[%s1940 + $0x18] sm:$0xff]
        %v1945 = vld [vmem:[%s1940 + $0x20] sm:$0xff]
        %v1946 = vld [vmem:[%s1940 + $0x28] sm:$0xff]
        %v1947 = vld [vmem:[%s1940 + $0x30] sm:$0xff]
        %v1948 = vld [vmem:[%s1940 + $0x38] sm:$0xff]
        %v1949 = vld [vmem:[%s1940 + $0x40] sm:$0xff]
        %v1950 = vld [vmem:[%s1940 + $0x48] sm:$0xff]
        %v1951 = vld [vmem:[%s1940 + $0x50] sm:$0xff]
        %v1952 = vld [vmem:[%s1940 + $0x58] sm:$0xff]
        %v1953 = vld [vmem:[%s1940 + $0x60] sm:$0xff]
        %v1954 = vld [vmem:[%s1940 + $0x68] sm:$0xff]
        %v1955 = vld [vmem:[%s1940 + $0x70] sm:$0xff]
        %v1956 = vld [vmem:[%s1940 + $0x78] sm:$0xff]
        %1957 = vmatprep.subr.mxu0 0.0
        %1958 = vmatpush1.msra.mxu0 %v1941
        %1959 = vmatprep.subr.mxu0 0.0
        %1960 = vmatpush1.msra.mxu0 %v1942
        %1961 = vmatprep.subr.mxu0 0.0
        %1962 = vmatpush1.msra.mxu0 %v1943
        %1963 = vmatprep.subr.mxu0 0.0
        %1964 = vmatpush1.msra.mxu0 %v1944
        %1965 = vmatprep.subr.mxu0 0.0
        %1966 = vmatpush1.msra.mxu0 %v1945
        %1967 = vmatprep.subr.mxu0 0.0
        %1968 = vmatpush1.msra.mxu0 %v1946
        %1969 = vmatprep.subr.mxu0 0.0
        %1970 = vmatpush1.msra.mxu0 %v1947
        %1971 = vmatprep.subr.mxu0 0.0
        %1972 = vmatpush1.msra.mxu0 %v1948
        %1973 = vmatprep.subr.mxu0 0.0
        %1974 = vmatpush1.msra.mxu0 %v1949
        %1975 = vmatprep.subr.mxu0 0.0
        %1976 = vmatpush1.msra.mxu0 %v1950
        %1977 = vmatprep.subr.mxu0 0.0
        %1978 = vmatpush1.msra.mxu0 %v1951
        %1979 = vmatprep.subr.mxu0 0.0
        %1980 = vmatpush1.msra.mxu0 %v1952
        %1981 = vmatprep.subr.mxu0 0.0
        %1982 = vmatpush1.msra.mxu0 %v1953
        %1983 = vmatprep.subr.mxu0 0.0
        %1984 = vmatpush1.msra.mxu0 %v1954
        %1985 = vmatprep.subr.mxu0 0.0
        %1986 = vmatpush1.msra.mxu0 %v1955
        %1987 = vmatprep.subr.mxu0 0.0
        %1988 = vmatpush1.msra.mxu0 %v1956
        %1989 = vmatprep.subr.mxu0 0.0
        %1990 = vmatpush1.msra.mxu0 0.0
        %1991 = vmatprep.subr.mxu0 0.0
        %1992 = vmatpush1.msra.mxu0 0.0
        %1993 = vmatprep.subr.mxu0 0.0
        %1994 = vmatpush1.msra.mxu0 0.0
        %1995 = vmatprep.subr.mxu0 0.0
        %1996 = vmatpush1.msra.mxu0 0.0
        %1997 = vmatprep.subr.mxu0 0.0
        %1998 = vmatpush1.msra.mxu0 0.0
        %1999 = vmatprep.subr.mxu0 0.0
        %2000 = vmatpush1.msra.mxu0 0.0
        %2001 = vmatprep.subr.mxu0 0.0
        %2002 = vmatpush1.msra.mxu0 0.0
        %2003 = vmatprep.subr.mxu0 0.0
        %2004 = vmatpush1.msra.mxu0 0.0
        %2005 = vmatprep.subr.mxu0 0.0
        %2006 = vmatpush1.msra.mxu0 0.0
        %2007 = vmatprep.subr.mxu0 0.0
        %2008 = vmatpush1.msra.mxu0 0.0
        %2009 = vmatprep.subr.mxu0 0.0
        %2010 = vmatpush1.msra.mxu0 0.0
        %2011 = vmatprep.subr.mxu0 0.0
        %2012 = vmatpush1.msra.mxu0 0.0
        %2013 = vmatprep.subr.mxu0 0.0
        %2014 = vmatpush1.msra.mxu0 0.0
        %2015 = vmatprep.subr.mxu0 0.0
        %2016 = vmatpush1.msra.mxu0 0.0
        %2017 = vmatprep.subr.mxu0 0.0
        %2018 = vmatpush1.msra.mxu0 0.0
        %2019 = vmatprep.subr.mxu0 0.0
        %2020 = vmatpush1.msra.mxu0 0.0
        %2021 = vmatprep.mubr.f32.mxu0 0.0
        %2022 = vmatmul.mubr.f32.gmra.mrb[0].mxu0 %v1934
        %v2023 = vpop.f32.mrb[0].mxu0
        %v2024 = vadd.f32 0.0, %v2023
        %v2025 = vpop.f32.mrb[0].mxu0
        %2026 = vmatprep.mubr.f32.mxu0 0.0
        %2027 = vmatmul.mubr.f32.gmra.mrb[0].mxu0 %v1935
        %v2028 = vpop.f32.mrb[0].mxu0
        %v2029 = vadd.f32 0.0, %v2028
        %v2030 = vpop.f32.mrb[0].mxu0
        %2031 = vmatprep.mubr.f32.mxu0 0.0
        %2032 = vmatmul.mubr.f32.gmra.mrb[0].mxu0 %v1936
        %v2033 = vpop.f32.mrb[0].mxu0
        %v2034 = vadd.f32 0.0, %v2033
        %v2035 = vpop.f32.mrb[0].mxu0
        %2036 = vmatprep.mubr.f32.mxu0 0.0
        %2037 = vmatmul.mubr.f32.gmra.mrb[0].mxu0 %v1937
        %v2038 = vpop.f32.mrb[0].mxu0
        %v2039 = vadd.f32 0.0, %v2038
        %v2040 = vpop.f32.mrb[0].mxu0
        %2041 = vmatprep.mubr.f32.mxu0 0.0
        %2042 = vmatmul.mubr.f32.gmra.mrb[0].mxu0 %v1938
        %v2043 = vpop.f32.mrb[0].mxu0
        %v2044 = vadd.f32 0.0, %v2043
        %v2045 = vpop.f32.mrb[0].mxu0
        %2046 = vmatprep.mubr.f32.mxu0 0.0
        %2047 = vmatmul.mubr.f32.gmra.mrb[0].mxu0 %v1939
        %v2048 = vpop.f32.mrb[0].mxu0
        %v2049 = vadd.f32 0.0, %v2048
        %v2050 = vpop.f32.mrb[0].mxu0
        %2051 = vdwg.mxu0
        %v2052 = vadd.f32 %v1928, %v2024
        %v2053 = vadd.f32 %v1929, %v2029
        %v2054 = vadd.f32 %v1930, %v2034
        %v2055 = vadd.f32 %v1931, %v2039
        %v2056 = vadd.f32 %v1932, %v2044
        %v2057 = vadd.f32 %v1933, %v2049
        %s2058 = scalar_lea.vmem [#allocation3], 32
        %v2059 = vld [vmem:[%s2058] sm:$0xff]
        %v2060 = vld [vmem:[%s2058 + $0x10] sm:$0xff]
        %v2061 = vld [vmem:[%s2058 + $0x20] sm:$0xff]
        %v2062 = vld [vmem:[%s2058 + $0x30] sm:$0xff]
        %v2063 = vld [vmem:[%s2058 + $0x40] sm:$0xff]
        %v2064 = vld [vmem:[%s2058 + $0x50] sm:$0xff]
        %s2065 = scalar_lea.vmem [#allocation6], 768
        %v2066 = vld [vmem:[%s2065] sm:$0xff]
        %v2067 = vld [vmem:[%s2065 + $0x8] sm:$0xff]
        %v2068 = vld [vmem:[%s2065 + $0x10] sm:$0xff]
        %v2069 = vld [vmem:[%s2065 + $0x18] sm:$0xff]
        %v2070 = vld [vmem:[%s2065 + $0x20] sm:$0xff]
        %v2071 = vld [vmem:[%s2065 + $0x28] sm:$0xff]
        %v2072 = vld [vmem:[%s2065 + $0x30] sm:$0xff]
        %v2073 = vld [vmem:[%s2065 + $0x38] sm:$0xff]
        %v2074 = vld [vmem:[%s2065 + $0x40] sm:$0xff]
        %v2075 = vld [vmem:[%s2065 + $0x48] sm:$0xff]
        %v2076 = vld [vmem:[%s2065 + $0x50] sm:$0xff]
        %v2077 = vld [vmem:[%s2065 + $0x58] sm:$0xff]
        %v2078 = vld [vmem:[%s2065 + $0x60] sm:$0xff]
        %v2079 = vld [vmem:[%s2065 + $0x68] sm:$0xff]
        %v2080 = vld [vmem:[%s2065 + $0x70] sm:$0xff]
        %v2081 = vld [vmem:[%s2065 + $0x78] sm:$0xff]
        %2082 = vmatprep.subr.mxu0 0.0
        %2083 = vmatpush1.msra.mxu0 %v2066
        %2084 = vmatprep.subr.mxu0 0.0
        %2085 = vmatpush1.msra.mxu0 %v2067
        %2086 = vmatprep.subr.mxu0 0.0
        %2087 = vmatpush1.msra.mxu0 %v2068
        %2088 = vmatprep.subr.mxu0 0.0
        %2089 = vmatpush1.msra.mxu0 %v2069
        %2090 = vmatprep.subr.mxu0 0.0
        %2091 = vmatpush1.msra.mxu0 %v2070
        %2092 = vmatprep.subr.mxu0 0.0
        %2093 = vmatpush1.msra.mxu0 %v2071
        %2094 = vmatprep.subr.mxu0 0.0
        %2095 = vmatpush1.msra.mxu0 %v2072
        %2096 = vmatprep.subr.mxu0 0.0
        %2097 = vmatpush1.msra.mxu0 %v2073
        %2098 = vmatprep.subr.mxu0 0.0
        %2099 = vmatpush1.msra.mxu0 %v2074
        %2100 = vmatprep.subr.mxu0 0.0
        %2101 = vmatpush1.msra.mxu0 %v2075
        %2102 = vmatprep.subr.mxu0 0.0
        %2103 = vmatpush1.msra.mxu0 %v2076
        %2104 = vmatprep.subr.mxu0 0.0
        %2105 = vmatpush1.msra.mxu0 %v2077
        %2106 = vmatprep.subr.mxu0 0.0
        %2107 = vmatpush1.msra.mxu0 %v2078
        %2108 = vmatprep.subr.mxu0 0.0
        %2109 = vmatpush1.msra.mxu0 %v2079
        %2110 = vmatprep.subr.mxu0 0.0
        %2111 = vmatpush1.msra.mxu0 %v2080
        %2112 = vmatprep.subr.mxu0 0.0
        %2113 = vmatpush1.msra.mxu0 %v2081
        %2114 = vmatprep.subr.mxu0 0.0
        %2115 = vmatpush1.msra.mxu0 0.0
        %2116 = vmatprep.subr.mxu0 0.0
        %2117 = vmatpush1.msra.mxu0 0.0
        %2118 = vmatprep.subr.mxu0 0.0
        %2119 = vmatpush1.msra.mxu0 0.0
        %2120 = vmatprep.subr.mxu0 0.0
        %2121 = vmatpush1.msra.mxu0 0.0
        %2122 = vmatprep.subr.mxu0 0.0
        %2123 = vmatpush1.msra.mxu0 0.0
        %2124 = vmatprep.subr.mxu0 0.0
        %2125 = vmatpush1.msra.mxu0 0.0
        %2126 = vmatprep.subr.mxu0 0.0
        %2127 = vmatpush1.msra.mxu0 0.0
        %2128 = vmatprep.subr.mxu0 0.0
        %2129 = vmatpush1.msra.mxu0 0.0
        %2130 = vmatprep.subr.mxu0 0.0
        %2131 = vmatpush1.msra.mxu0 0.0
        %2132 = vmatprep.subr.mxu0 0.0
        %2133 = vmatpush1.msra.mxu0 0.0
        %2134 = vmatprep.subr.mxu0 0.0
        %2135 = vmatpush1.msra.mxu0 0.0
        %2136 = vmatprep.subr.mxu0 0.0
        %2137 = vmatpush1.msra.mxu0 0.0
        %2138 = vmatprep.subr.mxu0 0.0
        %2139 = vmatpush1.msra.mxu0 0.0
        %2140 = vmatprep.subr.mxu0 0.0
        %2141 = vmatpush1.msra.mxu0 0.0
        %2142 = vmatprep.subr.mxu0 0.0
        %2143 = vmatpush1.msra.mxu0 0.0
        %2144 = vmatprep.subr.mxu0 0.0
        %2145 = vmatpush1.msra.mxu0 0.0
        %2146 = vmatprep.mubr.f32.mxu0 0.0
        %2147 = vmatmul.mubr.f32.gmra.mrb[0].mxu0 %v2059
        %v2148 = vpop.f32.mrb[0].mxu0
        %v2149 = vadd.f32 0.0, %v2148
        %v2150 = vpop.f32.mrb[0].mxu0
        %2151 = vmatprep.mubr.f32.mxu0 0.0
        %2152 = vmatmul.mubr.f32.gmra.mrb[0].mxu0 %v2060
        %v2153 = vpop.f32.mrb[0].mxu0
        %v2154 = vadd.f32 0.0, %v2153
        %v2155 = vpop.f32.mrb[0].mxu0
        %2156 = vmatprep.mubr.f32.mxu0 0.0
        %2157 = vmatmul.mubr.f32.gmra.mrb[0].mxu0 %v2061
        %v2158 = vpop.f32.mrb[0].mxu0
        %v2159 = vadd.f32 0.0, %v2158
        %v2160 = vpop.f32.mrb[0].mxu0
        %2161 = vmatprep.mubr.f32.mxu0 0.0
        %2162 = vmatmul.mubr.f32.gmra.mrb[0].mxu0 %v2062
        %v2163 = vpop.f32.mrb[0].mxu0
        %v2164 = vadd.f32 0.0, %v2163
        %v2165 = vpop.f32.mrb[0].mxu0
        %2166 = vmatprep.mubr.f32.mxu0 0.0
        %2167 = vmatmul.mubr.f32.gmra.mrb[0].mxu0 %v2063
        %v2168 = vpop.f32.mrb[0].mxu0
        %v2169 = vadd.f32 0.0, %v2168
        %v2170 = vpop.f32.mrb[0].mxu0
        %2171 = vmatprep.mubr.f32.mxu0 0.0
        %2172 = vmatmul.mubr.f32.gmra.mrb[0].mxu0 %v2064
        %v2173 = vpop.f32.mrb[0].mxu0
        %v2174 = vadd.f32 0.0, %v2173
        %v2175 = vpop.f32.mrb[0].mxu0
        %2176 = vdwg.mxu0
        %v2177 = vadd.f32 %v2052, %v2149
        %v2178 = vadd.f32 %v2053, %v2154
        %v2179 = vadd.f32 %v2054, %v2159
        %v2180 = vadd.f32 %v2055, %v2164
        %v2181 = vadd.f32 %v2056, %v2169
        %v2182 = vadd.f32 %v2057, %v2174
        %v2183 = vld [vmem:[%s2058 + $0x1] sm:$0xff]
        %v2184 = vld [vmem:[%s2058 + $0x11] sm:$0xff]
        %v2185 = vld [vmem:[%s2058 + $0x21] sm:$0xff]
        %v2186 = vld [vmem:[%s2058 + $0x31] sm:$0xff]
        %v2187 = vld [vmem:[%s2058 + $0x41] sm:$0xff]
        %v2188 = vld [vmem:[%s2058 + $0x51] sm:$0xff]
        %s2189 = scalar_lea.vmem [#allocation6], 896
        %v2190 = vld [vmem:[%s2189] sm:$0xff]
        %v2191 = vld [vmem:[%s2189 + $0x8] sm:$0xff]
        %v2192 = vld [vmem:[%s2189 + $0x10] sm:$0xff]
        %v2193 = vld [vmem:[%s2189 + $0x18] sm:$0xff]
        %v2194 = vld [vmem:[%s2189 + $0x20] sm:$0xff]
        %v2195 = vld [vmem:[%s2189 + $0x28] sm:$0xff]
        %v2196 = vld [vmem:[%s2189 + $0x30] sm:$0xff]
        %v2197 = vld [vmem:[%s2189 + $0x38] sm:$0xff]
        %v2198 = vld [vmem:[%s2189 + $0x40] sm:$0xff]
        %v2199 = vld [vmem:[%s2189 + $0x48] sm:$0xff]
        %v2200 = vld [vmem:[%s2189 + $0x50] sm:$0xff]
        %v2201 = vld [vmem:[%s2189 + $0x58] sm:$0xff]
        %v2202 = vld [vmem:[%s2189 + $0x60] sm:$0xff]
        %v2203 = vld [vmem:[%s2189 + $0x68] sm:$0xff]
        %v2204 = vld [vmem:[%s2189 + $0x70] sm:$0xff]
        %v2205 = vld [vmem:[%s2189 + $0x78] sm:$0xff]
        %2206 = vmatprep.subr.mxu0 0.0
        %2207 = vmatpush1.msra.mxu0 %v2190
        %2208 = vmatprep.subr.mxu0 0.0
        %2209 = vmatpush1.msra.mxu0 %v2191
        %2210 = vmatprep.subr.mxu0 0.0
        %2211 = vmatpush1.msra.mxu0 %v2192
        %2212 = vmatprep.subr.mxu0 0.0
        %2213 = vmatpush1.msra.mxu0 %v2193
        %2214 = vmatprep.subr.mxu0 0.0
        %2215 = vmatpush1.msra.mxu0 %v2194
        %2216 = vmatprep.subr.mxu0 0.0
        %2217 = vmatpush1.msra.mxu0 %v2195
        %2218 = vmatprep.subr.mxu0 0.0
        %2219 = vmatpush1.msra.mxu0 %v2196
        %2220 = vmatprep.subr.mxu0 0.0
        %2221 = vmatpush1.msra.mxu0 %v2197
        %2222 = vmatprep.subr.mxu0 0.0
        %2223 = vmatpush1.msra.mxu0 %v2198
        %2224 = vmatprep.subr.mxu0 0.0
        %2225 = vmatpush1.msra.mxu0 %v2199
        %2226 = vmatprep.subr.mxu0 0.0
        %2227 = vmatpush1.msra.mxu0 %v2200
        %2228 = vmatprep.subr.mxu0 0.0
        %2229 = vmatpush1.msra.mxu0 %v2201
        %2230 = vmatprep.subr.mxu0 0.0
        %2231 = vmatpush1.msra.mxu0 %v2202
        %2232 = vmatprep.subr.mxu0 0.0
        %2233 = vmatpush1.msra.mxu0 %v2203
        %2234 = vmatprep.subr.mxu0 0.0
        %2235 = vmatpush1.msra.mxu0 %v2204
        %2236 = vmatprep.subr.mxu0 0.0
        %2237 = vmatpush1.msra.mxu0 %v2205
        %2238 = vmatprep.subr.mxu0 0.0
        %2239 = vmatpush1.msra.mxu0 0.0
        %2240 = vmatprep.subr.mxu0 0.0
        %2241 = vmatpush1.msra.mxu0 0.0
        %2242 = vmatprep.subr.mxu0 0.0
        %2243 = vmatpush1.msra.mxu0 0.0
        %2244 = vmatprep.subr.mxu0 0.0
        %2245 = vmatpush1.msra.mxu0 0.0
        %2246 = vmatprep.subr.mxu0 0.0
        %2247 = vmatpush1.msra.mxu0 0.0
        %2248 = vmatprep.subr.mxu0 0.0
        %2249 = vmatpush1.msra.mxu0 0.0
        %2250 = vmatprep.subr.mxu0 0.0
        %2251 = vmatpush1.msra.mxu0 0.0
        %2252 = vmatprep.subr.mxu0 0.0
        %2253 = vmatpush1.msra.mxu0 0.0
        %2254 = vmatprep.subr.mxu0 0.0
        %2255 = vmatpush1.msra.mxu0 0.0
        %2256 = vmatprep.subr.mxu0 0.0
        %2257 = vmatpush1.msra.mxu0 0.0
        %2258 = vmatprep.subr.mxu0 0.0
        %2259 = vmatpush1.msra.mxu0 0.0
        %2260 = vmatprep.subr.mxu0 0.0
        %2261 = vmatpush1.msra.mxu0 0.0
        %2262 = vmatprep.subr.mxu0 0.0
        %2263 = vmatpush1.msra.mxu0 0.0
        %2264 = vmatprep.subr.mxu0 0.0
        %2265 = vmatpush1.msra.mxu0 0.0
        %2266 = vmatprep.subr.mxu0 0.0
        %2267 = vmatpush1.msra.mxu0 0.0
        %2268 = vmatprep.subr.mxu0 0.0
        %2269 = vmatpush1.msra.mxu0 0.0
        %2270 = vmatprep.mubr.f32.mxu0 0.0
        %2271 = vmatmul.mubr.f32.gmra.mrb[0].mxu0 %v2183
        %v2272 = vpop.f32.mrb[0].mxu0
        %v2273 = vadd.f32 0.0, %v2272
        %v2274 = vpop.f32.mrb[0].mxu0
        %2275 = vmatprep.mubr.f32.mxu0 0.0
        %2276 = vmatmul.mubr.f32.gmra.mrb[0].mxu0 %v2184
        %v2277 = vpop.f32.mrb[0].mxu0
        %v2278 = vadd.f32 0.0, %v2277
        %v2279 = vpop.f32.mrb[0].mxu0
        %2280 = vmatprep.mubr.f32.mxu0 0.0
        %2281 = vmatmul.mubr.f32.gmra.mrb[0].mxu0 %v2185
        %v2282 = vpop.f32.mrb[0].mxu0
        %v2283 = vadd.f32 0.0, %v2282
        %v2284 = vpop.f32.mrb[0].mxu0
        %2285 = vmatprep.mubr.f32.mxu0 0.0
        %2286 = vmatmul.mubr.f32.gmra.mrb[0].mxu0 %v2186
        %v2287 = vpop.f32.mrb[0].mxu0
        %v2288 = vadd.f32 0.0, %v2287
        %v2289 = vpop.f32.mrb[0].mxu0
        %2290 = vmatprep.mubr.f32.mxu0 0.0
        %2291 = vmatmul.mubr.f32.gmra.mrb[0].mxu0 %v2187
        %v2292 = vpop.f32.mrb[0].mxu0
        %v2293 = vadd.f32 0.0, %v2292
        %v2294 = vpop.f32.mrb[0].mxu0
        %2295 = vmatprep.mubr.f32.mxu0 0.0
        %2296 = vmatmul.mubr.f32.gmra.mrb[0].mxu0 %v2188
        %v2297 = vpop.f32.mrb[0].mxu0
        %v2298 = vadd.f32 0.0, %v2297
        %v2299 = vpop.f32.mrb[0].mxu0
        %2300 = vdwg.mxu0
        %v2301 = vadd.f32 %v2177, %v2273
        %v2302 = vadd.f32 %v2178, %v2278
        %v2303 = vadd.f32 %v2179, %v2283
        %v2304 = vadd.f32 %v2180, %v2288
        %v2305 = vadd.f32 %v2181, %v2293
        %v2306 = vadd.f32 %v2182, %v2298
        %v2307 = vld [vmem:[%s2058 + $0x2] sm:$0xff]
        %v2308 = vld [vmem:[%s2058 + $0x12] sm:$0xff]
        %v2309 = vld [vmem:[%s2058 + $0x22] sm:$0xff]
        %v2310 = vld [vmem:[%s2058 + $0x32] sm:$0xff]
        %v2311 = vld [vmem:[%s2058 + $0x42] sm:$0xff]
        %v2312 = vld [vmem:[%s2058 + $0x52] sm:$0xff]
        %s2313 = scalar_lea.vmem [#allocation6], 1024
        %v2314 = vld [vmem:[%s2313] sm:$0xff]
        %v2315 = vld [vmem:[%s2313 + $0x8] sm:$0xff]
        %v2316 = vld [vmem:[%s2313 + $0x10] sm:$0xff]
        %v2317 = vld [vmem:[%s2313 + $0x18] sm:$0xff]
        %v2318 = vld [vmem:[%s2313 + $0x20] sm:$0xff]
        %v2319 = vld [vmem:[%s2313 + $0x28] sm:$0xff]
        %v2320 = vld [vmem:[%s2313 + $0x30] sm:$0xff]
        %v2321 = vld [vmem:[%s2313 + $0x38] sm:$0xff]
        %v2322 = vld [vmem:[%s2313 + $0x40] sm:$0xff]
        %v2323 = vld [vmem:[%s2313 + $0x48] sm:$0xff]
        %v2324 = vld [vmem:[%s2313 + $0x50] sm:$0xff]
        %v2325 = vld [vmem:[%s2313 + $0x58] sm:$0xff]
        %v2326 = vld [vmem:[%s2313 + $0x60] sm:$0xff]
        %v2327 = vld [vmem:[%s2313 + $0x68] sm:$0xff]
        %v2328 = vld [vmem:[%s2313 + $0x70] sm:$0xff]
        %v2329 = vld [vmem:[%s2313 + $0x78] sm:$0xff]
        %2330 = vmatprep.subr.mxu0 0.0
        %2331 = vmatpush1.msra.mxu0 %v2314
        %2332 = vmatprep.subr.mxu0 0.0
        %2333 = vmatpush1.msra.mxu0 %v2315
        %2334 = vmatprep.subr.mxu0 0.0
        %2335 = vmatpush1.msra.mxu0 %v2316
        %2336 = vmatprep.subr.mxu0 0.0
        %2337 = vmatpush1.msra.mxu0 %v2317
        %2338 = vmatprep.subr.mxu0 0.0
        %2339 = vmatpush1.msra.mxu0 %v2318
        %2340 = vmatprep.subr.mxu0 0.0
        %2341 = vmatpush1.msra.mxu0 %v2319
        %2342 = vmatprep.subr.mxu0 0.0
        %2343 = vmatpush1.msra.mxu0 %v2320
        %2344 = vmatprep.subr.mxu0 0.0
        %2345 = vmatpush1.msra.mxu0 %v2321
        %2346 = vmatprep.subr.mxu0 0.0
        %2347 = vmatpush1.msra.mxu0 %v2322
        %2348 = vmatprep.subr.mxu0 0.0
        %2349 = vmatpush1.msra.mxu0 %v2323
        %2350 = vmatprep.subr.mxu0 0.0
        %2351 = vmatpush1.msra.mxu0 %v2324
        %2352 = vmatprep.subr.mxu0 0.0
        %2353 = vmatpush1.msra.mxu0 %v2325
        %2354 = vmatprep.subr.mxu0 0.0
        %2355 = vmatpush1.msra.mxu0 %v2326
        %2356 = vmatprep.subr.mxu0 0.0
        %2357 = vmatpush1.msra.mxu0 %v2327
        %2358 = vmatprep.subr.mxu0 0.0
        %2359 = vmatpush1.msra.mxu0 %v2328
        %2360 = vmatprep.subr.mxu0 0.0
        %2361 = vmatpush1.msra.mxu0 %v2329
        %2362 = vmatprep.subr.mxu0 0.0
        %2363 = vmatpush1.msra.mxu0 0.0
        %2364 = vmatprep.subr.mxu0 0.0
        %2365 = vmatpush1.msra.mxu0 0.0
        %2366 = vmatprep.subr.mxu0 0.0
        %2367 = vmatpush1.msra.mxu0 0.0
        %2368 = vmatprep.subr.mxu0 0.0
        %2369 = vmatpush1.msra.mxu0 0.0
        %2370 = vmatprep.subr.mxu0 0.0
        %2371 = vmatpush1.msra.mxu0 0.0
        %2372 = vmatprep.subr.mxu0 0.0
        %2373 = vmatpush1.msra.mxu0 0.0
        %2374 = vmatprep.subr.mxu0 0.0
        %2375 = vmatpush1.msra.mxu0 0.0
        %2376 = vmatprep.subr.mxu0 0.0
        %2377 = vmatpush1.msra.mxu0 0.0
        %2378 = vmatprep.subr.mxu0 0.0
        %2379 = vmatpush1.msra.mxu0 0.0
        %2380 = vmatprep.subr.mxu0 0.0
        %2381 = vmatpush1.msra.mxu0 0.0
        %2382 = vmatprep.subr.mxu0 0.0
        %2383 = vmatpush1.msra.mxu0 0.0
        %2384 = vmatprep.subr.mxu0 0.0
        %2385 = vmatpush1.msra.mxu0 0.0
        %2386 = vmatprep.subr.mxu0 0.0
        %2387 = vmatpush1.msra.mxu0 0.0
        %2388 = vmatprep.subr.mxu0 0.0
        %2389 = vmatpush1.msra.mxu0 0.0
        %2390 = vmatprep.subr.mxu0 0.0
        %2391 = vmatpush1.msra.mxu0 0.0
        %2392 = vmatprep.subr.mxu0 0.0
        %2393 = vmatpush1.msra.mxu0 0.0
        %2394 = vmatprep.mubr.f32.mxu0 0.0
        %2395 = vmatmul.mubr.f32.gmra.mrb[0].mxu0 %v2307
        %v2396 = vpop.f32.mrb[0].mxu0
        %v2397 = vadd.f32 0.0, %v2396
        %v2398 = vpop.f32.mrb[0].mxu0
        %2399 = vmatprep.mubr.f32.mxu0 0.0
        %2400 = vmatmul.mubr.f32.gmra.mrb[0].mxu0 %v2308
        %v2401 = vpop.f32.mrb[0].mxu0
        %v2402 = vadd.f32 0.0, %v2401
        %v2403 = vpop.f32.mrb[0].mxu0
        %2404 = vmatprep.mubr.f32.mxu0 0.0
        %2405 = vmatmul.mubr.f32.gmra.mrb[0].mxu0 %v2309
        %v2406 = vpop.f32.mrb[0].mxu0
        %v2407 = vadd.f32 0.0, %v2406
        %v2408 = vpop.f32.mrb[0].mxu0
        %2409 = vmatprep.mubr.f32.mxu0 0.0
        %2410 = vmatmul.mubr.f32.gmra.mrb[0].mxu0 %v2310
        %v2411 = vpop.f32.mrb[0].mxu0
        %v2412 = vadd.f32 0.0, %v2411
        %v2413 = vpop.f32.mrb[0].mxu0
        %2414 = vmatprep.mubr.f32.mxu0 0.0
        %2415 = vmatmul.mubr.f32.gmra.mrb[0].mxu0 %v2311
        %v2416 = vpop.f32.mrb[0].mxu0
        %v2417 = vadd.f32 0.0, %v2416
        %v2418 = vpop.f32.mrb[0].mxu0
        %2419 = vmatprep.mubr.f32.mxu0 0.0
        %2420 = vmatmul.mubr.f32.gmra.mrb[0].mxu0 %v2312
        %v2421 = vpop.f32.mrb[0].mxu0
        %v2422 = vadd.f32 0.0, %v2421
        %v2423 = vpop.f32.mrb[0].mxu0
        %2424 = vdwg.mxu0
        %v2425 = vadd.f32 %v2301, %v2397
        %v2426 = vadd.f32 %v2302, %v2402
        %v2427 = vadd.f32 %v2303, %v2407
        %v2428 = vadd.f32 %v2304, %v2412
        %v2429 = vadd.f32 %v2305, %v2417
        %v2430 = vadd.f32 %v2306, %v2422
        %v2431 = vld [vmem:[%s2] sm:$0x1]
        %v2433 = vlaneseq
        %v2434 = vshrl.u32 %v2433, 7
        %v2435 = vsub.s32 0, %v2434
        %v2436 = vrot.slane %v2431, %v2435
        %v2438 = vadd.f32 %v2425, %v2436
        %v2439 = vadd.f32 %v2426, %v2436
        %v2440 = vadd.f32 %v2427, %v2436
        %v2441 = vadd.f32 %v2428, %v2436
        %v2442 = vadd.f32 %v2429, %v2436
        %v2443 = vadd.f32 %v2430, %v2436
        %v2444 = vmax.f32 %v2438, 0.0
        %v2445 = vmax.f32 %v2439, 0.0
        %v2446 = vmax.f32 %v2440, 0.0
        %v2447 = vmax.f32 %v2441, 0.0
        %v2448 = vmax.f32 %v2442, 0.0
        %v2449 = vmax.f32 %v2443, 0.0
        %2450 = vst [vmem:[#allocation4 + $0x1] sm:$0xff] %v2444
        %2451 = vst [vmem:[#allocation4 + $0x11] sm:$0xff] %v2445
        %2452 = vst [vmem:[#allocation4 + $0x21] sm:$0xff] %v2446
        %2453 = vst [vmem:[#allocation4 + $0x31] sm:$0xff] %v2447
        %2454 = vst [vmem:[#allocation4 + $0x41] sm:$0xff] %v2448
        %2455 = vst [vmem:[#allocation4 + $0x51] sm:$0xff] %v2449
        %p2456 = scmp.eq.s32.totalorder %s26, 0
        // Predicated region
        $region49: #{tpu_custom_call.1} parent=35 // pred_check
          %p2457 = pneg %p2456
        $region50: #{tpu_custom_call.1} parent=35 // pred_check_branch
          %2459 = sbr.rel (%p2457) target = $region52
        $region51: #{tpu_custom_call.1} parent=35 // pred_region
          %2460 = vst [vmem:[#allocation4] sm:$0xff] 0.0
          %2461 = vst [vmem:[#allocation4 + $0x8] sm:$0x3] 0.0
        $region52: #{tpu_custom_call.1} parent=35 // pred_fallthru
          _
        %p2462 = scmp.eq.s32.totalorder %s26, 1
        // Predicated region
        $region53: #{tpu_custom_call.1} parent=35 // pred_check
          %p2463 = pneg %p2462
        $region54: #{tpu_custom_call.1} parent=35 // pred_check_branch
          %2465 = sbr.rel (%p2463) target = $region56
        $region55: #{tpu_custom_call.1} parent=35 // pred_region
          %s2466 = scalar_lea.vmem [#allocation4], 80
          %2467 = vst [vmem:[%s2466] sm:$0xff] 0.0
          %2468 = vst [vmem:[%s2466 + $0x8] sm:$0x3] 0.0
        $region56: #{tpu_custom_call.1} parent=35 // pred_fallthru
          _
        %v2469 = vld [vmem:[#allocation4] sm:$0xff]
        %v2470 = vld [vmem:[#allocation4 + $0x10] sm:$0xff]
        %v2471 = vld [vmem:[#allocation4 + $0x20] sm:$0xff]
        %v2472 = vld [vmem:[#allocation4 + $0x30] sm:$0xff]
        %v2473 = vld [vmem:[#allocation9] sm:$0xff]
        %v2474 = vld [vmem:[#allocation9 + $0x8] sm:$0xff]
        %v2475 = vld [vmem:[#allocation9 + $0x10] sm:$0xff]
        %v2476 = vld [vmem:[#allocation9 + $0x18] sm:$0xff]
        %v2477 = vld [vmem:[#allocation9 + $0x20] sm:$0xff]
        %v2478 = vld [vmem:[#allocation9 + $0x28] sm:$0xff]
        %v2479 = vld [vmem:[#allocation9 + $0x30] sm:$0xff]
        %v2480 = vld [vmem:[#allocation9 + $0x38] sm:$0xff]
        %v2481 = vld [vmem:[#allocation9 + $0x40] sm:$0xff]
        %v2482 = vld [vmem:[#allocation9 + $0x48] sm:$0xff]
        %v2483 = vld [vmem:[#allocation9 + $0x50] sm:$0xff]
        %v2484 = vld [vmem:[#allocation9 + $0x58] sm:$0xff]
        %v2485 = vld [vmem:[#allocation9 + $0x60] sm:$0xff]
        %v2486 = vld [vmem:[#allocation9 + $0x68] sm:$0xff]
        %v2487 = vld [vmem:[#allocation9 + $0x70] sm:$0xff]
        %v2488 = vld [vmem:[#allocation9 + $0x78] sm:$0xff]
        %v2489 = vld [vmem:[#allocation4 + $0x1] sm:$0xff]
        %v2490 = vld [vmem:[#allocation4 + $0x11] sm:$0xff]
        %v2491 = vld [vmem:[#allocation4 + $0x21] sm:$0xff]
        %v2492 = vld [vmem:[#allocation4 + $0x31] sm:$0xff]
        %s2493 = scalar_lea.vmem [#allocation9], 128
        %v2494 = vld [vmem:[%s2493] sm:$0xff]
        %v2495 = vld [vmem:[%s2493 + $0x8] sm:$0xff]
        %v2496 = vld [vmem:[%s2493 + $0x10] sm:$0xff]
        %v2497 = vld [vmem:[%s2493 + $0x18] sm:$0xff]
        %v2498 = vld [vmem:[%s2493 + $0x20] sm:$0xff]
        %v2499 = vld [vmem:[%s2493 + $0x28] sm:$0xff]
        %v2500 = vld [vmem:[%s2493 + $0x30] sm:$0xff]
        %v2501 = vld [vmem:[%s2493 + $0x38] sm:$0xff]
        %v2502 = vld [vmem:[%s2493 + $0x40] sm:$0xff]
        %v2503 = vld [vmem:[%s2493 + $0x48] sm:$0xff]
        %v2504 = vld [vmem:[%s2493 + $0x50] sm:$0xff]
        %v2505 = vld [vmem:[%s2493 + $0x58] sm:$0xff]
        %v2506 = vld [vmem:[%s2493 + $0x60] sm:$0xff]
        %v2507 = vld [vmem:[%s2493 + $0x68] sm:$0xff]
        %v2508 = vld [vmem:[%s2493 + $0x70] sm:$0xff]
        %v2509 = vld [vmem:[%s2493 + $0x78] sm:$0xff]
        %2510 = vmatprep.subr.mxu0 0.0
        %2511 = vmatpush1.msra.mxu0 %v2494
        %2512 = vmatprep.subr.mxu0 0.0
        %2513 = vmatpush1.msra.mxu0 %v2495
        %2514 = vmatprep.subr.mxu0 0.0
        %2515 = vmatpush1.msra.mxu0 %v2496
        %2516 = vmatprep.subr.mxu0 0.0
        %2517 = vmatpush1.msra.mxu0 %v2497
        %2518 = vmatprep.subr.mxu0 0.0
        %2519 = vmatpush1.msra.mxu0 %v2498
        %2520 = vmatprep.subr.mxu0 0.0
        %2521 = vmatpush1.msra.mxu0 %v2499
        %2522 = vmatprep.subr.mxu0 0.0
        %2523 = vmatpush1.msra.mxu0 %v2500
        %2524 = vmatprep.subr.mxu0 0.0
        %2525 = vmatpush1.msra.mxu0 %v2501
        %2526 = vmatprep.subr.mxu0 0.0
        %2527 = vmatpush1.msra.mxu0 %v2502
        %2528 = vmatprep.subr.mxu0 0.0
        %2529 = vmatpush1.msra.mxu0 %v2503
        %2530 = vmatprep.subr.mxu0 0.0
        %2531 = vmatpush1.msra.mxu0 %v2504
        %2532 = vmatprep.subr.mxu0 0.0
        %2533 = vmatpush1.msra.mxu0 %v2505
        %2534 = vmatprep.subr.mxu0 0.0
        %2535 = vmatpush1.msra.mxu0 %v2506
        %2536 = vmatprep.subr.mxu0 0.0
        %2537 = vmatpush1.msra.mxu0 %v2507
        %2538 = vmatprep.subr.mxu0 0.0
        %2539 = vmatpush1.msra.mxu0 %v2508
        %2540 = vmatprep.subr.mxu0 0.0
        %2541 = vmatpush1.msra.mxu0 %v2509
        %2542 = vmatprep.subr.mxu0 0.0
        %2543 = vmatpush1.msra.mxu0 0.0
        %2544 = vmatprep.subr.mxu0 0.0
        %2545 = vmatpush1.msra.mxu0 0.0
        %2546 = vmatprep.subr.mxu0 0.0
        %2547 = vmatpush1.msra.mxu0 0.0
        %2548 = vmatprep.subr.mxu0 0.0
        %2549 = vmatpush1.msra.mxu0 0.0
        %2550 = vmatprep.subr.mxu0 0.0
        %2551 = vmatpush1.msra.mxu0 0.0
        %2552 = vmatprep.subr.mxu0 0.0
        %2553 = vmatpush1.msra.mxu0 0.0
        %2554 = vmatprep.subr.mxu0 0.0
        %2555 = vmatpush1.msra.mxu0 0.0
        %2556 = vmatprep.subr.mxu0 0.0
        %2557 = vmatpush1.msra.mxu0 0.0
        %2558 = vmatprep.subr.mxu0 0.0
        %2559 = vmatpush1.msra.mxu0 0.0
        %2560 = vmatprep.subr.mxu0 0.0
        %2561 = vmatpush1.msra.mxu0 0.0
        %2562 = vmatprep.subr.mxu0 0.0
        %2563 = vmatpush1.msra.mxu0 0.0
        %2564 = vmatprep.subr.mxu0 0.0
        %2565 = vmatpush1.msra.mxu0 0.0
        %2566 = vmatprep.subr.mxu0 0.0
        %2567 = vmatpush1.msra.mxu0 0.0
        %2568 = vmatprep.subr.mxu0 0.0
        %2569 = vmatpush1.msra.mxu0 0.0
        %2570 = vmatprep.subr.mxu0 0.0
        %2571 = vmatpush1.msra.mxu0 0.0
        %2572 = vmatprep.subr.mxu0 0.0
        %2573 = vmatpush1.msra.mxu0 0.0
        %2574 = vmatprep.mubr.f32.mxu0 0.0
        %2575 = vmatmul.mubr.f32.gmra.mrb[0].mxu0 %v2489
        %v2576 = vpop.f32.mrb[0].mxu0
        %v2577 = vadd.f32 0.0, %v2576
        %v2578 = vpop.f32.mrb[0].mxu0
        %2579 = vmatprep.mubr.f32.mxu0 0.0
        %2580 = vmatmul.mubr.f32.gmra.mrb[0].mxu0 %v2490
        %v2581 = vpop.f32.mrb[0].mxu0
        %v2582 = vadd.f32 0.0, %v2581
        %v2583 = vpop.f32.mrb[0].mxu0
        %2584 = vmatprep.mubr.f32.mxu0 0.0
        %2585 = vmatmul.mubr.f32.gmra.mrb[0].mxu0 %v2491
        %v2586 = vpop.f32.mrb[0].mxu0
        %v2587 = vadd.f32 0.0, %v2586
        %v2588 = vpop.f32.mrb[0].mxu0
        %2589 = vmatprep.mubr.f32.mxu0 0.0
        %2590 = vmatmul.mubr.f32.gmra.mrb[0].mxu0 %v2492
        %v2591 = vpop.f32.mrb[0].mxu0
        %v2592 = vadd.f32 0.0, %v2591
        %v2593 = vpop.f32.mrb[0].mxu0
        %2594 = vdwg.mxu0
        %2595 = vmatprep.subr.mxu0 0.0
        %2596 = vmatpush1.msra.mxu0 %v2473
        %2597 = vmatprep.subr.mxu0 0.0
        %2598 = vmatpush1.msra.mxu0 %v2474
        %2599 = vmatprep.subr.mxu0 0.0
        %2600 = vmatpush1.msra.mxu0 %v2475
        %2601 = vmatprep.subr.mxu0 0.0
        %2602 = vmatpush1.msra.mxu0 %v2476
        %2603 = vmatprep.subr.mxu0 0.0
        %2604 = vmatpush1.msra.mxu0 %v2477
        %2605 = vmatprep.subr.mxu0 0.0
        %2606 = vmatpush1.msra.mxu0 %v2478
        %2607 = vmatprep.subr.mxu0 0.0
        %2608 = vmatpush1.msra.mxu0 %v2479
        %2609 = vmatprep.subr.mxu0 0.0
        %2610 = vmatpush1.msra.mxu0 %v2480
        %2611 = vmatprep.subr.mxu0 0.0
        %2612 = vmatpush1.msra.mxu0 %v2481
        %2613 = vmatprep.subr.mxu0 0.0
        %2614 = vmatpush1.msra.mxu0 %v2482
        %2615 = vmatprep.subr.mxu0 0.0
        %2616 = vmatpush1.msra.mxu0 %v2483
        %2617 = vmatprep.subr.mxu0 0.0
        %2618 = vmatpush1.msra.mxu0 %v2484
        %2619 = vmatprep.subr.mxu0 0.0
        %2620 = vmatpush1.msra.mxu0 %v2485
        %2621 = vmatprep.subr.mxu0 0.0
        %2622 = vmatpush1.msra.mxu0 %v2486
        %2623 = vmatprep.subr.mxu0 0.0
        %2624 = vmatpush1.msra.mxu0 %v2487
        %2625 = vmatprep.subr.mxu0 0.0
        %2626 = vmatpush1.msra.mxu0 %v2488
        %2627 = vmatprep.subr.mxu0 0.0
        %2628 = vmatpush1.msra.mxu0 0.0
        %2629 = vmatprep.subr.mxu0 0.0
        %2630 = vmatpush1.msra.mxu0 0.0
        %2631 = vmatprep.subr.mxu0 0.0
        %2632 = vmatpush1.msra.mxu0 0.0
        %2633 = vmatprep.subr.mxu0 0.0
        %2634 = vmatpush1.msra.mxu0 0.0
        %2635 = vmatprep.subr.mxu0 0.0
        %2636 = vmatpush1.msra.mxu0 0.0
        %2637 = vmatprep.subr.mxu0 0.0
        %2638 = vmatpush1.msra.mxu0 0.0
        %2639 = vmatprep.subr.mxu0 0.0
        %2640 = vmatpush1.msra.mxu0 0.0
        %2641 = vmatprep.subr.mxu0 0.0
        %2642 = vmatpush1.msra.mxu0 0.0
        %2643 = vmatprep.subr.mxu0 0.0
        %2644 = vmatpush1.msra.mxu0 0.0
        %2645 = vmatprep.subr.mxu0 0.0
        %2646 = vmatpush1.msra.mxu0 0.0
        %2647 = vmatprep.subr.mxu0 0.0
        %2648 = vmatpush1.msra.mxu0 0.0
        %2649 = vmatprep.subr.mxu0 0.0
        %2650 = vmatpush1.msra.mxu0 0.0
        %2651 = vmatprep.subr.mxu0 0.0
        %2652 = vmatpush1.msra.mxu0 0.0
        %2653 = vmatprep.subr.mxu0 0.0
        %2654 = vmatpush1.msra.mxu0 0.0
        %2655 = vmatprep.subr.mxu0 0.0
        %2656 = vmatpush1.msra.mxu0 0.0
        %2657 = vmatprep.subr.mxu0 0.0
        %2658 = vmatpush1.msra.mxu0 0.0
        %2659 = vmatprep.mubr.f32.mxu0 0.0
        %2660 = vmatmul.mubr.f32.gmra.mrb[0].mxu0 %v2469
        %v2661 = vpop.f32.mrb[0].mxu0
        %v2662 = vadd.f32 %v2577, %v2661
        %v2663 = vpop.f32.mrb[0].mxu0
        %2664 = vmatprep.mubr.f32.mxu0 0.0
        %2665 = vmatmul.mubr.f32.gmra.mrb[0].mxu0 %v2470
        %v2666 = vpop.f32.mrb[0].mxu0
        %v2667 = vadd.f32 %v2582, %v2666
        %v2668 = vpop.f32.mrb[0].mxu0
        %2669 = vmatprep.mubr.f32.mxu0 0.0
        %2670 = vmatmul.mubr.f32.gmra.mrb[0].mxu0 %v2471
        %v2671 = vpop.f32.mrb[0].mxu0
        %v2672 = vadd.f32 %v2587, %v2671
        %v2673 = vpop.f32.mrb[0].mxu0
        %2674 = vmatprep.mubr.f32.mxu0 0.0
        %2675 = vmatmul.mubr.f32.gmra.mrb[0].mxu0 %v2472
        %v2676 = vpop.f32.mrb[0].mxu0
        %v2677 = vadd.f32 %v2592, %v2676
        %v2678 = vpop.f32.mrb[0].mxu0
        %2679 = vdwg.mxu0
        %v2680 = vld [vmem:[#allocation4 + $0x2] sm:$0xff]
        %v2681 = vld [vmem:[#allocation4 + $0x12] sm:$0xff]
        %v2682 = vld [vmem:[#allocation4 + $0x22] sm:$0xff]
        %v2683 = vld [vmem:[#allocation4 + $0x32] sm:$0xff]
        %s2684 = scalar_lea.vmem [#allocation9], 256
        %v2685 = vld [vmem:[%s2684] sm:$0xff]
        %v2686 = vld [vmem:[%s2684 + $0x8] sm:$0xff]
        %v2687 = vld [vmem:[%s2684 + $0x10] sm:$0xff]
        %v2688 = vld [vmem:[%s2684 + $0x18] sm:$0xff]
        %v2689 = vld [vmem:[%s2684 + $0x20] sm:$0xff]
        %v2690 = vld [vmem:[%s2684 + $0x28] sm:$0xff]
        %v2691 = vld [vmem:[%s2684 + $0x30] sm:$0xff]
        %v2692 = vld [vmem:[%s2684 + $0x38] sm:$0xff]
        %v2693 = vld [vmem:[%s2684 + $0x40] sm:$0xff]
        %v2694 = vld [vmem:[%s2684 + $0x48] sm:$0xff]
        %v2695 = vld [vmem:[%s2684 + $0x50] sm:$0xff]
        %v2696 = vld [vmem:[%s2684 + $0x58] sm:$0xff]
        %v2697 = vld [vmem:[%s2684 + $0x60] sm:$0xff]
        %v2698 = vld [vmem:[%s2684 + $0x68] sm:$0xff]
        %v2699 = vld [vmem:[%s2684 + $0x70] sm:$0xff]
        %v2700 = vld [vmem:[%s2684 + $0x78] sm:$0xff]
        %2701 = vmatprep.subr.mxu0 0.0
        %2702 = vmatpush1.msra.mxu0 %v2685
        %2703 = vmatprep.subr.mxu0 0.0
        %2704 = vmatpush1.msra.mxu0 %v2686
        %2705 = vmatprep.subr.mxu0 0.0
        %2706 = vmatpush1.msra.mxu0 %v2687
        %2707 = vmatprep.subr.mxu0 0.0
        %2708 = vmatpush1.msra.mxu0 %v2688
        %2709 = vmatprep.subr.mxu0 0.0
        %2710 = vmatpush1.msra.mxu0 %v2689
        %2711 = vmatprep.subr.mxu0 0.0
        %2712 = vmatpush1.msra.mxu0 %v2690
        %2713 = vmatprep.subr.mxu0 0.0
        %2714 = vmatpush1.msra.mxu0 %v2691
        %2715 = vmatprep.subr.mxu0 0.0
        %2716 = vmatpush1.msra.mxu0 %v2692
        %2717 = vmatprep.subr.mxu0 0.0
        %2718 = vmatpush1.msra.mxu0 %v2693
        %2719 = vmatprep.subr.mxu0 0.0
        %2720 = vmatpush1.msra.mxu0 %v2694
        %2721 = vmatprep.subr.mxu0 0.0
        %2722 = vmatpush1.msra.mxu0 %v2695
        %2723 = vmatprep.subr.mxu0 0.0
        %2724 = vmatpush1.msra.mxu0 %v2696
        %2725 = vmatprep.subr.mxu0 0.0
        %2726 = vmatpush1.msra.mxu0 %v2697
        %2727 = vmatprep.subr.mxu0 0.0
        %2728 = vmatpush1.msra.mxu0 %v2698
        %2729 = vmatprep.subr.mxu0 0.0
        %2730 = vmatpush1.msra.mxu0 %v2699
        %2731 = vmatprep.subr.mxu0 0.0
        %2732 = vmatpush1.msra.mxu0 %v2700
        %2733 = vmatprep.subr.mxu0 0.0
        %2734 = vmatpush1.msra.mxu0 0.0
        %2735 = vmatprep.subr.mxu0 0.0
        %2736 = vmatpush1.msra.mxu0 0.0
        %2737 = vmatprep.subr.mxu0 0.0
        %2738 = vmatpush1.msra.mxu0 0.0
        %2739 = vmatprep.subr.mxu0 0.0
        %2740 = vmatpush1.msra.mxu0 0.0
        %2741 = vmatprep.subr.mxu0 0.0
        %2742 = vmatpush1.msra.mxu0 0.0
        %2743 = vmatprep.subr.mxu0 0.0
        %2744 = vmatpush1.msra.mxu0 0.0
        %2745 = vmatprep.subr.mxu0 0.0
        %2746 = vmatpush1.msra.mxu0 0.0
        %2747 = vmatprep.subr.mxu0 0.0
        %2748 = vmatpush1.msra.mxu0 0.0
        %2749 = vmatprep.subr.mxu0 0.0
        %2750 = vmatpush1.msra.mxu0 0.0
        %2751 = vmatprep.subr.mxu0 0.0
        %2752 = vmatpush1.msra.mxu0 0.0
        %2753 = vmatprep.subr.mxu0 0.0
        %2754 = vmatpush1.msra.mxu0 0.0
        %2755 = vmatprep.subr.mxu0 0.0
        %2756 = vmatpush1.msra.mxu0 0.0
        %2757 = vmatprep.subr.mxu0 0.0
        %2758 = vmatpush1.msra.mxu0 0.0
        %2759 = vmatprep.subr.mxu0 0.0
        %2760 = vmatpush1.msra.mxu0 0.0
        %2761 = vmatprep.subr.mxu0 0.0
        %2762 = vmatpush1.msra.mxu0 0.0
        %2763 = vmatprep.subr.mxu0 0.0
        %2764 = vmatpush1.msra.mxu0 0.0
        %2765 = vmatprep.mubr.f32.mxu0 0.0
        %2766 = vmatmul.mubr.f32.gmra.mrb[0].mxu0 %v2680
        %v2767 = vpop.f32.mrb[0].mxu0
        %v2768 = vadd.f32 0.0, %v2767
        %v2769 = vpop.f32.mrb[0].mxu0
        %2770 = vmatprep.mubr.f32.mxu0 0.0
        %2771 = vmatmul.mubr.f32.gmra.mrb[0].mxu0 %v2681
        %v2772 = vpop.f32.mrb[0].mxu0
        %v2773 = vadd.f32 0.0, %v2772
        %v2774 = vpop.f32.mrb[0].mxu0
        %2775 = vmatprep.mubr.f32.mxu0 0.0
        %2776 = vmatmul.mubr.f32.gmra.mrb[0].mxu0 %v2682
        %v2777 = vpop.f32.mrb[0].mxu0
        %v2778 = vadd.f32 0.0, %v2777
        %v2779 = vpop.f32.mrb[0].mxu0
        %2780 = vmatprep.mubr.f32.mxu0 0.0
        %2781 = vmatmul.mubr.f32.gmra.mrb[0].mxu0 %v2683
        %v2782 = vpop.f32.mrb[0].mxu0
        %v2783 = vadd.f32 0.0, %v2782
        %v2784 = vpop.f32.mrb[0].mxu0
        %2785 = vdwg.mxu0
        %v2786 = vadd.f32 %v2662, %v2768
        %v2787 = vadd.f32 %v2667, %v2773
        %v2788 = vadd.f32 %v2672, %v2778
        %v2789 = vadd.f32 %v2677, %v2783
        %s2790 = scalar_lea.vmem [#allocation4], 16
        %v2791 = vld [vmem:[%s2790] sm:$0xff]
        %v2792 = vld [vmem:[%s2790 + $0x10] sm:$0xff]
        %v2793 = vld [vmem:[%s2790 + $0x20] sm:$0xff]
        %v2794 = vld [vmem:[%s2790 + $0x30] sm:$0xff]
        %s2795 = scalar_lea.vmem [#allocation9], 384
        %v2796 = vld [vmem:[%s2795] sm:$0xff]
        %v2797 = vld [vmem:[%s2795 + $0x8] sm:$0xff]
        %v2798 = vld [vmem:[%s2795 + $0x10] sm:$0xff]
        %v2799 = vld [vmem:[%s2795 + $0x18] sm:$0xff]
        %v2800 = vld [vmem:[%s2795 + $0x20] sm:$0xff]
        %v2801 = vld [vmem:[%s2795 + $0x28] sm:$0xff]
        %v2802 = vld [vmem:[%s2795 + $0x30] sm:$0xff]
        %v2803 = vld [vmem:[%s2795 + $0x38] sm:$0xff]
        %v2804 = vld [vmem:[%s2795 + $0x40] sm:$0xff]
        %v2805 = vld [vmem:[%s2795 + $0x48] sm:$0xff]
        %v2806 = vld [vmem:[%s2795 + $0x50] sm:$0xff]
        %v2807 = vld [vmem:[%s2795 + $0x58] sm:$0xff]
        %v2808 = vld [vmem:[%s2795 + $0x60] sm:$0xff]
        %v2809 = vld [vmem:[%s2795 + $0x68] sm:$0xff]
        %v2810 = vld [vmem:[%s2795 + $0x70] sm:$0xff]
        %v2811 = vld [vmem:[%s2795 + $0x78] sm:$0xff]
        %2812 = vmatprep.subr.mxu0 0.0
        %2813 = vmatpush1.msra.mxu0 %v2796
        %2814 = vmatprep.subr.mxu0 0.0
        %2815 = vmatpush1.msra.mxu0 %v2797
        %2816 = vmatprep.subr.mxu0 0.0
        %2817 = vmatpush1.msra.mxu0 %v2798
        %2818 = vmatprep.subr.mxu0 0.0
        %2819 = vmatpush1.msra.mxu0 %v2799
        %2820 = vmatprep.subr.mxu0 0.0
        %2821 = vmatpush1.msra.mxu0 %v2800
        %2822 = vmatprep.subr.mxu0 0.0
        %2823 = vmatpush1.msra.mxu0 %v2801
        %2824 = vmatprep.subr.mxu0 0.0
        %2825 = vmatpush1.msra.mxu0 %v2802
        %2826 = vmatprep.subr.mxu0 0.0
        %2827 = vmatpush1.msra.mxu0 %v2803
        %2828 = vmatprep.subr.mxu0 0.0
        %2829 = vmatpush1.msra.mxu0 %v2804
        %2830 = vmatprep.subr.mxu0 0.0
        %2831 = vmatpush1.msra.mxu0 %v2805
        %2832 = vmatprep.subr.mxu0 0.0
        %2833 = vmatpush1.msra.mxu0 %v2806
        %2834 = vmatprep.subr.mxu0 0.0
        %2835 = vmatpush1.msra.mxu0 %v2807
        %2836 = vmatprep.subr.mxu0 0.0
        %2837 = vmatpush1.msra.mxu0 %v2808
        %2838 = vmatprep.subr.mxu0 0.0
        %2839 = vmatpush1.msra.mxu0 %v2809
        %2840 = vmatprep.subr.mxu0 0.0
        %2841 = vmatpush1.msra.mxu0 %v2810
        %2842 = vmatprep.subr.mxu0 0.0
        %2843 = vmatpush1.msra.mxu0 %v2811
        %2844 = vmatprep.subr.mxu0 0.0
        %2845 = vmatpush1.msra.mxu0 0.0
        %2846 = vmatprep.subr.mxu0 0.0
        %2847 = vmatpush1.msra.mxu0 0.0
        %2848 = vmatprep.subr.mxu0 0.0
        %2849 = vmatpush1.msra.mxu0 0.0
        %2850 = vmatprep.subr.mxu0 0.0
        %2851 = vmatpush1.msra.mxu0 0.0
        %2852 = vmatprep.subr.mxu0 0.0
        %2853 = vmatpush1.msra.mxu0 0.0
        %2854 = vmatprep.subr.mxu0 0.0
        %2855 = vmatpush1.msra.mxu0 0.0
        %2856 = vmatprep.subr.mxu0 0.0
        %2857 = vmatpush1.msra.mxu0 0.0
        %2858 = vmatprep.subr.mxu0 0.0
        %2859 = vmatpush1.msra.mxu0 0.0
        %2860 = vmatprep.subr.mxu0 0.0
        %2861 = vmatpush1.msra.mxu0 0.0
        %2862 = vmatprep.subr.mxu0 0.0
        %2863 = vmatpush1.msra.mxu0 0.0
        %2864 = vmatprep.subr.mxu0 0.0
        %2865 = vmatpush1.msra.mxu0 0.0
        %2866 = vmatprep.subr.mxu0 0.0
        %2867 = vmatpush1.msra.mxu0 0.0
        %2868 = vmatprep.subr.mxu0 0.0
        %2869 = vmatpush1.msra.mxu0 0.0
        %2870 = vmatprep.subr.mxu0 0.0
        %2871 = vmatpush1.msra.mxu0 0.0
        %2872 = vmatprep.subr.mxu0 0.0
        %2873 = vmatpush1.msra.mxu0 0.0
        %2874 = vmatprep.subr.mxu0 0.0
        %2875 = vmatpush1.msra.mxu0 0.0
        %2876 = vmatprep.mubr.f32.mxu0 0.0
        %2877 = vmatmul.mubr.f32.gmra.mrb[0].mxu0 %v2791
        %v2878 = vpop.f32.mrb[0].mxu0
        %v2879 = vadd.f32 0.0, %v2878
        %v2880 = vpop.f32.mrb[0].mxu0
        %2881 = vmatprep.mubr.f32.mxu0 0.0
        %2882 = vmatmul.mubr.f32.gmra.mrb[0].mxu0 %v2792
        %v2883 = vpop.f32.mrb[0].mxu0
        %v2884 = vadd.f32 0.0, %v2883
        %v2885 = vpop.f32.mrb[0].mxu0
        %2886 = vmatprep.mubr.f32.mxu0 0.0
        %2887 = vmatmul.mubr.f32.gmra.mrb[0].mxu0 %v2793
        %v2888 = vpop.f32.mrb[0].mxu0
        %v2889 = vadd.f32 0.0, %v2888
        %v2890 = vpop.f32.mrb[0].mxu0
        %2891 = vmatprep.mubr.f32.mxu0 0.0
        %2892 = vmatmul.mubr.f32.gmra.mrb[0].mxu0 %v2794
        %v2893 = vpop.f32.mrb[0].mxu0
        %v2894 = vadd.f32 0.0, %v2893
        %v2895 = vpop.f32.mrb[0].mxu0
        %2896 = vdwg.mxu0
        %v2897 = vadd.f32 %v2786, %v2879
        %v2898 = vadd.f32 %v2787, %v2884
        %v2899 = vadd.f32 %v2788, %v2889
        %v2900 = vadd.f32 %v2789, %v2894
        %v2901 = vld [vmem:[%s2790 + $0x1] sm:$0xff]
        %v2902 = vld [vmem:[%s2790 + $0x11] sm:$0xff]
        %v2903 = vld [vmem:[%s2790 + $0x21] sm:$0xff]
        %v2904 = vld [vmem:[%s2790 + $0x31] sm:$0xff]
        %s2905 = scalar_lea.vmem [#allocation9], 512
        %v2906 = vld [vmem:[%s2905] sm:$0xff]
        %v2907 = vld [vmem:[%s2905 + $0x8] sm:$0xff]
        %v2908 = vld [vmem:[%s2905 + $0x10] sm:$0xff]
        %v2909 = vld [vmem:[%s2905 + $0x18] sm:$0xff]
        %v2910 = vld [vmem:[%s2905 + $0x20] sm:$0xff]
        %v2911 = vld [vmem:[%s2905 + $0x28] sm:$0xff]
        %v2912 = vld [vmem:[%s2905 + $0x30] sm:$0xff]
        %v2913 = vld [vmem:[%s2905 + $0x38] sm:$0xff]
        %v2914 = vld [vmem:[%s2905 + $0x40] sm:$0xff]
        %v2915 = vld [vmem:[%s2905 + $0x48] sm:$0xff]
        %v2916 = vld [vmem:[%s2905 + $0x50] sm:$0xff]
        %v2917 = vld [vmem:[%s2905 + $0x58] sm:$0xff]
        %v2918 = vld [vmem:[%s2905 + $0x60] sm:$0xff]
        %v2919 = vld [vmem:[%s2905 + $0x68] sm:$0xff]
        %v2920 = vld [vmem:[%s2905 + $0x70] sm:$0xff]
        %v2921 = vld [vmem:[%s2905 + $0x78] sm:$0xff]
        %2922 = vmatprep.subr.mxu0 0.0
        %2923 = vmatpush1.msra.mxu0 %v2906
        %2924 = vmatprep.subr.mxu0 0.0
        %2925 = vmatpush1.msra.mxu0 %v2907
        %2926 = vmatprep.subr.mxu0 0.0
        %2927 = vmatpush1.msra.mxu0 %v2908
        %2928 = vmatprep.subr.mxu0 0.0
        %2929 = vmatpush1.msra.mxu0 %v2909
        %2930 = vmatprep.subr.mxu0 0.0
        %2931 = vmatpush1.msra.mxu0 %v2910
        %2932 = vmatprep.subr.mxu0 0.0
        %2933 = vmatpush1.msra.mxu0 %v2911
        %2934 = vmatprep.subr.mxu0 0.0
        %2935 = vmatpush1.msra.mxu0 %v2912
        %2936 = vmatprep.subr.mxu0 0.0
        %2937 = vmatpush1.msra.mxu0 %v2913
        %2938 = vmatprep.subr.mxu0 0.0
        %2939 = vmatpush1.msra.mxu0 %v2914
        %2940 = vmatprep.subr.mxu0 0.0
        %2941 = vmatpush1.msra.mxu0 %v2915
        %2942 = vmatprep.subr.mxu0 0.0
        %2943 = vmatpush1.msra.mxu0 %v2916
        %2944 = vmatprep.subr.mxu0 0.0
        %2945 = vmatpush1.msra.mxu0 %v2917
        %2946 = vmatprep.subr.mxu0 0.0
        %2947 = vmatpush1.msra.mxu0 %v2918
        %2948 = vmatprep.subr.mxu0 0.0
        %2949 = vmatpush1.msra.mxu0 %v2919
        %2950 = vmatprep.subr.mxu0 0.0
        %2951 = vmatpush1.msra.mxu0 %v2920
        %2952 = vmatprep.subr.mxu0 0.0
        %2953 = vmatpush1.msra.mxu0 %v2921
        %2954 = vmatprep.subr.mxu0 0.0
        %2955 = vmatpush1.msra.mxu0 0.0
        %2956 = vmatprep.subr.mxu0 0.0
        %2957 = vmatpush1.msra.mxu0 0.0
        %2958 = vmatprep.subr.mxu0 0.0
        %2959 = vmatpush1.msra.mxu0 0.0
        %2960 = vmatprep.subr.mxu0 0.0
        %2961 = vmatpush1.msra.mxu0 0.0
        %2962 = vmatprep.subr.mxu0 0.0
        %2963 = vmatpush1.msra.mxu0 0.0
        %2964 = vmatprep.subr.mxu0 0.0
        %2965 = vmatpush1.msra.mxu0 0.0
        %2966 = vmatprep.subr.mxu0 0.0
        %2967 = vmatpush1.msra.mxu0 0.0
        %2968 = vmatprep.subr.mxu0 0.0
        %2969 = vmatpush1.msra.mxu0 0.0
        %2970 = vmatprep.subr.mxu0 0.0
        %2971 = vmatpush1.msra.mxu0 0.0
        %2972 = vmatprep.subr.mxu0 0.0
        %2973 = vmatpush1.msra.mxu0 0.0
        %2974 = vmatprep.subr.mxu0 0.0
        %2975 = vmatpush1.msra.mxu0 0.0
        %2976 = vmatprep.subr.mxu0 0.0
        %2977 = vmatpush1.msra.mxu0 0.0
        %2978 = vmatprep.subr.mxu0 0.0
        %2979 = vmatpush1.msra.mxu0 0.0
        %2980 = vmatprep.subr.mxu0 0.0
        %2981 = vmatpush1.msra.mxu0 0.0
        %2982 = vmatprep.subr.mxu0 0.0
        %2983 = vmatpush1.msra.mxu0 0.0
        %2984 = vmatprep.subr.mxu0 0.0
        %2985 = vmatpush1.msra.mxu0 0.0
        %2986 = vmatprep.mubr.f32.mxu0 0.0
        %2987 = vmatmul.mubr.f32.gmra.mrb[0].mxu0 %v2901
        %v2988 = vpop.f32.mrb[0].mxu0
        %v2989 = vadd.f32 0.0, %v2988
        %v2990 = vpop.f32.mrb[0].mxu0
        %2991 = vmatprep.mubr.f32.mxu0 0.0
        %2992 = vmatmul.mubr.f32.gmra.mrb[0].mxu0 %v2902
        %v2993 = vpop.f32.mrb[0].mxu0
        %v2994 = vadd.f32 0.0, %v2993
        %v2995 = vpop.f32.mrb[0].mxu0
        %2996 = vmatprep.mubr.f32.mxu0 0.0
        %2997 = vmatmul.mubr.f32.gmra.mrb[0].mxu0 %v2903
        %v2998 = vpop.f32.mrb[0].mxu0
        %v2999 = vadd.f32 0.0, %v2998
        %v3000 = vpop.f32.mrb[0].mxu0
        %3001 = vmatprep.mubr.f32.mxu0 0.0
        %3002 = vmatmul.mubr.f32.gmra.mrb[0].mxu0 %v2904
        %v3003 = vpop.f32.mrb[0].mxu0
        %v3004 = vadd.f32 0.0, %v3003
        %v3005 = vpop.f32.mrb[0].mxu0
        %3006 = vdwg.mxu0
        %v3007 = vadd.f32 %v2897, %v2989
        %v3008 = vadd.f32 %v2898, %v2994
        %v3009 = vadd.f32 %v2899, %v2999
        %v3010 = vadd.f32 %v2900, %v3004
        %v3011 = vld [vmem:[%s2790 + $0x2] sm:$0xff]
        %v3012 = vld [vmem:[%s2790 + $0x12] sm:$0xff]
        %v3013 = vld [vmem:[%s2790 + $0x22] sm:$0xff]
        %v3014 = vld [vmem:[%s2790 + $0x32] sm:$0xff]
        %s3015 = scalar_lea.vmem [#allocation9], 640
        %v3016 = vld [vmem:[%s3015] sm:$0xff]
        %v3017 = vld [vmem:[%s3015 + $0x8] sm:$0xff]
        %v3018 = vld [vmem:[%s3015 + $0x10] sm:$0xff]
        %v3019 = vld [vmem:[%s3015 + $0x18] sm:$0xff]
        %v3020 = vld [vmem:[%s3015 + $0x20] sm:$0xff]
        %v3021 = vld [vmem:[%s3015 + $0x28] sm:$0xff]
        %v3022 = vld [vmem:[%s3015 + $0x30] sm:$0xff]
        %v3023 = vld [vmem:[%s3015 + $0x38] sm:$0xff]
        %v3024 = vld [vmem:[%s3015 + $0x40] sm:$0xff]
        %v3025 = vld [vmem:[%s3015 + $0x48] sm:$0xff]
        %v3026 = vld [vmem:[%s3015 + $0x50] sm:$0xff]
        %v3027 = vld [vmem:[%s3015 + $0x58] sm:$0xff]
        %v3028 = vld [vmem:[%s3015 + $0x60] sm:$0xff]
        %v3029 = vld [vmem:[%s3015 + $0x68] sm:$0xff]
        %v3030 = vld [vmem:[%s3015 + $0x70] sm:$0xff]
        %v3031 = vld [vmem:[%s3015 + $0x78] sm:$0xff]
        %3032 = vmatprep.subr.mxu0 0.0
        %3033 = vmatpush1.msra.mxu0 %v3016
        %3034 = vmatprep.subr.mxu0 0.0
        %3035 = vmatpush1.msra.mxu0 %v3017
        %3036 = vmatprep.subr.mxu0 0.0
        %3037 = vmatpush1.msra.mxu0 %v3018
        %3038 = vmatprep.subr.mxu0 0.0
        %3039 = vmatpush1.msra.mxu0 %v3019
        %3040 = vmatprep.subr.mxu0 0.0
        %3041 = vmatpush1.msra.mxu0 %v3020
        %3042 = vmatprep.subr.mxu0 0.0
        %3043 = vmatpush1.msra.mxu0 %v3021
        %3044 = vmatprep.subr.mxu0 0.0
        %3045 = vmatpush1.msra.mxu0 %v3022
        %3046 = vmatprep.subr.mxu0 0.0
        %3047 = vmatpush1.msra.mxu0 %v3023
        %3048 = vmatprep.subr.mxu0 0.0
        %3049 = vmatpush1.msra.mxu0 %v3024
        %3050 = vmatprep.subr.mxu0 0.0
        %3051 = vmatpush1.msra.mxu0 %v3025
        %3052 = vmatprep.subr.mxu0 0.0
        %3053 = vmatpush1.msra.mxu0 %v3026
        %3054 = vmatprep.subr.mxu0 0.0
        %3055 = vmatpush1.msra.mxu0 %v3027
        %3056 = vmatprep.subr.mxu0 0.0
        %3057 = vmatpush1.msra.mxu0 %v3028
        %3058 = vmatprep.subr.mxu0 0.0
        %3059 = vmatpush1.msra.mxu0 %v3029
        %3060 = vmatprep.subr.mxu0 0.0
        %3061 = vmatpush1.msra.mxu0 %v3030
        %3062 = vmatprep.subr.mxu0 0.0
        %3063 = vmatpush1.msra.mxu0 %v3031
        %3064 = vmatprep.subr.mxu0 0.0
        %3065 = vmatpush1.msra.mxu0 0.0
        %3066 = vmatprep.subr.mxu0 0.0
        %3067 = vmatpush1.msra.mxu0 0.0
        %3068 = vmatprep.subr.mxu0 0.0
        %3069 = vmatpush1.msra.mxu0 0.0
        %3070 = vmatprep.subr.mxu0 0.0
        %3071 = vmatpush1.msra.mxu0 0.0
        %3072 = vmatprep.subr.mxu0 0.0
        %3073 = vmatpush1.msra.mxu0 0.0
        %3074 = vmatprep.subr.mxu0 0.0
        %3075 = vmatpush1.msra.mxu0 0.0
        %3076 = vmatprep.subr.mxu0 0.0
        %3077 = vmatpush1.msra.mxu0 0.0
        %3078 = vmatprep.subr.mxu0 0.0
        %3079 = vmatpush1.msra.mxu0 0.0
        %3080 = vmatprep.subr.mxu0 0.0
        %3081 = vmatpush1.msra.mxu0 0.0
        %3082 = vmatprep.subr.mxu0 0.0
        %3083 = vmatpush1.msra.mxu0 0.0
        %3084 = vmatprep.subr.mxu0 0.0
        %3085 = vmatpush1.msra.mxu0 0.0
        %3086 = vmatprep.subr.mxu0 0.0
        %3087 = vmatpush1.msra.mxu0 0.0
        %3088 = vmatprep.subr.mxu0 0.0
        %3089 = vmatpush1.msra.mxu0 0.0
        %3090 = vmatprep.subr.mxu0 0.0
        %3091 = vmatpush1.msra.mxu0 0.0
        %3092 = vmatprep.subr.mxu0 0.0
        %3093 = vmatpush1.msra.mxu0 0.0
        %3094 = vmatprep.subr.mxu0 0.0
        %3095 = vmatpush1.msra.mxu0 0.0
        %3096 = vmatprep.mubr.f32.mxu0 0.0
        %3097 = vmatmul.mubr.f32.gmra.mrb[0].mxu0 %v3011
        %v3098 = vpop.f32.mrb[0].mxu0
        %v3099 = vadd.f32 0.0, %v3098
        %v3100 = vpop.f32.mrb[0].mxu0
        %3101 = vmatprep.mubr.f32.mxu0 0.0
        %3102 = vmatmul.mubr.f32.gmra.mrb[0].mxu0 %v3012
        %v3103 = vpop.f32.mrb[0].mxu0
        %v3104 = vadd.f32 0.0, %v3103
        %v3105 = vpop.f32.mrb[0].mxu0
        %3106 = vmatprep.mubr.f32.mxu0 0.0
        %3107 = vmatmul.mubr.f32.gmra.mrb[0].mxu0 %v3013
        %v3108 = vpop.f32.mrb[0].mxu0
        %v3109 = vadd.f32 0.0, %v3108
        %v3110 = vpop.f32.mrb[0].mxu0
        %3111 = vmatprep.mubr.f32.mxu0 0.0
        %3112 = vmatmul.mubr.f32.gmra.mrb[0].mxu0 %v3014
        %v3113 = vpop.f32.mrb[0].mxu0
        %v3114 = vadd.f32 0.0, %v3113
        %v3115 = vpop.f32.mrb[0].mxu0
        %3116 = vdwg.mxu0
        %v3117 = vadd.f32 %v3007, %v3099
        %v3118 = vadd.f32 %v3008, %v3104
        %v3119 = vadd.f32 %v3009, %v3109
        %v3120 = vadd.f32 %v3010, %v3114
        %s3121 = scalar_lea.vmem [#allocation4], 32
        %v3122 = vld [vmem:[%s3121] sm:$0xff]
        %v3123 = vld [vmem:[%s3121 + $0x10] sm:$0xff]
        %v3124 = vld [vmem:[%s3121 + $0x20] sm:$0xff]
        %v3125 = vld [vmem:[%s3121 + $0x30] sm:$0xff]
        %s3126 = scalar_lea.vmem [#allocation9], 768
        %v3127 = vld [vmem:[%s3126] sm:$0xff]
        %v3128 = vld [vmem:[%s3126 + $0x8] sm:$0xff]
        %v3129 = vld [vmem:[%s3126 + $0x10] sm:$0xff]
        %v3130 = vld [vmem:[%s3126 + $0x18] sm:$0xff]
        %v3131 = vld [vmem:[%s3126 + $0x20] sm:$0xff]
        %v3132 = vld [vmem:[%s3126 + $0x28] sm:$0xff]
        %v3133 = vld [vmem:[%s3126 + $0x30] sm:$0xff]
        %v3134 = vld [vmem:[%s3126 + $0x38] sm:$0xff]
        %v3135 = vld [vmem:[%s3126 + $0x40] sm:$0xff]
        %v3136 = vld [vmem:[%s3126 + $0x48] sm:$0xff]
        %v3137 = vld [vmem:[%s3126 + $0x50] sm:$0xff]
        %v3138 = vld [vmem:[%s3126 + $0x58] sm:$0xff]
        %v3139 = vld [vmem:[%s3126 + $0x60] sm:$0xff]
        %v3140 = vld [vmem:[%s3126 + $0x68] sm:$0xff]
        %v3141 = vld [vmem:[%s3126 + $0x70] sm:$0xff]
        %v3142 = vld [vmem:[%s3126 + $0x78] sm:$0xff]
        %3143 = vmatprep.subr.mxu0 0.0
        %3144 = vmatpush1.msra.mxu0 %v3127
        %3145 = vmatprep.subr.mxu0 0.0
        %3146 = vmatpush1.msra.mxu0 %v3128
        %3147 = vmatprep.subr.mxu0 0.0
        %3148 = vmatpush1.msra.mxu0 %v3129
        %3149 = vmatprep.subr.mxu0 0.0
        %3150 = vmatpush1.msra.mxu0 %v3130
        %3151 = vmatprep.subr.mxu0 0.0
        %3152 = vmatpush1.msra.mxu0 %v3131
        %3153 = vmatprep.subr.mxu0 0.0
        %3154 = vmatpush1.msra.mxu0 %v3132
        %3155 = vmatprep.subr.mxu0 0.0
        %3156 = vmatpush1.msra.mxu0 %v3133
        %3157 = vmatprep.subr.mxu0 0.0
        %3158 = vmatpush1.msra.mxu0 %v3134
        %3159 = vmatprep.subr.mxu0 0.0
        %3160 = vmatpush1.msra.mxu0 %v3135
        %3161 = vmatprep.subr.mxu0 0.0
        %3162 = vmatpush1.msra.mxu0 %v3136
        %3163 = vmatprep.subr.mxu0 0.0
        %3164 = vmatpush1.msra.mxu0 %v3137
        %3165 = vmatprep.subr.mxu0 0.0
        %3166 = vmatpush1.msra.mxu0 %v3138
        %3167 = vmatprep.subr.mxu0 0.0
        %3168 = vmatpush1.msra.mxu0 %v3139
        %3169 = vmatprep.subr.mxu0 0.0
        %3170 = vmatpush1.msra.mxu0 %v3140
        %3171 = vmatprep.subr.mxu0 0.0
        %3172 = vmatpush1.msra.mxu0 %v3141
        %3173 = vmatprep.subr.mxu0 0.0
        %3174 = vmatpush1.msra.mxu0 %v3142
        %3175 = vmatprep.subr.mxu0 0.0
        %3176 = vmatpush1.msra.mxu0 0.0
        %3177 = vmatprep.subr.mxu0 0.0
        %3178 = vmatpush1.msra.mxu0 0.0
        %3179 = vmatprep.subr.mxu0 0.0
        %3180 = vmatpush1.msra.mxu0 0.0
        %3181 = vmatprep.subr.mxu0 0.0
        %3182 = vmatpush1.msra.mxu0 0.0
        %3183 = vmatprep.subr.mxu0 0.0
        %3184 = vmatpush1.msra.mxu0 0.0
        %3185 = vmatprep.subr.mxu0 0.0
        %3186 = vmatpush1.msra.mxu0 0.0
        %3187 = vmatprep.subr.mxu0 0.0
        %3188 = vmatpush1.msra.mxu0 0.0
        %3189 = vmatprep.subr.mxu0 0.0
        %3190 = vmatpush1.msra.mxu0 0.0
        %3191 = vmatprep.subr.mxu0 0.0
        %3192 = vmatpush1.msra.mxu0 0.0
        %3193 = vmatprep.subr.mxu0 0.0
        %3194 = vmatpush1.msra.mxu0 0.0
        %3195 = vmatprep.subr.mxu0 0.0
        %3196 = vmatpush1.msra.mxu0 0.0
        %3197 = vmatprep.subr.mxu0 0.0
        %3198 = vmatpush1.msra.mxu0 0.0
        %3199 = vmatprep.subr.mxu0 0.0
        %3200 = vmatpush1.msra.mxu0 0.0
        %3201 = vmatprep.subr.mxu0 0.0
        %3202 = vmatpush1.msra.mxu0 0.0
        %3203 = vmatprep.subr.mxu0 0.0
        %3204 = vmatpush1.msra.mxu0 0.0
        %3205 = vmatprep.subr.mxu0 0.0
        %3206 = vmatpush1.msra.mxu0 0.0
        %3207 = vmatprep.mubr.f32.mxu0 0.0
        %3208 = vmatmul.mubr.f32.gmra.mrb[0].mxu0 %v3122
        %v3209 = vpop.f32.mrb[0].mxu0
        %v3210 = vadd.f32 0.0, %v3209
        %v3211 = vpop.f32.mrb[0].mxu0
        %3212 = vmatprep.mubr.f32.mxu0 0.0
        %3213 = vmatmul.mubr.f32.gmra.mrb[0].mxu0 %v3123
        %v3214 = vpop.f32.mrb[0].mxu0
        %v3215 = vadd.f32 0.0, %v3214
        %v3216 = vpop.f32.mrb[0].mxu0
        %3217 = vmatprep.mubr.f32.mxu0 0.0
        %3218 = vmatmul.mubr.f32.gmra.mrb[0].mxu0 %v3124
        %v3219 = vpop.f32.mrb[0].mxu0
        %v3220 = vadd.f32 0.0, %v3219
        %v3221 = vpop.f32.mrb[0].mxu0
        %3222 = vmatprep.mubr.f32.mxu0 0.0
        %3223 = vmatmul.mubr.f32.gmra.mrb[0].mxu0 %v3125
        %v3224 = vpop.f32.mrb[0].mxu0
        %v3225 = vadd.f32 0.0, %v3224
        %v3226 = vpop.f32.mrb[0].mxu0
        %3227 = vdwg.mxu0
        %v3228 = vadd.f32 %v3117, %v3210
        %v3229 = vadd.f32 %v3118, %v3215
        %v3230 = vadd.f32 %v3119, %v3220
        %v3231 = vadd.f32 %v3120, %v3225
        %v3232 = vld [vmem:[%s3121 + $0x1] sm:$0xff]
        %v3233 = vld [vmem:[%s3121 + $0x11] sm:$0xff]
        %v3234 = vld [vmem:[%s3121 + $0x21] sm:$0xff]
        %v3235 = vld [vmem:[%s3121 + $0x31] sm:$0xff]
        %s3236 = scalar_lea.vmem [#allocation9], 896
        %v3237 = vld [vmem:[%s3236] sm:$0xff]
        %v3238 = vld [vmem:[%s3236 + $0x8] sm:$0xff]
        %v3239 = vld [vmem:[%s3236 + $0x10] sm:$0xff]
        %v3240 = vld [vmem:[%s3236 + $0x18] sm:$0xff]
        %v3241 = vld [vmem:[%s3236 + $0x20] sm:$0xff]
        %v3242 = vld [vmem:[%s3236 + $0x28] sm:$0xff]
        %v3243 = vld [vmem:[%s3236 + $0x30] sm:$0xff]
        %v3244 = vld [vmem:[%s3236 + $0x38] sm:$0xff]
        %v3245 = vld [vmem:[%s3236 + $0x40] sm:$0xff]
        %v3246 = vld [vmem:[%s3236 + $0x48] sm:$0xff]
        %v3247 = vld [vmem:[%s3236 + $0x50] sm:$0xff]
        %v3248 = vld [vmem:[%s3236 + $0x58] sm:$0xff]
        %v3249 = vld [vmem:[%s3236 + $0x60] sm:$0xff]
        %v3250 = vld [vmem:[%s3236 + $0x68] sm:$0xff]
        %v3251 = vld [vmem:[%s3236 + $0x70] sm:$0xff]
        %v3252 = vld [vmem:[%s3236 + $0x78] sm:$0xff]
        %3253 = vmatprep.subr.mxu0 0.0
        %3254 = vmatpush1.msra.mxu0 %v3237
        %3255 = vmatprep.subr.mxu0 0.0
        %3256 = vmatpush1.msra.mxu0 %v3238
        %3257 = vmatprep.subr.mxu0 0.0
        %3258 = vmatpush1.msra.mxu0 %v3239
        %3259 = vmatprep.subr.mxu0 0.0
        %3260 = vmatpush1.msra.mxu0 %v3240
        %3261 = vmatprep.subr.mxu0 0.0
        %3262 = vmatpush1.msra.mxu0 %v3241
        %3263 = vmatprep.subr.mxu0 0.0
        %3264 = vmatpush1.msra.mxu0 %v3242
        %3265 = vmatprep.subr.mxu0 0.0
        %3266 = vmatpush1.msra.mxu0 %v3243
        %3267 = vmatprep.subr.mxu0 0.0
        %3268 = vmatpush1.msra.mxu0 %v3244
        %3269 = vmatprep.subr.mxu0 0.0
        %3270 = vmatpush1.msra.mxu0 %v3245
        %3271 = vmatprep.subr.mxu0 0.0
        %3272 = vmatpush1.msra.mxu0 %v3246
        %3273 = vmatprep.subr.mxu0 0.0
        %3274 = vmatpush1.msra.mxu0 %v3247
        %3275 = vmatprep.subr.mxu0 0.0
        %3276 = vmatpush1.msra.mxu0 %v3248
        %3277 = vmatprep.subr.mxu0 0.0
        %3278 = vmatpush1.msra.mxu0 %v3249
        %3279 = vmatprep.subr.mxu0 0.0
        %3280 = vmatpush1.msra.mxu0 %v3250
        %3281 = vmatprep.subr.mxu0 0.0
        %3282 = vmatpush1.msra.mxu0 %v3251
        %3283 = vmatprep.subr.mxu0 0.0
        %3284 = vmatpush1.msra.mxu0 %v3252
        %3285 = vmatprep.subr.mxu0 0.0
        %3286 = vmatpush1.msra.mxu0 0.0
        %3287 = vmatprep.subr.mxu0 0.0
        %3288 = vmatpush1.msra.mxu0 0.0
        %3289 = vmatprep.subr.mxu0 0.0
        %3290 = vmatpush1.msra.mxu0 0.0
        %3291 = vmatprep.subr.mxu0 0.0
        %3292 = vmatpush1.msra.mxu0 0.0
        %3293 = vmatprep.subr.mxu0 0.0
        %3294 = vmatpush1.msra.mxu0 0.0
        %3295 = vmatprep.subr.mxu0 0.0
        %3296 = vmatpush1.msra.mxu0 0.0
        %3297 = vmatprep.subr.mxu0 0.0
        %3298 = vmatpush1.msra.mxu0 0.0
        %3299 = vmatprep.subr.mxu0 0.0
        %3300 = vmatpush1.msra.mxu0 0.0
        %3301 = vmatprep.subr.mxu0 0.0
        %3302 = vmatpush1.msra.mxu0 0.0
        %3303 = vmatprep.subr.mxu0 0.0
        %3304 = vmatpush1.msra.mxu0 0.0
        %3305 = vmatprep.subr.mxu0 0.0
        %3306 = vmatpush1.msra.mxu0 0.0
        %3307 = vmatprep.subr.mxu0 0.0
        %3308 = vmatpush1.msra.mxu0 0.0
        %3309 = vmatprep.subr.mxu0 0.0
        %3310 = vmatpush1.msra.mxu0 0.0
        %3311 = vmatprep.subr.mxu0 0.0
        %3312 = vmatpush1.msra.mxu0 0.0
        %3313 = vmatprep.subr.mxu0 0.0
        %3314 = vmatpush1.msra.mxu0 0.0
        %3315 = vmatprep.subr.mxu0 0.0
        %3316 = vmatpush1.msra.mxu0 0.0
        %3317 = vmatprep.mubr.f32.mxu0 0.0
        %3318 = vmatmul.mubr.f32.gmra.mrb[0].mxu0 %v3232
        %v3319 = vpop.f32.mrb[0].mxu0
        %v3320 = vadd.f32 0.0, %v3319
        %v3321 = vpop.f32.mrb[0].mxu0
        %3322 = vmatprep.mubr.f32.mxu0 0.0
        %3323 = vmatmul.mubr.f32.gmra.mrb[0].mxu0 %v3233
        %v3324 = vpop.f32.mrb[0].mxu0
        %v3325 = vadd.f32 0.0, %v3324
        %v3326 = vpop.f32.mrb[0].mxu0
        %3327 = vmatprep.mubr.f32.mxu0 0.0
        %3328 = vmatmul.mubr.f32.gmra.mrb[0].mxu0 %v3234
        %v3329 = vpop.f32.mrb[0].mxu0
        %v3330 = vadd.f32 0.0, %v3329
        %v3331 = vpop.f32.mrb[0].mxu0
        %3332 = vmatprep.mubr.f32.mxu0 0.0
        %3333 = vmatmul.mubr.f32.gmra.mrb[0].mxu0 %v3235
        %v3334 = vpop.f32.mrb[0].mxu0
        %v3335 = vadd.f32 0.0, %v3334
        %v3336 = vpop.f32.mrb[0].mxu0
        %3337 = vdwg.mxu0
        %v3338 = vadd.f32 %v3228, %v3320
        %v3339 = vadd.f32 %v3229, %v3325
        %v3340 = vadd.f32 %v3230, %v3330
        %v3341 = vadd.f32 %v3231, %v3335
        %v3342 = vld [vmem:[%s3121 + $0x2] sm:$0xff]
        %v3343 = vld [vmem:[%s3121 + $0x12] sm:$0xff]
        %v3344 = vld [vmem:[%s3121 + $0x22] sm:$0xff]
        %v3345 = vld [vmem:[%s3121 + $0x32] sm:$0xff]
        %s3346 = scalar_lea.vmem [#allocation9], 1024
        %v3347 = vld [vmem:[%s3346] sm:$0xff]
        %v3348 = vld [vmem:[%s3346 + $0x8] sm:$0xff]
        %v3349 = vld [vmem:[%s3346 + $0x10] sm:$0xff]
        %v3350 = vld [vmem:[%s3346 + $0x18] sm:$0xff]
        %v3351 = vld [vmem:[%s3346 + $0x20] sm:$0xff]
        %v3352 = vld [vmem:[%s3346 + $0x28] sm:$0xff]
        %v3353 = vld [vmem:[%s3346 + $0x30] sm:$0xff]
        %v3354 = vld [vmem:[%s3346 + $0x38] sm:$0xff]
        %v3355 = vld [vmem:[%s3346 + $0x40] sm:$0xff]
        %v3356 = vld [vmem:[%s3346 + $0x48] sm:$0xff]
        %v3357 = vld [vmem:[%s3346 + $0x50] sm:$0xff]
        %v3358 = vld [vmem:[%s3346 + $0x58] sm:$0xff]
        %v3359 = vld [vmem:[%s3346 + $0x60] sm:$0xff]
        %v3360 = vld [vmem:[%s3346 + $0x68] sm:$0xff]
        %v3361 = vld [vmem:[%s3346 + $0x70] sm:$0xff]
        %v3362 = vld [vmem:[%s3346 + $0x78] sm:$0xff]
        %3363 = vmatprep.subr.mxu0 0.0
        %3364 = vmatpush1.msra.mxu0 %v3347
        %3365 = vmatprep.subr.mxu0 0.0
        %3366 = vmatpush1.msra.mxu0 %v3348
        %3367 = vmatprep.subr.mxu0 0.0
        %3368 = vmatpush1.msra.mxu0 %v3349
        %3369 = vmatprep.subr.mxu0 0.0
        %3370 = vmatpush1.msra.mxu0 %v3350
        %3371 = vmatprep.subr.mxu0 0.0
        %3372 = vmatpush1.msra.mxu0 %v3351
        %3373 = vmatprep.subr.mxu0 0.0
        %3374 = vmatpush1.msra.mxu0 %v3352
        %3375 = vmatprep.subr.mxu0 0.0
        %3376 = vmatpush1.msra.mxu0 %v3353
        %3377 = vmatprep.subr.mxu0 0.0
        %3378 = vmatpush1.msra.mxu0 %v3354
        %3379 = vmatprep.subr.mxu0 0.0
        %3380 = vmatpush1.msra.mxu0 %v3355
        %3381 = vmatprep.subr.mxu0 0.0
        %3382 = vmatpush1.msra.mxu0 %v3356
        %3383 = vmatprep.subr.mxu0 0.0
        %3384 = vmatpush1.msra.mxu0 %v3357
        %3385 = vmatprep.subr.mxu0 0.0
        %3386 = vmatpush1.msra.mxu0 %v3358
        %3387 = vmatprep.subr.mxu0 0.0
        %3388 = vmatpush1.msra.mxu0 %v3359
        %3389 = vmatprep.subr.mxu0 0.0
        %3390 = vmatpush1.msra.mxu0 %v3360
        %3391 = vmatprep.subr.mxu0 0.0
        %3392 = vmatpush1.msra.mxu0 %v3361
        %3393 = vmatprep.subr.mxu0 0.0
        %3394 = vmatpush1.msra.mxu0 %v3362
        %3395 = vmatprep.subr.mxu0 0.0
        %3396 = vmatpush1.msra.mxu0 0.0
        %3397 = vmatprep.subr.mxu0 0.0
        %3398 = vmatpush1.msra.mxu0 0.0
        %3399 = vmatprep.subr.mxu0 0.0
        %3400 = vmatpush1.msra.mxu0 0.0
        %3401 = vmatprep.subr.mxu0 0.0
        %3402 = vmatpush1.msra.mxu0 0.0
        %3403 = vmatprep.subr.mxu0 0.0
        %3404 = vmatpush1.msra.mxu0 0.0
        %3405 = vmatprep.subr.mxu0 0.0
        %3406 = vmatpush1.msra.mxu0 0.0
        %3407 = vmatprep.subr.mxu0 0.0
        %3408 = vmatpush1.msra.mxu0 0.0
        %3409 = vmatprep.subr.mxu0 0.0
        %3410 = vmatpush1.msra.mxu0 0.0
        %3411 = vmatprep.subr.mxu0 0.0
        %3412 = vmatpush1.msra.mxu0 0.0
        %3413 = vmatprep.subr.mxu0 0.0
        %3414 = vmatpush1.msra.mxu0 0.0
        %3415 = vmatprep.subr.mxu0 0.0
        %3416 = vmatpush1.msra.mxu0 0.0
        %3417 = vmatprep.subr.mxu0 0.0
        %3418 = vmatpush1.msra.mxu0 0.0
        %3419 = vmatprep.subr.mxu0 0.0
        %3420 = vmatpush1.msra.mxu0 0.0
        %3421 = vmatprep.subr.mxu0 0.0
        %3422 = vmatpush1.msra.mxu0 0.0
        %3423 = vmatprep.subr.mxu0 0.0
        %3424 = vmatpush1.msra.mxu0 0.0
        %3425 = vmatprep.subr.mxu0 0.0
        %3426 = vmatpush1.msra.mxu0 0.0
        %3427 = vmatprep.mubr.f32.mxu0 0.0
        %3428 = vmatmul.mubr.f32.gmra.mrb[0].mxu0 %v3342
        %v3429 = vpop.f32.mrb[0].mxu0
        %v3430 = vadd.f32 0.0, %v3429
        %v3431 = vpop.f32.mrb[0].mxu0
        %3432 = vmatprep.mubr.f32.mxu0 0.0
        %3433 = vmatmul.mubr.f32.gmra.mrb[0].mxu0 %v3343
        %v3434 = vpop.f32.mrb[0].mxu0
        %v3435 = vadd.f32 0.0, %v3434
        %v3436 = vpop.f32.mrb[0].mxu0
        %3437 = vmatprep.mubr.f32.mxu0 0.0
        %3438 = vmatmul.mubr.f32.gmra.mrb[0].mxu0 %v3344
        %v3439 = vpop.f32.mrb[0].mxu0
        %v3440 = vadd.f32 0.0, %v3439
        %v3441 = vpop.f32.mrb[0].mxu0
        %3442 = vmatprep.mubr.f32.mxu0 0.0
        %3443 = vmatmul.mubr.f32.gmra.mrb[0].mxu0 %v3345
        %v3444 = vpop.f32.mrb[0].mxu0
        %v3445 = vadd.f32 0.0, %v3444
        %v3446 = vpop.f32.mrb[0].mxu0
        %3447 = vdwg.mxu0
        %v3448 = vadd.f32 %v3338, %v3430
        %v3449 = vadd.f32 %v3339, %v3435
        %v3450 = vadd.f32 %v3340, %v3440
        %v3451 = vadd.f32 %v3341, %v3445
        %v3452 = vld [vmem:[%s4] sm:$0x1]
        %v3454 = vlaneseq
        %v3455 = vshrl.u32 %v3454, 7
        %v3456 = vsub.s32 0, %v3455
        %v3457 = vrot.slane %v3452, %v3456
        %v3459 = vadd.f32 %v3448, %v3457
        %v3460 = vadd.f32 %v3449, %v3457
        %v3461 = vadd.f32 %v3450, %v3457
        %v3462 = vadd.f32 %v3451, %v3457
        %v3463 = vmax.f32 %v3459, 0.0
        %v3464 = vmax.f32 %v3460, 0.0
        %v3465 = vmax.f32 %v3461, 0.0
        %v3466 = vmax.f32 %v3462, 0.0
        %3467 = vst [vmem:[%s220] sm:$0xff] %v3463
        %3468 = vst [vmem:[%s220 + $0x8] sm:$0xff] %v3464
        %3469 = vst [vmem:[%s220 + $0x10] sm:$0xff] %v3465
        %3470 = vst [vmem:[%s220 + $0x18] sm:$0xff] %v3466
        %s3471 = sand.u32 %s127, 1
        %s3472 = scalar_lea.sflag [#allocation8], %s3471
        %s3473 = sand.u32 %s127, 1
        %s3474 = smul.addr %s3473, 32
        %s3475 = scalar_lea.vmem [#allocation11], %s3474
        // Predicated region
        $region57: #{tpu_custom_call.1} parent=35 // pred_check
          %p3476 = pneg %p137
        $region58: #{tpu_custom_call.1} parent=35 // pred_check_branch
          %3478 = sbr.rel (%p3476) target = $region60
        $region59: #{tpu_custom_call.1} parent=35 // pred_region
          %s3479 = smul.u32 4, %s26
          %s3481 = ssub.s32 512, 512
          %3482 = vsyncadd %s3472, %s3481
          %s3483 = smul.addr %s25, 8
          %s3484 = sadd.s32 %s3479, %s3483
          %s3485 = smul.addr %s3484, 128
          %s3486 = scalar_lea.hbm %s5, %s3485
          %s3487 = sshll.u32 %s3475, 4
          %s3488 = int_to_ptr.vmem [resolvable:$true] %s3487
          %3493 = dma.vmem_to_hbm [thread:$0]  %s3488, 512, %s3486, %s3472, 128, 128, 8
        $region60: #{tpu_custom_call.1} parent=35 // pred_fallthru
          _
      $region36: #{tpu_custom_call.1} parent=5 // pred_fallthru
        _
      %p3494 = scmp.le.s32.totalorder 2, %s16
      // Predicated region
      $region61: #{tpu_custom_call.1} parent=5 // pred_check
        %p3495 = pneg %p3494
      $region62: #{tpu_custom_call.1} parent=5 // pred_check_branch
        %3497 = sbr.rel (%p3495) target = $region64
      $region63: #{tpu_custom_call.1} parent=5 // pred_region
        %s3498 = ssub.s32 %s16, 2
        // Predicated region
        $region65: #{tpu_custom_call.1} parent=63 // pred_check
          %p3499 = pneg %p143
        $region66: #{tpu_custom_call.1} parent=63 // pred_check_branch
          %3501 = sbr.rel (%p3499) target = $region68
        $region67: #{tpu_custom_call.1} parent=63 // pred_region
          %s3502 = sand.u32 %s128, 1
          %s3503 = scalar_lea.sflag [#allocation8], %s3502
          %s3504 = sand.u32 %s128, 1
          %s3505 = smul.addr %s3504, 32
          %s3506 = scalar_lea.vmem [#allocation11], %s3505
          %3507 = dma.done %s3503, 512
        $region68: #{tpu_custom_call.1} parent=63 // pred_fallthru
          _
      $region64: #{tpu_custom_call.1} parent=5 // pred_fallthru
        _
    $region6: #{tpu_custom_call.1} parent=1 // loop_footer
      %s20 = sadd.s32 1, %s16
    $region7: #{tpu_custom_call.1} parent=1 // loop_footer_branch
      %15 = sbr.rel target = $region3
    $region8: #{tpu_custom_call.1} parent=1 // loop_exit
      _
    %3508 = vsyncpa [#allocation7], 1
    %s3509 = scalar_lea.sflag [#allocation7], 1
    %3510 = vsyncpa %s3509, 1
    %3511 = vsyncpa [#allocation10], 1
    %3512 = vsyncpa [#allocation8], 1
    %s3513 = scalar_lea.sflag [#allocation8], 1
    %3514 = vsyncpa %s3513, 1
  %3515 = vsyncmov [#allocation5]
  %s3516 = vpop.sfrf %3515
  %p3517 = scmp.eq.s32.totalorder %s3516, 0
  %p3518 = pneg %p3517
  %3520 = shalt.err (%p3518)

</llo_original>
